<compile_context>
chip_gen: v7x
topology: tpu7x:2x2x1
jax: 0.10.0
libtpu: 0.0.40
codegen_flags: <defaults>
</compile_context>

<pallas_src>
import math

import jax
import jax.numpy as jnp
from jax import lax
from jax.experimental import pallas as pl
from jax.experimental.pallas import tpu as pltpu

# -----------------------------------------------------------------------------
# Small, self-consistent hyper-parameters.  (The PyTorch defaults hidden_size=10,
# nhead=8 violate the module's own divisibility check, so we pick valid values.)
# -----------------------------------------------------------------------------
BATCH = 2
SEQ = 8            # window_length (sequence length of the input)
D_MODEL = 32       # GRU input_size (== `d_model` arg of the module)
HIDDEN = 16        # hidden_size == transformer embed dim
NHEAD = 4
HEAD_DIM = HIDDEN // NHEAD
DFF = 32           # dim_feedforward
LN_EPS = 1e-5
NEG_INF = -1e30

# ---- packed-slab layout (shared column width = 3*HIDDEN = 48) ---------------
SLAB_W = 3 * HIDDEN

# weight slab row offsets (bf16, shape (W_ROWS, SLAB_W))
RW_IH0 = 0
RW_HH0 = RW_IH0 + D_MODEL
RW_IH1 = RW_HH0 + HIDDEN
RW_HH1 = RW_IH1 + HIDDEN
RW_QKV = RW_HH1 + HIDDEN
RW_O = RW_QKV + HIDDEN
RW_1 = RW_O + HIDDEN
RW_2 = RW_1 + HIDDEN
W_ROWS = RW_2 + DFF                    # 160

# vector slab row indices (f32, shape (V_ROWS, SLAB_W))
(VB_IH0, VB_HH0, VB_IH1, VB_HH1, VB_QKV, VB_O,
 VLN1G, VLN1B, VB_1, VB_2, VLN2G, VLN2B) = range(12)
VPE = 12                               # batch-major tiled PE, B*S rows
V_ROWS = VPE + BATCH * SEQ             # 28


# -----------------------------------------------------------------------------
# Single fused kernel: GRU(2 layers, interleaved) -> +PE -> MHA(causal)
#                      -> post-LN -> FFN -> post-LN
# -----------------------------------------------------------------------------
def _fused_transformer_kernel(x_ref, w_ref, v_ref, out_ref, seq_ref):
    S, B, H, F = SEQ, BATCH, HIDDEN, DFF
    f32, bf16 = jnp.float32, jnp.bfloat16

    # ---------------- hoisted slab unpacking (static ref slices) ----------------
    w_ih0 = w_ref[RW_IH0:RW_IH0 + D_MODEL, :]        # (32, 48) bf16
    w_hh0 = w_ref[RW_HH0:RW_HH0 + H, :]              # (16, 48)
    w_ih1 = w_ref[RW_IH1:RW_IH1 + H, :]              # (16, 48)
    w_hh1 = w_ref[RW_HH1:RW_HH1 + H, :]              # (16, 48)
    b_ih0 = v_ref[VB_IH0:VB_IH0 + 1, :]              # (1, 48) f32
    b_hh0 = v_ref[VB_HH0:VB_HH0 + 1, :]
    b_ih1 = v_ref[VB_IH1:VB_IH1 + 1, :]
    b_hh1 = v_ref[VB_HH1:VB_HH1 + 1, :]

    # ---------------- GRU: hoisted input projection + interleaved recurrence ----
    # Layer-0 input projection for ALL timesteps in one matmul (time-major rows).
    xp0 = jnp.dot(x_ref[...].astype(bf16), w_ih0,
                  preferred_element_type=f32) + b_ih0          # (S*B, 3H) f32

    h0 = jnp.zeros((B, H), f32)
    h1 = jnp.zeros((B, H), f32)

    def gru_gates(xp_t, hp, h_prev):
        r = jax.nn.sigmoid(xp_t[:, 0:H] + hp[:, 0:H])
        z = jax.nn.sigmoid(xp_t[:, H:2 * H] + hp[:, H:2 * H])
        n = jnp.tanh(xp_t[:, 2 * H:3 * H] + r * hp[:, 2 * H:3 * H])
        return (1.0 - z) * n + z * h_prev

    for t in range(S):                                # static unroll (S = 8)
        # The two recurrent matmuls are independent -> their MXU push/pop
        # latencies overlap with each other and with the gate math.
        hp0 = jnp.dot(h0.astype(bf16), w_hh0, preferred_element_type=f32) + b_hh0
        hp1 = jnp.dot(h1.astype(bf16), w_hh1, preferred_element_type=f32) + b_hh1
        h0 = gru_gates(xp0[t * B:(t + 1) * B, :], hp0, h0)      # layer-0 step t
        xp1 = jnp.dot(h0.astype(bf16), w_ih1, preferred_element_type=f32) + b_ih1
        h1 = gru_gates(xp1, hp1, h1)                            # layer-1 step t
        # Scatter the step output straight into batch-major scratch rows
        # (row = b*S + t) — replaces the old 16-slice + 16-way-concat reorder.
        for b in range(B):
            seq_ref[b * S + t:b * S + t + 1, :] = h1[b:b + 1, :]

    # ---------------- + positional encoding (pre-tiled batch-major in slab) -----
    src2 = seq_ref[...] + v_ref[VPE:VPE + B * S, 0:H]            # (B*S, H) f32

    # ---------------- multi-head self-attention (causal) ------------------------
    w_qkv = w_ref[RW_QKV:RW_QKV + H, :]                          # (16, 48) bf16
    b_qkv = v_ref[VB_QKV:VB_QKV + 1, :]
    qkv = jnp.dot(src2.astype(bf16), w_qkv,
                  preferred_element_type=f32) + b_qkv            # (B*S, 3H) f32
    q3 = qkv[:, 0:H].reshape(B, S, H).astype(bf16)
    k3 = qkv[:, H:2 * H].reshape(B, S, H).astype(bf16)
    v3 = qkv[:, 2 * H:3 * H].reshape(B, S, H).astype(bf16)

    # additive causal bias, computed once
    row = lax.broadcasted_iota(jnp.int32, (S, S), 0)
    col = lax.broadcasted_iota(jnp.int32, (S, S), 1)
    bias = jnp.where(col <= row, 0.0, NEG_INF)[None, :, :]       # (1, S, S)

    scale = 1.0 / math.sqrt(HEAD_DIM)
    ctx = []
    # NOTE: heads kept as a static loop (see file header) — each head is a single
    # MXU pass at HEAD_DIM=4 and in-vreg lane slices lower robustly.
    for hh in range(NHEAD):
        sl = slice(hh * HEAD_DIM, (hh + 1) * HEAD_DIM)
        s = jnp.einsum('bqd,bkd->bqk', q3[:, :, sl], k3[:, :, sl],
                       preferred_element_type=f32) * scale + bias
        s = s - jnp.max(s, axis=-1, keepdims=True)
        p = jnp.exp(s)
        probs = p / jnp.sum(p, axis=-1, keepdims=True)           # exact softmax
        ctx.append(jnp.einsum('bqk,bkd->bqd', probs.astype(bf16), v3[:, :, sl],
                              preferred_element_type=f32))
    ctx2 = jnp.concatenate(ctx, axis=-1).reshape(B * S, H)       # (B*S, H)

    w_o = w_ref[RW_O:RW_O + H, 0:H]                              # (16, 16) bf16
    b_o = v_ref[VB_O:VB_O + 1, 0:H]
    attn2 = jnp.dot(ctx2.astype(bf16), w_o,
                    preferred_element_type=f32) + b_o

    def layer_norm(xv, g, b):
        mu = jnp.mean(xv, axis=-1, keepdims=True)
        var = jnp.mean(jnp.square(xv - mu), axis=-1, keepdims=True)
        return (xv - mu) * lax.rsqrt(var + LN_EPS) * g + b

    x1 = layer_norm(src2 + attn2,
                    v_ref[VLN1G:VLN1G + 1, 0:H], v_ref[VLN1B:VLN1B + 1, 0:H])

    # ---------------- feed-forward (dropouts identity in eval mode) --------------
    w_1 = w_ref[RW_1:RW_1 + H, 0:F]                              # (16, 32) bf16
    b_1 = v_ref[VB_1:VB_1 + 1, 0:F]
    hmid = jnp.dot(x1.astype(bf16), w_1, preferred_element_type=f32) + b_1
    # TODO(synk): PyTorch nn.GELU() is erf-exact; tanh approximation used for
    # robust Mosaic lowering (~1e-3 relative difference).
    hmid = 0.5 * hmid * (1.0 + jnp.tanh(0.7978845608028654
                                        * (hmid + 0.044715 * hmid * hmid * hmid)))

    w_2 = w_ref[RW_2:RW_2 + F, 0:H]                              # (32, 16) bf16
    b_2 = v_ref[VB_2:VB_2 + 1, 0:H]
    ff = jnp.dot(hmid.astype(bf16), w_2, preferred_element_type=f32) + b_2

    out_ref[...] = layer_norm(x1 + ff,
                              v_ref[VLN2G:VLN2G + 1, 0:H],
                              v_ref[VLN2B:VLN2B + 1, 0:H])       # (B*S, H)


# -----------------------------------------------------------------------------
# Parameter setup, one-time packing, and forward
# -----------------------------------------------------------------------------
def sinusoidal_pe(seq_len, d):
    pos = jnp.arange(seq_len, dtype=jnp.float32)[:, None]
    div = jnp.exp(jnp.arange(0, d, 2, dtype=jnp.float32) * (-math.log(10000.0) / d))
    pe = jnp.zeros((seq_len, d), jnp.float32)
    pe = pe.at[:, 0::2].set(jnp.sin(pos * div))
    pe = pe.at[:, 1::2].set(jnp.cos(pos * div))
    return pe


def init_params(key):
    ks = jax.random.split(key, 16)

    def u(k, shape, fan):
        s = 1.0 / math.sqrt(fan)
        return jax.random.uniform(k, shape, jnp.float32, -s, s)

    return {
        'gru0': dict(w_ih=u(ks[0], (3 * HIDDEN, D_MODEL), HIDDEN),
                     w_hh=u(ks[1], (3 * HIDDEN, HIDDEN), HIDDEN),
                     b_ih=u(ks[2], (3 * HIDDEN,), HIDDEN),
                     b_hh=u(ks[3], (3 * HIDDEN,), HIDDEN)),
        'gru1': dict(w_ih=u(ks[4], (3 * HIDDEN, HIDDEN), HIDDEN),
                     w_hh=u(ks[5], (3 * HIDDEN, HIDDEN), HIDDEN),
                     b_ih=u(ks[6], (3 * HIDDEN,), HIDDEN),
                     b_hh=u(ks[7], (3 * HIDDEN,), HIDDEN)),
        'enc': dict(in_proj_w=u(ks[8], (3 * HIDDEN, HIDDEN), HIDDEN),
                    in_proj_b=jnp.zeros((3 * HIDDEN,), jnp.float32),
                    out_proj_w=u(ks[9], (HIDDEN, HIDDEN), HIDDEN),
                    out_proj_b=jnp.zeros((HIDDEN,), jnp.float32),
                    ln1_g=jnp.ones((HIDDEN,), jnp.float32),
                    ln1_b=jnp.zeros((HIDDEN,), jnp.float32),
                    w1=u(ks[10], (DFF, HIDDEN), HIDDEN),
                    b1=u(ks[11], (DFF,), HIDDEN),
                    w2=u(ks[12], (HIDDEN, DFF), DFF),
                    b2=u(ks[13], (HIDDEN,), DFF),
                    ln2_g=jnp.ones((HIDDEN,), jnp.float32),
                    ln2_b=jnp.zeros((HIDDEN,), jnp.float32)),
    }


def prepare_params(params):
    """One-time pre-transpose / pre-pack into two slabs (outside the jitted fwd)."""
    g0, g1, enc = params['gru0'], params['gru1'], params['enc']

    def wpad(m):
        return jnp.pad(m, ((0, 0), (0, SLAB_W - m.shape[1])))

    w_slab = jnp.concatenate([
        g0['w_ih'].T, g0['w_hh'].T, g1['w_ih'].T, g1['w_hh'].T,
        enc['in_proj_w'].T,
        wpad(enc['out_proj_w'].T), wpad(enc['w1'].T), wpad(enc['w2'].T),
    ], axis=0).astype(jnp.bfloat16)                              # (W_ROWS, 48)
    assert w_slab.shape == (W_ROWS, SLAB_W)

    def vrow(v):
        return jnp.pad(v.reshape(1, -1), ((0, 0), (0, SLAB_W - v.shape[0])))

    pe_bm = jnp.tile(sinusoidal_pe(SEQ, HIDDEN), (BATCH, 1))     # (B*S, H) batch-major
    v_slab = jnp.concatenate([
        vrow(g0['b_ih']), vrow(g0['b_hh']), vrow(g1['b_ih']), vrow(g1['b_hh']),
        vrow(enc['in_proj_b']), vrow(enc['out_proj_b']),
        vrow(enc['ln1_g']), vrow(enc['ln1_b']),
        vrow(enc['b1']), vrow(enc['b2']),
        vrow(enc['ln2_g']), vrow(enc['ln2_b']),
        jnp.pad(pe_bm, ((0, 0), (0, SLAB_W - HIDDEN))),
    ], axis=0).astype(jnp.float32)                               # (V_ROWS, 48)
    assert v_slab.shape == (V_ROWS, SLAB_W)

    return {'w_slab': w_slab, 'v_slab': v_slab}


@jax.jit
def transformer_forward(x, packed):
    """x: (B, S, D_MODEL) -> dict, mirroring the PyTorch module's forward."""
    B, S, _ = x.shape

    # time-major flatten so the GRU's per-step rows are contiguous
    x_tm = jnp.transpose(x, (1, 0, 2)).reshape(S * B, D_MODEL)

    out2d = pl.pallas_call(
        _fused_transformer_kernel,
        out_shape=jax.ShapeDtypeStruct((B * S, HIDDEN), jnp.float32),
        in_specs=[pl.BlockSpec(memory_space=pltpu.MemorySpace.VMEM)] * 3,
        out_specs=pl.BlockSpec(memory_space=pltpu.MemorySpace.VMEM),
        scratch_shapes=[pltpu.VMEM((B * S, HIDDEN), jnp.float32)],
    )(x_tm, packed['w_slab'], packed['v_slab'])

    seq_out = out2d.reshape(B, S, HIDDEN)          # free XLA plumbing
    # final dropout_layer is identity in eval mode
    return {'sequence_output': seq_out,
            'final_hidden_state': seq_out[:, -1, :],
            'sindy_loss': None}


if __name__ == "__main__":
    key = jax.random.PRNGKey(0)
    pkey, xkey = jax.random.split(key)
    params = init_params(pkey)
    packed = prepare_params(params)                # one-time pre-pack
    x = jax.random.normal(xkey, (BATCH, SEQ, D_MODEL), jnp.float32)

    out = transformer_forward(x, packed)
    jax.block_until_ready(out['sequence_output'])
    jax.block_until_ready(out['final_hidden_state'])

    assert out['sequence_output'].shape == (BATCH, SEQ, HIDDEN)
    assert out['final_hidden_state'].shape == (BATCH, HIDDEN)
    assert out['sindy_loss'] is None
    assert bool(jnp.all(jnp.isfinite(out['sequence_output'])))
    print("KERNEL_OK")
</pallas_src>

<mosaic_0001>
module attributes {stable_mosaic.version = 11 : i64} {
  func.func @_fused_transformer_kernel(%arg0: memref<16x32xf32, #tpu.memory_space<vmem>>, %arg1: memref<160x48xbf16, #tpu.memory_space<vmem>>, %arg2: memref<28x48xf32, #tpu.memory_space<vmem>>, %arg3: memref<16x16xf32, #tpu.memory_space<vmem>>, %arg4: memref<16x16xf32, #tpu.memory_space<vmem>>) attributes {dimension_semantics = [], scalar_prefetch = 0 : i64, scratch_operands = 1 : i64, tpu.core_type = #tpu.core_type<tc>} {
    %c0 = arith.constant 0 : index
    %c0_0 = arith.constant 0 : index
    %0 = vector.load %arg1[%c0, %c0_0] : memref<160x48xbf16, #tpu.memory_space<vmem>>, vector<32x48xbf16>
    %c32 = arith.constant 32 : index
    %c0_1 = arith.constant 0 : index
    %1 = vector.load %arg1[%c32, %c0_1] : memref<160x48xbf16, #tpu.memory_space<vmem>>, vector<16x48xbf16>
    %c48 = arith.constant 48 : index
    %c0_2 = arith.constant 0 : index
    %2 = vector.load %arg1[%c48, %c0_2] : memref<160x48xbf16, #tpu.memory_space<vmem>>, vector<16x48xbf16>
    %c64 = arith.constant 64 : index
    %c0_3 = arith.constant 0 : index
    %3 = vector.load %arg1[%c64, %c0_3] : memref<160x48xbf16, #tpu.memory_space<vmem>>, vector<16x48xbf16>
    %c0_4 = arith.constant 0 : index
    %c0_5 = arith.constant 0 : index
    %4 = vector.load %arg2[%c0_4, %c0_5] : memref<28x48xf32, #tpu.memory_space<vmem>>, vector<1x48xf32>
    %c1 = arith.constant 1 : index
    %c0_6 = arith.constant 0 : index
    %5 = vector.load %arg2[%c1, %c0_6] : memref<28x48xf32, #tpu.memory_space<vmem>>, vector<1x48xf32>
    %c2 = arith.constant 2 : index
    %c0_7 = arith.constant 0 : index
    %6 = vector.load %arg2[%c2, %c0_7] : memref<28x48xf32, #tpu.memory_space<vmem>>, vector<1x48xf32>
    %c3 = arith.constant 3 : index
    %c0_8 = arith.constant 0 : index
    %7 = vector.load %arg2[%c3, %c0_8] : memref<28x48xf32, #tpu.memory_space<vmem>>, vector<1x48xf32>
    %c0_9 = arith.constant 0 : index
    %c0_10 = arith.constant 0 : index
    %8 = vector.load %arg0[%c0_9, %c0_10] : memref<16x32xf32, #tpu.memory_space<vmem>>, vector<16x32xf32>
    %9 = arith.truncf %8 : vector<16x32xf32> to vector<16x32xbf16>
    %cst = arith.constant dense<0.000000e+00> : vector<16x48xf32>
    %10 = tpu.matmul %9, %0, %cst {dimension_numbers = #tpu.dot_dimension_numbers<[1], [0], [0], [1], [0, 0, 1, 1], [], []>} : vector<16x32xbf16>, vector<32x48xbf16>, vector<16x48xf32> -> vector<16x48xf32>
    %11 = vector.broadcast %4 : vector<1x48xf32> to vector<16x48xf32>
    %12 = arith.addf %10, %11 : vector<16x48xf32>
    %cst_11 = arith.constant 0.000000e+00 : f32
    %13 = vector.broadcast %cst_11 : f32 to vector<2x16xf32>
    %cst_12 = arith.constant 0.000000e+00 : f32
    %14 = vector.broadcast %cst_12 : f32 to vector<2x16xf32>
    %15 = arith.truncf %13 : vector<2x16xf32> to vector<2x16xbf16>
    %cst_13 = arith.constant dense<0.000000e+00> : vector<2x48xf32>
    %16 = tpu.matmul %15, %1, %cst_13 {dimension_numbers = #tpu.dot_dimension_numbers<[1], [0], [0], [1], [0, 0, 1, 1], [], []>} : vector<2x16xbf16>, vector<16x48xbf16>, vector<2x48xf32> -> vector<2x48xf32>
    %17 = vector.broadcast %5 : vector<1x48xf32> to vector<2x48xf32>
    %18 = arith.addf %16, %17 : vector<2x48xf32>
    %19 = arith.truncf %14 : vector<2x16xf32> to vector<2x16xbf16>
    %cst_14 = arith.constant dense<0.000000e+00> : vector<2x48xf32>
    %20 = tpu.matmul %19, %3, %cst_14 {dimension_numbers = #tpu.dot_dimension_numbers<[1], [0], [0], [1], [0, 0, 1, 1], [], []>} : vector<2x16xbf16>, vector<16x48xbf16>, vector<2x48xf32> -> vector<2x48xf32>
    %21 = vector.broadcast %7 : vector<1x48xf32> to vector<2x48xf32>
    %22 = arith.addf %20, %21 : vector<2x48xf32>
    %23 = vector.extract_strided_slice %12 {offsets = [0, 0], sizes = [2, 48], strides = [1, 1]} : vector<16x48xf32> to vector<2x48xf32>
    %24 = vector.extract_strided_slice %23 {offsets = [0, 0], sizes = [2, 16], strides = [1, 1]} : vector<2x48xf32> to vector<2x16xf32>
    %25 = vector.extract_strided_slice %18 {offsets = [0, 0], sizes = [2, 16], strides = [1, 1]} : vector<2x48xf32> to vector<2x16xf32>
    %26 = arith.addf %24, %25 : vector<2x16xf32>
    %27 = arith.negf %26 : vector<2x16xf32>
    %28 = math.exp %27 : vector<2x16xf32>
    %cst_15 = arith.constant 1.000000e+00 : f32
    %29 = vector.broadcast %cst_15 : f32 to vector<2x16xf32>
    %30 = arith.addf %29, %28 : vector<2x16xf32>
    %31 = arith.divf %29, %30 : vector<2x16xf32>
    %32 = vector.extract_strided_slice %23 {offsets = [0, 16], sizes = [2, 16], strides = [1, 1]} : vector<2x48xf32> to vector<2x16xf32>
    %33 = vector.extract_strided_slice %18 {offsets = [0, 16], sizes = [2, 16], strides = [1, 1]} : vector<2x48xf32> to vector<2x16xf32>
    %34 = arith.addf %32, %33 : vector<2x16xf32>
    %35 = arith.negf %34 : vector<2x16xf32>
    %36 = math.exp %35 : vector<2x16xf32>
    %cst_16 = arith.constant 1.000000e+00 : f32
    %37 = vector.broadcast %cst_16 : f32 to vector<2x16xf32>
    %38 = arith.addf %37, %36 : vector<2x16xf32>
    %39 = arith.divf %37, %38 : vector<2x16xf32>
    %40 = vector.extract_strided_slice %23 {offsets = [0, 32], sizes = [2, 16], strides = [1, 1]} : vector<2x48xf32> to vector<2x16xf32>
    %41 = vector.extract_strided_slice %18 {offsets = [0, 32], sizes = [2, 16], strides = [1, 1]} : vector<2x48xf32> to vector<2x16xf32>
    %42 = arith.mulf %31, %41 : vector<2x16xf32>
    %43 = arith.addf %40, %42 : vector<2x16xf32>
    %44 = math.tanh %43 : vector<2x16xf32>
    %cst_17 = arith.constant 1.000000e+00 : f32
    %45 = vector.broadcast %cst_17 : f32 to vector<2x16xf32>
    %46 = arith.subf %45, %39 : vector<2x16xf32>
    %47 = arith.mulf %46, %44 : vector<2x16xf32>
    %48 = arith.mulf %39, %13 : vector<2x16xf32>
    %49 = arith.addf %47, %48 : vector<2x16xf32>
    %50 = arith.truncf %49 : vector<2x16xf32> to vector<2x16xbf16>
    %cst_18 = arith.constant dense<0.000000e+00> : vector<2x48xf32>
    %51 = tpu.matmul %50, %2, %cst_18 {dimension_numbers = #tpu.dot_dimension_numbers<[1], [0], [0], [1], [0, 0, 1, 1], [], []>} : vector<2x16xbf16>, vector<16x48xbf16>, vector<2x48xf32> -> vector<2x48xf32>
    %52 = vector.broadcast %6 : vector<1x48xf32> to vector<2x48xf32>
    %53 = arith.addf %51, %52 : vector<2x48xf32>
    %54 = vector.extract_strided_slice %53 {offsets = [0, 0], sizes = [2, 16], strides = [1, 1]} : vector<2x48xf32> to vector<2x16xf32>
    %55 = vector.extract_strided_slice %22 {offsets = [0, 0], sizes = [2, 16], strides = [1, 1]} : vector<2x48xf32> to vector<2x16xf32>
    %56 = arith.addf %54, %55 : vector<2x16xf32>
    %57 = arith.negf %56 : vector<2x16xf32>
    %58 = math.exp %57 : vector<2x16xf32>
    %cst_19 = arith.constant 1.000000e+00 : f32
    %59 = vector.broadcast %cst_19 : f32 to vector<2x16xf32>
    %60 = arith.addf %59, %58 : vector<2x16xf32>
    %61 = arith.divf %59, %60 : vector<2x16xf32>
    %62 = vector.extract_strided_slice %53 {offsets = [0, 16], sizes = [2, 16], strides = [1, 1]} : vector<2x48xf32> to vector<2x16xf32>
    %63 = vector.extract_strided_slice %22 {offsets = [0, 16], sizes = [2, 16], strides = [1, 1]} : vector<2x48xf32> to vector<2x16xf32>
    %64 = arith.addf %62, %63 : vector<2x16xf32>
    %65 = arith.negf %64 : vector<2x16xf32>
    %66 = math.exp %65 : vector<2x16xf32>
    %cst_20 = arith.constant 1.000000e+00 : f32
    %67 = vector.broadcast %cst_20 : f32 to vector<2x16xf32>
    %68 = arith.addf %67, %66 : vector<2x16xf32>
    %69 = arith.divf %67, %68 : vector<2x16xf32>
    %70 = vector.extract_strided_slice %53 {offsets = [0, 32], sizes = [2, 16], strides = [1, 1]} : vector<2x48xf32> to vector<2x16xf32>
    %71 = vector.extract_strided_slice %22 {offsets = [0, 32], sizes = [2, 16], strides = [1, 1]} : vector<2x48xf32> to vector<2x16xf32>
    %72 = arith.mulf %61, %71 : vector<2x16xf32>
    %73 = arith.addf %70, %72 : vector<2x16xf32>
    %74 = math.tanh %73 : vector<2x16xf32>
    %cst_21 = arith.constant 1.000000e+00 : f32
    %75 = vector.broadcast %cst_21 : f32 to vector<2x16xf32>
    %76 = arith.subf %75, %69 : vector<2x16xf32>
    %77 = arith.mulf %76, %74 : vector<2x16xf32>
    %78 = arith.mulf %69, %14 : vector<2x16xf32>
    %79 = arith.addf %77, %78 : vector<2x16xf32>
    %80 = vector.extract_strided_slice %79 {offsets = [0, 0], sizes = [1, 16], strides = [1, 1]} : vector<2x16xf32> to vector<1x16xf32>
    %c0_22 = arith.constant 0 : index
    %c0_23 = arith.constant 0 : index
    %81 = vector.load %arg4[%c0_22, %c0_23] : memref<16x16xf32, #tpu.memory_space<vmem>>, vector<1x16xf32>
    tpu.vector_store %arg4[%c0_22, %c0_23], %80 {strides = array<i32>} : memref<16x16xf32, #tpu.memory_space<vmem>>, vector<1x16xf32>,
    %82 = vector.extract_strided_slice %79 {offsets = [1, 0], sizes = [1, 16], strides = [1, 1]} : vector<2x16xf32> to vector<1x16xf32>
    %c8 = arith.constant 8 : index
    %c0_24 = arith.constant 0 : index
    %83 = vector.load %arg4[%c8, %c0_24] : memref<16x16xf32, #tpu.memory_space<vmem>>, vector<1x16xf32>
    tpu.vector_store %arg4[%c8, %c0_24], %82 {strides = array<i32>} : memref<16x16xf32, #tpu.memory_space<vmem>>, vector<1x16xf32>,
    %84 = arith.truncf %49 : vector<2x16xf32> to vector<2x16xbf16>
    %cst_25 = arith.constant dense<0.000000e+00> : vector<2x48xf32>
    %85 = tpu.matmul %84, %1, %cst_25 {dimension_numbers = #tpu.dot_dimension_numbers<[1], [0], [0], [1], [0, 0, 1, 1], [], []>} : vector<2x16xbf16>, vector<16x48xbf16>, vector<2x48xf32> -> vector<2x48xf32>
    %86 = vector.broadcast %5 : vector<1x48xf32> to vector<2x48xf32>
    %87 = arith.addf %85, %86 : vector<2x48xf32>
    %88 = arith.truncf %79 : vector<2x16xf32> to vector<2x16xbf16>
    %cst_26 = arith.constant dense<0.000000e+00> : vector<2x48xf32>
    %89 = tpu.matmul %88, %3, %cst_26 {dimension_numbers = #tpu.dot_dimension_numbers<[1], [0], [0], [1], [0, 0, 1, 1], [], []>} : vector<2x16xbf16>, vector<16x48xbf16>, vector<2x48xf32> -> vector<2x48xf32>
    %90 = vector.broadcast %7 : vector<1x48xf32> to vector<2x48xf32>
    %91 = arith.addf %89, %90 : vector<2x48xf32>
    %92 = vector.extract_strided_slice %12 {offsets = [2, 0], sizes = [2, 48], strides = [1, 1]} : vector<16x48xf32> to vector<2x48xf32>
    %93 = vector.extract_strided_slice %92 {offsets = [0, 0], sizes = [2, 16], strides = [1, 1]} : vector<2x48xf32> to vector<2x16xf32>
    %94 = vector.extract_strided_slice %87 {offsets = [0, 0], sizes = [2, 16], strides = [1, 1]} : vector<2x48xf32> to vector<2x16xf32>
    %95 = arith.addf %93, %94 : vector<2x16xf32>
    %96 = arith.negf %95 : vector<2x16xf32>
    %97 = math.exp %96 : vector<2x16xf32>
    %cst_27 = arith.constant 1.000000e+00 : f32
    %98 = vector.broadcast %cst_27 : f32 to vector<2x16xf32>
    %99 = arith.addf %98, %97 : vector<2x16xf32>
    %100 = arith.divf %98, %99 : vector<2x16xf32>
    %101 = vector.extract_strided_slice %92 {offsets = [0, 16], sizes = [2, 16], strides = [1, 1]} : vector<2x48xf32> to vector<2x16xf32>
    %102 = vector.extract_strided_slice %87 {offsets = [0, 16], sizes = [2, 16], strides = [1, 1]} : vector<2x48xf32> to vector<2x16xf32>
    %103 = arith.addf %101, %102 : vector<2x16xf32>
    %104 = arith.negf %103 : vector<2x16xf32>
    %105 = math.exp %104 : vector<2x16xf32>
    %cst_28 = arith.constant 1.000000e+00 : f32
    %106 = vector.broadcast %cst_28 : f32 to vector<2x16xf32>
    %107 = arith.addf %106, %105 : vector<2x16xf32>
    %108 = arith.divf %106, %107 : vector<2x16xf32>
    %109 = vector.extract_strided_slice %92 {offsets = [0, 32], sizes = [2, 16], strides = [1, 1]} : vector<2x48xf32> to vector<2x16xf32>
    %110 = vector.extract_strided_slice %87 {offsets = [0, 32], sizes = [2, 16], strides = [1, 1]} : vector<2x48xf32> to vector<2x16xf32>
    %111 = arith.mulf %100, %110 : vector<2x16xf32>
    %112 = arith.addf %109, %111 : vector<2x16xf32>
    %113 = math.tanh %112 : vector<2x16xf32>
    %cst_29 = arith.constant 1.000000e+00 : f32
    %114 = vector.broadcast %cst_29 : f32 to vector<2x16xf32>
    %115 = arith.subf %114, %108 : vector<2x16xf32>
    %116 = arith.mulf %115, %113 : vector<2x16xf32>
    %117 = arith.mulf %108, %49 : vector<2x16xf32>
    %118 = arith.addf %116, %117 : vector<2x16xf32>
    %119 = arith.truncf %118 : vector<2x16xf32> to vector<2x16xbf16>
    %cst_30 = arith.constant dense<0.000000e+00> : vector<2x48xf32>
    %120 = tpu.matmul %119, %2, %cst_30 {dimension_numbers = #tpu.dot_dimension_numbers<[1], [0], [0], [1], [0, 0, 1, 1], [], []>} : vector<2x16xbf16>, vector<16x48xbf16>, vector<2x48xf32> -> vector<2x48xf32>
    %121 = vector.broadcast %6 : vector<1x48xf32> to vector<2x48xf32>
    %122 = arith.addf %120, %121 : vector<2x48xf32>
    %123 = vector.extract_strided_slice %122 {offsets = [0, 0], sizes = [2, 16], strides = [1, 1]} : vector<2x48xf32> to vector<2x16xf32>
    %124 = vector.extract_strided_slice %91 {offsets = [0, 0], sizes = [2, 16], strides = [1, 1]} : vector<2x48xf32> to vector<2x16xf32>
    %125 = arith.addf %123, %124 : vector<2x16xf32>
    %126 = arith.negf %125 : vector<2x16xf32>
    %127 = math.exp %126 : vector<2x16xf32>
    %cst_31 = arith.constant 1.000000e+00 : f32
    %128 = vector.broadcast %cst_31 : f32 to vector<2x16xf32>
    %129 = arith.addf %128, %127 : vector<2x16xf32>
    %130 = arith.divf %128, %129 : vector<2x16xf32>
    %131 = vector.extract_strided_slice %122 {offsets = [0, 16], sizes = [2, 16], strides = [1, 1]} : vector<2x48xf32> to vector<2x16xf32>
    %132 = vector.extract_strided_slice %91 {offsets = [0, 16], sizes = [2, 16], strides = [1, 1]} : vector<2x48xf32> to vector<2x16xf32>
    %133 = arith.addf %131, %132 : vector<2x16xf32>
    %134 = arith.negf %133 : vector<2x16xf32>
    %135 = math.exp %134 : vector<2x16xf32>
    %cst_32 = arith.constant 1.000000e+00 : f32
    %136 = vector.broadcast %cst_32 : f32 to vector<2x16xf32>
    %137 = arith.addf %136, %135 : vector<2x16xf32>
    %138 = arith.divf %136, %137 : vector<2x16xf32>
    %139 = vector.extract_strided_slice %122 {offsets = [0, 32], sizes = [2, 16], strides = [1, 1]} : vector<2x48xf32> to vector<2x16xf32>
    %140 = vector.extract_strided_slice %91 {offsets = [0, 32], sizes = [2, 16], strides = [1, 1]} : vector<2x48xf32> to vector<2x16xf32>
    %141 = arith.mulf %130, %140 : vector<2x16xf32>
    %142 = arith.addf %139, %141 : vector<2x16xf32>
    %143 = math.tanh %142 : vector<2x16xf32>
    %cst_33 = arith.constant 1.000000e+00 : f32
    %144 = vector.broadcast %cst_33 : f32 to vector<2x16xf32>
    %145 = arith.subf %144, %138 : vector<2x16xf32>
    %146 = arith.mulf %145, %143 : vector<2x16xf32>
    %147 = arith.mulf %138, %79 : vector<2x16xf32>
    %148 = arith.addf %146, %147 : vector<2x16xf32>
    %149 = vector.extract_strided_slice %148 {offsets = [0, 0], sizes = [1, 16], strides = [1, 1]} : vector<2x16xf32> to vector<1x16xf32>
    %c1_34 = arith.constant 1 : index
    %c0_35 = arith.constant 0 : index
    %150 = vector.load %arg4[%c1_34, %c0_35] : memref<16x16xf32, #tpu.memory_space<vmem>>, vector<1x16xf32>
    tpu.vector_store %arg4[%c1_34, %c0_35], %149 {strides = array<i32>} : memref<16x16xf32, #tpu.memory_space<vmem>>, vector<1x16xf32>,
    %151 = vector.extract_strided_slice %148 {offsets = [1, 0], sizes = [1, 16], strides = [1, 1]} : vector<2x16xf32> to vector<1x16xf32>
    %c9 = arith.constant 9 : index
    %c0_36 = arith.constant 0 : index
    %152 = vector.load %arg4[%c9, %c0_36] : memref<16x16xf32, #tpu.memory_space<vmem>>, vector<1x16xf32>
    tpu.vector_store %arg4[%c9, %c0_36], %151 {strides = array<i32>} : memref<16x16xf32, #tpu.memory_space<vmem>>, vector<1x16xf32>,
    %153 = arith.truncf %118 : vector<2x16xf32> to vector<2x16xbf16>
    %cst_37 = arith.constant dense<0.000000e+00> : vector<2x48xf32>
    %154 = tpu.matmul %153, %1, %cst_37 {dimension_numbers = #tpu.dot_dimension_numbers<[1], [0], [0], [1], [0, 0, 1, 1], [], []>} : vector<2x16xbf16>, vector<16x48xbf16>, vector<2x48xf32> -> vector<2x48xf32>
    %155 = vector.broadcast %5 : vector<1x48xf32> to vector<2x48xf32>
    %156 = arith.addf %154, %155 : vector<2x48xf32>
    %157 = arith.truncf %148 : vector<2x16xf32> to vector<2x16xbf16>
    %cst_38 = arith.constant dense<0.000000e+00> : vector<2x48xf32>
    %158 = tpu.matmul %157, %3, %cst_38 {dimension_numbers = #tpu.dot_dimension_numbers<[1], [0], [0], [1], [0, 0, 1, 1], [], []>} : vector<2x16xbf16>, vector<16x48xbf16>, vector<2x48xf32> -> vector<2x48xf32>
    %159 = vector.broadcast %7 : vector<1x48xf32> to vector<2x48xf32>
    %160 = arith.addf %158, %159 : vector<2x48xf32>
    %161 = vector.extract_strided_slice %12 {offsets = [4, 0], sizes = [2, 48], strides = [1, 1]} : vector<16x48xf32> to vector<2x48xf32>
    %162 = vector.extract_strided_slice %161 {offsets = [0, 0], sizes = [2, 16], strides = [1, 1]} : vector<2x48xf32> to vector<2x16xf32>
    %163 = vector.extract_strided_slice %156 {offsets = [0, 0], sizes = [2, 16], strides = [1, 1]} : vector<2x48xf32> to vector<2x16xf32>
    %164 = arith.addf %162, %163 : vector<2x16xf32>
    %165 = arith.negf %164 : vector<2x16xf32>
    %166 = math.exp %165 : vector<2x16xf32>
    %cst_39 = arith.constant 1.000000e+00 : f32
    %167 = vector.broadcast %cst_39 : f32 to vector<2x16xf32>
    %168 = arith.addf %167, %166 : vector<2x16xf32>
    %169 = arith.divf %167, %168 : vector<2x16xf32>
    %170 = vector.extract_strided_slice %161 {offsets = [0, 16], sizes = [2, 16], strides = [1, 1]} : vector<2x48xf32> to vector<2x16xf32>
    %171 = vector.extract_strided_slice %156 {offsets = [0, 16], sizes = [2, 16], strides = [1, 1]} : vector<2x48xf32> to vector<2x16xf32>
    %172 = arith.addf %170, %171 : vector<2x16xf32>
    %173 = arith.negf %172 : vector<2x16xf32>
    %174 = math.exp %173 : vector<2x16xf32>
    %cst_40 = arith.constant 1.000000e+00 : f32
    %175 = vector.broadcast %cst_40 : f32 to vector<2x16xf32>
    %176 = arith.addf %175, %174 : vector<2x16xf32>
    %177 = arith.divf %175, %176 : vector<2x16xf32>
    %178 = vector.extract_strided_slice %161 {offsets = [0, 32], sizes = [2, 16], strides = [1, 1]} : vector<2x48xf32> to vector<2x16xf32>
    %179 = vector.extract_strided_slice %156 {offsets = [0, 32], sizes = [2, 16], strides = [1, 1]} : vector<2x48xf32> to vector<2x16xf32>
    %180 = arith.mulf %169, %179 : vector<2x16xf32>
    %181 = arith.addf %178, %180 : vector<2x16xf32>
    %182 = math.tanh %181 : vector<2x16xf32>
    %cst_41 = arith.constant 1.000000e+00 : f32
    %183 = vector.broadcast %cst_41 : f32 to vector<2x16xf32>
    %184 = arith.subf %183, %177 : vector<2x16xf32>
    %185 = arith.mulf %184, %182 : vector<2x16xf32>
    %186 = arith.mulf %177, %118 : vector<2x16xf32>
    %187 = arith.addf %185, %186 : vector<2x16xf32>
    %188 = arith.truncf %187 : vector<2x16xf32> to vector<2x16xbf16>
    %cst_42 = arith.constant dense<0.000000e+00> : vector<2x48xf32>
    %189 = tpu.matmul %188, %2, %cst_42 {dimension_numbers = #tpu.dot_dimension_numbers<[1], [0], [0], [1], [0, 0, 1, 1], [], []>} : vector<2x16xbf16>, vector<16x48xbf16>, vector<2x48xf32> -> vector<2x48xf32>
    %190 = vector.broadcast %6 : vector<1x48xf32> to vector<2x48xf32>
    %191 = arith.addf %189, %190 : vector<2x48xf32>
    %192 = vector.extract_strided_slice %191 {offsets = [0, 0], sizes = [2, 16], strides = [1, 1]} : vector<2x48xf32> to vector<2x16xf32>
    %193 = vector.extract_strided_slice %160 {offsets = [0, 0], sizes = [2, 16], strides = [1, 1]} : vector<2x48xf32> to vector<2x16xf32>
    %194 = arith.addf %192, %193 : vector<2x16xf32>
    %195 = arith.negf %194 : vector<2x16xf32>
    %196 = math.exp %195 : vector<2x16xf32>
    %cst_43 = arith.constant 1.000000e+00 : f32
    %197 = vector.broadcast %cst_43 : f32 to vector<2x16xf32>
    %198 = arith.addf %197, %196 : vector<2x16xf32>
    %199 = arith.divf %197, %198 : vector<2x16xf32>
    %200 = vector.extract_strided_slice %191 {offsets = [0, 16], sizes = [2, 16], strides = [1, 1]} : vector<2x48xf32> to vector<2x16xf32>
    %201 = vector.extract_strided_slice %160 {offsets = [0, 16], sizes = [2, 16], strides = [1, 1]} : vector<2x48xf32> to vector<2x16xf32>
    %202 = arith.addf %200, %201 : vector<2x16xf32>
    %203 = arith.negf %202 : vector<2x16xf32>
    %204 = math.exp %203 : vector<2x16xf32>
    %cst_44 = arith.constant 1.000000e+00 : f32
    %205 = vector.broadcast %cst_44 : f32 to vector<2x16xf32>
    %206 = arith.addf %205, %204 : vector<2x16xf32>
    %207 = arith.divf %205, %206 : vector<2x16xf32>
    %208 = vector.extract_strided_slice %191 {offsets = [0, 32], sizes = [2, 16], strides = [1, 1]} : vector<2x48xf32> to vector<2x16xf32>
    %209 = vector.extract_strided_slice %160 {offsets = [0, 32], sizes = [2, 16], strides = [1, 1]} : vector<2x48xf32> to vector<2x16xf32>
    %210 = arith.mulf %199, %209 : vector<2x16xf32>
    %211 = arith.addf %208, %210 : vector<2x16xf32>
    %212 = math.tanh %211 : vector<2x16xf32>
    %cst_45 = arith.constant 1.000000e+00 : f32
    %213 = vector.broadcast %cst_45 : f32 to vector<2x16xf32>
    %214 = arith.subf %213, %207 : vector<2x16xf32>
    %215 = arith.mulf %214, %212 : vector<2x16xf32>
    %216 = arith.mulf %207, %148 : vector<2x16xf32>
    %217 = arith.addf %215, %216 : vector<2x16xf32>
    %218 = vector.extract_strided_slice %217 {offsets = [0, 0], sizes = [1, 16], strides = [1, 1]} : vector<2x16xf32> to vector<1x16xf32>
    %c2_46 = arith.constant 2 : index
    %c0_47 = arith.constant 0 : index
    %219 = vector.load %arg4[%c2_46, %c0_47] : memref<16x16xf32, #tpu.memory_space<vmem>>, vector<1x16xf32>
    tpu.vector_store %arg4[%c2_46, %c0_47], %218 {strides = array<i32>} : memref<16x16xf32, #tpu.memory_space<vmem>>, vector<1x16xf32>,
    %220 = vector.extract_strided_slice %217 {offsets = [1, 0], sizes = [1, 16], strides = [1, 1]} : vector<2x16xf32> to vector<1x16xf32>
    %c10 = arith.constant 10 : index
    %c0_48 = arith.constant 0 : index
    %221 = vector.load %arg4[%c10, %c0_48] : memref<16x16xf32, #tpu.memory_space<vmem>>, vector<1x16xf32>
    tpu.vector_store %arg4[%c10, %c0_48], %220 {strides = array<i32>} : memref<16x16xf32, #tpu.memory_space<vmem>>, vector<1x16xf32>,
    %222 = arith.truncf %187 : vector<2x16xf32> to vector<2x16xbf16>
    %cst_49 = arith.constant dense<0.000000e+00> : vector<2x48xf32>
    %223 = tpu.matmul %222, %1, %cst_49 {dimension_numbers = #tpu.dot_dimension_numbers<[1], [0], [0], [1], [0, 0, 1, 1], [], []>} : vector<2x16xbf16>, vector<16x48xbf16>, vector<2x48xf32> -> vector<2x48xf32>
    %224 = vector.broadcast %5 : vector<1x48xf32> to vector<2x48xf32>
    %225 = arith.addf %223, %224 : vector<2x48xf32>
    %226 = arith.truncf %217 : vector<2x16xf32> to vector<2x16xbf16>
    %cst_50 = arith.constant dense<0.000000e+00> : vector<2x48xf32>
    %227 = tpu.matmul %226, %3, %cst_50 {dimension_numbers = #tpu.dot_dimension_numbers<[1], [0], [0], [1], [0, 0, 1, 1], [], []>} : vector<2x16xbf16>, vector<16x48xbf16>, vector<2x48xf32> -> vector<2x48xf32>
    %228 = vector.broadcast %7 : vector<1x48xf32> to vector<2x48xf32>
    %229 = arith.addf %227, %228 : vector<2x48xf32>
    %230 = vector.extract_strided_slice %12 {offsets = [6, 0], sizes = [2, 48], strides = [1, 1]} : vector<16x48xf32> to vector<2x48xf32>
    %231 = vector.extract_strided_slice %230 {offsets = [0, 0], sizes = [2, 16], strides = [1, 1]} : vector<2x48xf32> to vector<2x16xf32>
    %232 = vector.extract_strided_slice %225 {offsets = [0, 0], sizes = [2, 16], strides = [1, 1]} : vector<2x48xf32> to vector<2x16xf32>
    %233 = arith.addf %231, %232 : vector<2x16xf32>
    %234 = arith.negf %233 : vector<2x16xf32>
    %235 = math.exp %234 : vector<2x16xf32>
    %cst_51 = arith.constant 1.000000e+00 : f32
    %236 = vector.broadcast %cst_51 : f32 to vector<2x16xf32>
    %237 = arith.addf %236, %235 : vector<2x16xf32>
    %238 = arith.divf %236, %237 : vector<2x16xf32>
    %239 = vector.extract_strided_slice %230 {offsets = [0, 16], sizes = [2, 16], strides = [1, 1]} : vector<2x48xf32> to vector<2x16xf32>
    %240 = vector.extract_strided_slice %225 {offsets = [0, 16], sizes = [2, 16], strides = [1, 1]} : vector<2x48xf32> to vector<2x16xf32>
    %241 = arith.addf %239, %240 : vector<2x16xf32>
    %242 = arith.negf %241 : vector<2x16xf32>
    %243 = math.exp %242 : vector<2x16xf32>
    %cst_52 = arith.constant 1.000000e+00 : f32
    %244 = vector.broadcast %cst_52 : f32 to vector<2x16xf32>
    %245 = arith.addf %244, %243 : vector<2x16xf32>
    %246 = arith.divf %244, %245 : vector<2x16xf32>
    %247 = vector.extract_strided_slice %230 {offsets = [0, 32], sizes = [2, 16], strides = [1, 1]} : vector<2x48xf32> to vector<2x16xf32>
    %248 = vector.extract_strided_slice %225 {offsets = [0, 32], sizes = [2, 16], strides = [1, 1]} : vector<2x48xf32> to vector<2x16xf32>
    %249 = arith.mulf %238, %248 : vector<2x16xf32>
    %250 = arith.addf %247, %249 : vector<2x16xf32>
    %251 = math.tanh %250 : vector<2x16xf32>
    %cst_53 = arith.constant 1.000000e+00 : f32
    %252 = vector.broadcast %cst_53 : f32 to vector<2x16xf32>
    %253 = arith.subf %252, %246 : vector<2x16xf32>
    %254 = arith.mulf %253, %251 : vector<2x16xf32>
    %255 = arith.mulf %246, %187 : vector<2x16xf32>
    %256 = arith.addf %254, %255 : vector<2x16xf32>
    %257 = arith.truncf %256 : vector<2x16xf32> to vector<2x16xbf16>
    %cst_54 = arith.constant dense<0.000000e+00> : vector<2x48xf32>
    %258 = tpu.matmul %257, %2, %cst_54 {dimension_numbers = #tpu.dot_dimension_numbers<[1], [0], [0], [1], [0, 0, 1, 1], [], []>} : vector<2x16xbf16>, vector<16x48xbf16>, vector<2x48xf32> -> vector<2x48xf32>
    %259 = vector.broadcast %6 : vector<1x48xf32> to vector<2x48xf32>
    %260 = arith.addf %258, %259 : vector<2x48xf32>
    %261 = vector.extract_strided_slice %260 {offsets = [0, 0], sizes = [2, 16], strides = [1, 1]} : vector<2x48xf32> to vector<2x16xf32>
    %262 = vector.extract_strided_slice %229 {offsets = [0, 0], sizes = [2, 16], strides = [1, 1]} : vector<2x48xf32> to vector<2x16xf32>
    %263 = arith.addf %261, %262 : vector<2x16xf32>
    %264 = arith.negf %263 : vector<2x16xf32>
    %265 = math.exp %264 : vector<2x16xf32>
    %cst_55 = arith.constant 1.000000e+00 : f32
    %266 = vector.broadcast %cst_55 : f32 to vector<2x16xf32>
    %267 = arith.addf %266, %265 : vector<2x16xf32>
    %268 = arith.divf %266, %267 : vector<2x16xf32>
    %269 = vector.extract_strided_slice %260 {offsets = [0, 16], sizes = [2, 16], strides = [1, 1]} : vector<2x48xf32> to vector<2x16xf32>
    %270 = vector.extract_strided_slice %229 {offsets = [0, 16], sizes = [2, 16], strides = [1, 1]} : vector<2x48xf32> to vector<2x16xf32>
    %271 = arith.addf %269, %270 : vector<2x16xf32>
    %272 = arith.negf %271 : vector<2x16xf32>
    %273 = math.exp %272 : vector<2x16xf32>
    %cst_56 = arith.constant 1.000000e+00 : f32
    %274 = vector.broadcast %cst_56 : f32 to vector<2x16xf32>
    %275 = arith.addf %274, %273 : vector<2x16xf32>
    %276 = arith.divf %274, %275 : vector<2x16xf32>
    %277 = vector.extract_strided_slice %260 {offsets = [0, 32], sizes = [2, 16], strides = [1, 1]} : vector<2x48xf32> to vector<2x16xf32>
    %278 = vector.extract_strided_slice %229 {offsets = [0, 32], sizes = [2, 16], strides = [1, 1]} : vector<2x48xf32> to vector<2x16xf32>
    %279 = arith.mulf %268, %278 : vector<2x16xf32>
    %280 = arith.addf %277, %279 : vector<2x16xf32>
    %281 = math.tanh %280 : vector<2x16xf32>
    %cst_57 = arith.constant 1.000000e+00 : f32
    %282 = vector.broadcast %cst_57 : f32 to vector<2x16xf32>
    %283 = arith.subf %282, %276 : vector<2x16xf32>
    %284 = arith.mulf %283, %281 : vector<2x16xf32>
    %285 = arith.mulf %276, %217 : vector<2x16xf32>
    %286 = arith.addf %284, %285 : vector<2x16xf32>
    %287 = vector.extract_strided_slice %286 {offsets = [0, 0], sizes = [1, 16], strides = [1, 1]} : vector<2x16xf32> to vector<1x16xf32>
    %c3_58 = arith.constant 3 : index
    %c0_59 = arith.constant 0 : index
    %288 = vector.load %arg4[%c3_58, %c0_59] : memref<16x16xf32, #tpu.memory_space<vmem>>, vector<1x16xf32>
    tpu.vector_store %arg4[%c3_58, %c0_59], %287 {strides = array<i32>} : memref<16x16xf32, #tpu.memory_space<vmem>>, vector<1x16xf32>,
    %289 = vector.extract_strided_slice %286 {offsets = [1, 0], sizes = [1, 16], strides = [1, 1]} : vector<2x16xf32> to vector<1x16xf32>
    %c11 = arith.constant 11 : index
    %c0_60 = arith.constant 0 : index
    %290 = vector.load %arg4[%c11, %c0_60] : memref<16x16xf32, #tpu.memory_space<vmem>>, vector<1x16xf32>
    tpu.vector_store %arg4[%c11, %c0_60], %289 {strides = array<i32>} : memref<16x16xf32, #tpu.memory_space<vmem>>, vector<1x16xf32>,
    %291 = arith.truncf %256 : vector<2x16xf32> to vector<2x16xbf16>
    %cst_61 = arith.constant dense<0.000000e+00> : vector<2x48xf32>
    %292 = tpu.matmul %291, %1, %cst_61 {dimension_numbers = #tpu.dot_dimension_numbers<[1], [0], [0], [1], [0, 0, 1, 1], [], []>} : vector<2x16xbf16>, vector<16x48xbf16>, vector<2x48xf32> -> vector<2x48xf32>
    %293 = vector.broadcast %5 : vector<1x48xf32> to vector<2x48xf32>
    %294 = arith.addf %292, %293 : vector<2x48xf32>
    %295 = arith.truncf %286 : vector<2x16xf32> to vector<2x16xbf16>
    %cst_62 = arith.constant dense<0.000000e+00> : vector<2x48xf32>
    %296 = tpu.matmul %295, %3, %cst_62 {dimension_numbers = #tpu.dot_dimension_numbers<[1], [0], [0], [1], [0, 0, 1, 1], [], []>} : vector<2x16xbf16>, vector<16x48xbf16>, vector<2x48xf32> -> vector<2x48xf32>
    %297 = vector.broadcast %7 : vector<1x48xf32> to vector<2x48xf32>
    %298 = arith.addf %296, %297 : vector<2x48xf32>
    %299 = vector.extract_strided_slice %12 {offsets = [8, 0], sizes = [2, 48], strides = [1, 1]} : vector<16x48xf32> to vector<2x48xf32>
    %300 = vector.extract_strided_slice %299 {offsets = [0, 0], sizes = [2, 16], strides = [1, 1]} : vector<2x48xf32> to vector<2x16xf32>
    %301 = vector.extract_strided_slice %294 {offsets = [0, 0], sizes = [2, 16], strides = [1, 1]} : vector<2x48xf32> to vector<2x16xf32>
    %302 = arith.addf %300, %301 : vector<2x16xf32>
    %303 = arith.negf %302 : vector<2x16xf32>
    %304 = math.exp %303 : vector<2x16xf32>
    %cst_63 = arith.constant 1.000000e+00 : f32
    %305 = vector.broadcast %cst_63 : f32 to vector<2x16xf32>
    %306 = arith.addf %305, %304 : vector<2x16xf32>
    %307 = arith.divf %305, %306 : vector<2x16xf32>
    %308 = vector.extract_strided_slice %299 {offsets = [0, 16], sizes = [2, 16], strides = [1, 1]} : vector<2x48xf32> to vector<2x16xf32>
    %309 = vector.extract_strided_slice %294 {offsets = [0, 16], sizes = [2, 16], strides = [1, 1]} : vector<2x48xf32> to vector<2x16xf32>
    %310 = arith.addf %308, %309 : vector<2x16xf32>
    %311 = arith.negf %310 : vector<2x16xf32>
    %312 = math.exp %311 : vector<2x16xf32>
    %cst_64 = arith.constant 1.000000e+00 : f32
    %313 = vector.broadcast %cst_64 : f32 to vector<2x16xf32>
    %314 = arith.addf %313, %312 : vector<2x16xf32>
    %315 = arith.divf %313, %314 : vector<2x16xf32>
    %316 = vector.extract_strided_slice %299 {offsets = [0, 32], sizes = [2, 16], strides = [1, 1]} : vector<2x48xf32> to vector<2x16xf32>
    %317 = vector.extract_strided_slice %294 {offsets = [0, 32], sizes = [2, 16], strides = [1, 1]} : vector<2x48xf32> to vector<2x16xf32>
    %318 = arith.mulf %307, %317 : vector<2x16xf32>
    %319 = arith.addf %316, %318 : vector<2x16xf32>
    %320 = math.tanh %319 : vector<2x16xf32>
    %cst_65 = arith.constant 1.000000e+00 : f32
    %321 = vector.broadcast %cst_65 : f32 to vector<2x16xf32>
    %322 = arith.subf %321, %315 : vector<2x16xf32>
    %323 = arith.mulf %322, %320 : vector<2x16xf32>
    %324 = arith.mulf %315, %256 : vector<2x16xf32>
    %325 = arith.addf %323, %324 : vector<2x16xf32>
    %326 = arith.truncf %325 : vector<2x16xf32> to vector<2x16xbf16>
    %cst_66 = arith.constant dense<0.000000e+00> : vector<2x48xf32>
    %327 = tpu.matmul %326, %2, %cst_66 {dimension_numbers = #tpu.dot_dimension_numbers<[1], [0], [0], [1], [0, 0, 1, 1], [], []>} : vector<2x16xbf16>, vector<16x48xbf16>, vector<2x48xf32> -> vector<2x48xf32>
    %328 = vector.broadcast %6 : vector<1x48xf32> to vector<2x48xf32>
    %329 = arith.addf %327, %328 : vector<2x48xf32>
    %330 = vector.extract_strided_slice %329 {offsets = [0, 0], sizes = [2, 16], strides = [1, 1]} : vector<2x48xf32> to vector<2x16xf32>
    %331 = vector.extract_strided_slice %298 {offsets = [0, 0], sizes = [2, 16], strides = [1, 1]} : vector<2x48xf32> to vector<2x16xf32>
    %332 = arith.addf %330, %331 : vector<2x16xf32>
    %333 = arith.negf %332 : vector<2x16xf32>
    %334 = math.exp %333 : vector<2x16xf32>
    %cst_67 = arith.constant 1.000000e+00 : f32
    %335 = vector.broadcast %cst_67 : f32 to vector<2x16xf32>
    %336 = arith.addf %335, %334 : vector<2x16xf32>
    %337 = arith.divf %335, %336 : vector<2x16xf32>
    %338 = vector.extract_strided_slice %329 {offsets = [0, 16], sizes = [2, 16], strides = [1, 1]} : vector<2x48xf32> to vector<2x16xf32>
    %339 = vector.extract_strided_slice %298 {offsets = [0, 16], sizes = [2, 16], strides = [1, 1]} : vector<2x48xf32> to vector<2x16xf32>
    %340 = arith.addf %338, %339 : vector<2x16xf32>
    %341 = arith.negf %340 : vector<2x16xf32>
    %342 = math.exp %341 : vector<2x16xf32>
    %cst_68 = arith.constant 1.000000e+00 : f32
    %343 = vector.broadcast %cst_68 : f32 to vector<2x16xf32>
    %344 = arith.addf %343, %342 : vector<2x16xf32>
    %345 = arith.divf %343, %344 : vector<2x16xf32>
    %346 = vector.extract_strided_slice %329 {offsets = [0, 32], sizes = [2, 16], strides = [1, 1]} : vector<2x48xf32> to vector<2x16xf32>
    %347 = vector.extract_strided_slice %298 {offsets = [0, 32], sizes = [2, 16], strides = [1, 1]} : vector<2x48xf32> to vector<2x16xf32>
    %348 = arith.mulf %337, %347 : vector<2x16xf32>
    %349 = arith.addf %346, %348 : vector<2x16xf32>
    %350 = math.tanh %349 : vector<2x16xf32>
    %cst_69 = arith.constant 1.000000e+00 : f32
    %351 = vector.broadcast %cst_69 : f32 to vector<2x16xf32>
    %352 = arith.subf %351, %345 : vector<2x16xf32>
    %353 = arith.mulf %352, %350 : vector<2x16xf32>
    %354 = arith.mulf %345, %286 : vector<2x16xf32>
    %355 = arith.addf %353, %354 : vector<2x16xf32>
    %356 = vector.extract_strided_slice %355 {offsets = [0, 0], sizes = [1, 16], strides = [1, 1]} : vector<2x16xf32> to vector<1x16xf32>
    %c4 = arith.constant 4 : index
    %c0_70 = arith.constant 0 : index
    %357 = vector.load %arg4[%c4, %c0_70] : memref<16x16xf32, #tpu.memory_space<vmem>>, vector<1x16xf32>
    tpu.vector_store %arg4[%c4, %c0_70], %356 {strides = array<i32>} : memref<16x16xf32, #tpu.memory_space<vmem>>, vector<1x16xf32>,
    %358 = vector.extract_strided_slice %355 {offsets = [1, 0], sizes = [1, 16], strides = [1, 1]} : vector<2x16xf32> to vector<1x16xf32>
    %c12 = arith.constant 12 : index
    %c0_71 = arith.constant 0 : index
    %359 = vector.load %arg4[%c12, %c0_71] : memref<16x16xf32, #tpu.memory_space<vmem>>, vector<1x16xf32>
    tpu.vector_store %arg4[%c12, %c0_71], %358 {strides = array<i32>} : memref<16x16xf32, #tpu.memory_space<vmem>>, vector<1x16xf32>,
    %360 = arith.truncf %325 : vector<2x16xf32> to vector<2x16xbf16>
    %cst_72 = arith.constant dense<0.000000e+00> : vector<2x48xf32>
    %361 = tpu.matmul %360, %1, %cst_72 {dimension_numbers = #tpu.dot_dimension_numbers<[1], [0], [0], [1], [0, 0, 1, 1], [], []>} : vector<2x16xbf16>, vector<16x48xbf16>, vector<2x48xf32> -> vector<2x48xf32>
    %362 = vector.broadcast %5 : vector<1x48xf32> to vector<2x48xf32>
    %363 = arith.addf %361, %362 : vector<2x48xf32>
    %364 = arith.truncf %355 : vector<2x16xf32> to vector<2x16xbf16>
    %cst_73 = arith.constant dense<0.000000e+00> : vector<2x48xf32>
    %365 = tpu.matmul %364, %3, %cst_73 {dimension_numbers = #tpu.dot_dimension_numbers<[1], [0], [0], [1], [0, 0, 1, 1], [], []>} : vector<2x16xbf16>, vector<16x48xbf16>, vector<2x48xf32> -> vector<2x48xf32>
    %366 = vector.broadcast %7 : vector<1x48xf32> to vector<2x48xf32>
    %367 = arith.addf %365, %366 : vector<2x48xf32>
    %368 = vector.extract_strided_slice %12 {offsets = [10, 0], sizes = [2, 48], strides = [1, 1]} : vector<16x48xf32> to vector<2x48xf32>
    %369 = vector.extract_strided_slice %368 {offsets = [0, 0], sizes = [2, 16], strides = [1, 1]} : vector<2x48xf32> to vector<2x16xf32>
    %370 = vector.extract_strided_slice %363 {offsets = [0, 0], sizes = [2, 16], strides = [1, 1]} : vector<2x48xf32> to vector<2x16xf32>
    %371 = arith.addf %369, %370 : vector<2x16xf32>
    %372 = arith.negf %371 : vector<2x16xf32>
    %373 = math.exp %372 : vector<2x16xf32>
    %cst_74 = arith.constant 1.000000e+00 : f32
    %374 = vector.broadcast %cst_74 : f32 to vector<2x16xf32>
    %375 = arith.addf %374, %373 : vector<2x16xf32>
    %376 = arith.divf %374, %375 : vector<2x16xf32>
    %377 = vector.extract_strided_slice %368 {offsets = [0, 16], sizes = [2, 16], strides = [1, 1]} : vector<2x48xf32> to vector<2x16xf32>
    %378 = vector.extract_strided_slice %363 {offsets = [0, 16], sizes = [2, 16], strides = [1, 1]} : vector<2x48xf32> to vector<2x16xf32>
    %379 = arith.addf %377, %378 : vector<2x16xf32>
    %380 = arith.negf %379 : vector<2x16xf32>
    %381 = math.exp %380 : vector<2x16xf32>
    %cst_75 = arith.constant 1.000000e+00 : f32
    %382 = vector.broadcast %cst_75 : f32 to vector<2x16xf32>
    %383 = arith.addf %382, %381 : vector<2x16xf32>
    %384 = arith.divf %382, %383 : vector<2x16xf32>
    %385 = vector.extract_strided_slice %368 {offsets = [0, 32], sizes = [2, 16], strides = [1, 1]} : vector<2x48xf32> to vector<2x16xf32>
    %386 = vector.extract_strided_slice %363 {offsets = [0, 32], sizes = [2, 16], strides = [1, 1]} : vector<2x48xf32> to vector<2x16xf32>
    %387 = arith.mulf %376, %386 : vector<2x16xf32>
    %388 = arith.addf %385, %387 : vector<2x16xf32>
    %389 = math.tanh %388 : vector<2x16xf32>
    %cst_76 = arith.constant 1.000000e+00 : f32
    %390 = vector.broadcast %cst_76 : f32 to vector<2x16xf32>
    %391 = arith.subf %390, %384 : vector<2x16xf32>
    %392 = arith.mulf %391, %389 : vector<2x16xf32>
    %393 = arith.mulf %384, %325 : vector<2x16xf32>
    %394 = arith.addf %392, %393 : vector<2x16xf32>
    %395 = arith.truncf %394 : vector<2x16xf32> to vector<2x16xbf16>
    %cst_77 = arith.constant dense<0.000000e+00> : vector<2x48xf32>
    %396 = tpu.matmul %395, %2, %cst_77 {dimension_numbers = #tpu.dot_dimension_numbers<[1], [0], [0], [1], [0, 0, 1, 1], [], []>} : vector<2x16xbf16>, vector<16x48xbf16>, vector<2x48xf32> -> vector<2x48xf32>
    %397 = vector.broadcast %6 : vector<1x48xf32> to vector<2x48xf32>
    %398 = arith.addf %396, %397 : vector<2x48xf32>
    %399 = vector.extract_strided_slice %398 {offsets = [0, 0], sizes = [2, 16], strides = [1, 1]} : vector<2x48xf32> to vector<2x16xf32>
    %400 = vector.extract_strided_slice %367 {offsets = [0, 0], sizes = [2, 16], strides = [1, 1]} : vector<2x48xf32> to vector<2x16xf32>
    %401 = arith.addf %399, %400 : vector<2x16xf32>
    %402 = arith.negf %401 : vector<2x16xf32>
    %403 = math.exp %402 : vector<2x16xf32>
    %cst_78 = arith.constant 1.000000e+00 : f32
    %404 = vector.broadcast %cst_78 : f32 to vector<2x16xf32>
    %405 = arith.addf %404, %403 : vector<2x16xf32>
    %406 = arith.divf %404, %405 : vector<2x16xf32>
    %407 = vector.extract_strided_slice %398 {offsets = [0, 16], sizes = [2, 16], strides = [1, 1]} : vector<2x48xf32> to vector<2x16xf32>
    %408 = vector.extract_strided_slice %367 {offsets = [0, 16], sizes = [2, 16], strides = [1, 1]} : vector<2x48xf32> to vector<2x16xf32>
    %409 = arith.addf %407, %408 : vector<2x16xf32>
    %410 = arith.negf %409 : vector<2x16xf32>
    %411 = math.exp %410 : vector<2x16xf32>
    %cst_79 = arith.constant 1.000000e+00 : f32
    %412 = vector.broadcast %cst_79 : f32 to vector<2x16xf32>
    %413 = arith.addf %412, %411 : vector<2x16xf32>
    %414 = arith.divf %412, %413 : vector<2x16xf32>
    %415 = vector.extract_strided_slice %398 {offsets = [0, 32], sizes = [2, 16], strides = [1, 1]} : vector<2x48xf32> to vector<2x16xf32>
    %416 = vector.extract_strided_slice %367 {offsets = [0, 32], sizes = [2, 16], strides = [1, 1]} : vector<2x48xf32> to vector<2x16xf32>
    %417 = arith.mulf %406, %416 : vector<2x16xf32>
    %418 = arith.addf %415, %417 : vector<2x16xf32>
    %419 = math.tanh %418 : vector<2x16xf32>
    %cst_80 = arith.constant 1.000000e+00 : f32
    %420 = vector.broadcast %cst_80 : f32 to vector<2x16xf32>
    %421 = arith.subf %420, %414 : vector<2x16xf32>
    %422 = arith.mulf %421, %419 : vector<2x16xf32>
    %423 = arith.mulf %414, %355 : vector<2x16xf32>
    %424 = arith.addf %422, %423 : vector<2x16xf32>
    %425 = vector.extract_strided_slice %424 {offsets = [0, 0], sizes = [1, 16], strides = [1, 1]} : vector<2x16xf32> to vector<1x16xf32>
    %c5 = arith.constant 5 : index
    %c0_81 = arith.constant 0 : index
    %426 = vector.load %arg4[%c5, %c0_81] : memref<16x16xf32, #tpu.memory_space<vmem>>, vector<1x16xf32>
    tpu.vector_store %arg4[%c5, %c0_81], %425 {strides = array<i32>} : memref<16x16xf32, #tpu.memory_space<vmem>>, vector<1x16xf32>,
    %427 = vector.extract_strided_slice %424 {offsets = [1, 0], sizes = [1, 16], strides = [1, 1]} : vector<2x16xf32> to vector<1x16xf32>
    %c13 = arith.constant 13 : index
    %c0_82 = arith.constant 0 : index
    %428 = vector.load %arg4[%c13, %c0_82] : memref<16x16xf32, #tpu.memory_space<vmem>>, vector<1x16xf32>
    tpu.vector_store %arg4[%c13, %c0_82], %427 {strides = array<i32>} : memref<16x16xf32, #tpu.memory_space<vmem>>, vector<1x16xf32>,
    %429 = arith.truncf %394 : vector<2x16xf32> to vector<2x16xbf16>
    %cst_83 = arith.constant dense<0.000000e+00> : vector<2x48xf32>
    %430 = tpu.matmul %429, %1, %cst_83 {dimension_numbers = #tpu.dot_dimension_numbers<[1], [0], [0], [1], [0, 0, 1, 1], [], []>} : vector<2x16xbf16>, vector<16x48xbf16>, vector<2x48xf32> -> vector<2x48xf32>
    %431 = vector.broadcast %5 : vector<1x48xf32> to vector<2x48xf32>
    %432 = arith.addf %430, %431 : vector<2x48xf32>
    %433 = arith.truncf %424 : vector<2x16xf32> to vector<2x16xbf16>
    %cst_84 = arith.constant dense<0.000000e+00> : vector<2x48xf32>
    %434 = tpu.matmul %433, %3, %cst_84 {dimension_numbers = #tpu.dot_dimension_numbers<[1], [0], [0], [1], [0, 0, 1, 1], [], []>} : vector<2x16xbf16>, vector<16x48xbf16>, vector<2x48xf32> -> vector<2x48xf32>
    %435 = vector.broadcast %7 : vector<1x48xf32> to vector<2x48xf32>
    %436 = arith.addf %434, %435 : vector<2x48xf32>
    %437 = vector.extract_strided_slice %12 {offsets = [12, 0], sizes = [2, 48], strides = [1, 1]} : vector<16x48xf32> to vector<2x48xf32>
    %438 = vector.extract_strided_slice %437 {offsets = [0, 0], sizes = [2, 16], strides = [1, 1]} : vector<2x48xf32> to vector<2x16xf32>
    %439 = vector.extract_strided_slice %432 {offsets = [0, 0], sizes = [2, 16], strides = [1, 1]} : vector<2x48xf32> to vector<2x16xf32>
    %440 = arith.addf %438, %439 : vector<2x16xf32>
    %441 = arith.negf %440 : vector<2x16xf32>
    %442 = math.exp %441 : vector<2x16xf32>
    %cst_85 = arith.constant 1.000000e+00 : f32
    %443 = vector.broadcast %cst_85 : f32 to vector<2x16xf32>
    %444 = arith.addf %443, %442 : vector<2x16xf32>
    %445 = arith.divf %443, %444 : vector<2x16xf32>
    %446 = vector.extract_strided_slice %437 {offsets = [0, 16], sizes = [2, 16], strides = [1, 1]} : vector<2x48xf32> to vector<2x16xf32>
    %447 = vector.extract_strided_slice %432 {offsets = [0, 16], sizes = [2, 16], strides = [1, 1]} : vector<2x48xf32> to vector<2x16xf32>
    %448 = arith.addf %446, %447 : vector<2x16xf32>
    %449 = arith.negf %448 : vector<2x16xf32>
    %450 = math.exp %449 : vector<2x16xf32>
    %cst_86 = arith.constant 1.000000e+00 : f32
    %451 = vector.broadcast %cst_86 : f32 to vector<2x16xf32>
    %452 = arith.addf %451, %450 : vector<2x16xf32>
    %453 = arith.divf %451, %452 : vector<2x16xf32>
    %454 = vector.extract_strided_slice %437 {offsets = [0, 32], sizes = [2, 16], strides = [1, 1]} : vector<2x48xf32> to vector<2x16xf32>
    %455 = vector.extract_strided_slice %432 {offsets = [0, 32], sizes = [2, 16], strides = [1, 1]} : vector<2x48xf32> to vector<2x16xf32>
    %456 = arith.mulf %445, %455 : vector<2x16xf32>
    %457 = arith.addf %454, %456 : vector<2x16xf32>
    %458 = math.tanh %457 : vector<2x16xf32>
    %cst_87 = arith.constant 1.000000e+00 : f32
    %459 = vector.broadcast %cst_87 : f32 to vector<2x16xf32>
    %460 = arith.subf %459, %453 : vector<2x16xf32>
    %461 = arith.mulf %460, %458 : vector<2x16xf32>
    %462 = arith.mulf %453, %394 : vector<2x16xf32>
    %463 = arith.addf %461, %462 : vector<2x16xf32>
    %464 = arith.truncf %463 : vector<2x16xf32> to vector<2x16xbf16>
    %cst_88 = arith.constant dense<0.000000e+00> : vector<2x48xf32>
    %465 = tpu.matmul %464, %2, %cst_88 {dimension_numbers = #tpu.dot_dimension_numbers<[1], [0], [0], [1], [0, 0, 1, 1], [], []>} : vector<2x16xbf16>, vector<16x48xbf16>, vector<2x48xf32> -> vector<2x48xf32>
    %466 = vector.broadcast %6 : vector<1x48xf32> to vector<2x48xf32>
    %467 = arith.addf %465, %466 : vector<2x48xf32>
    %468 = vector.extract_strided_slice %467 {offsets = [0, 0], sizes = [2, 16], strides = [1, 1]} : vector<2x48xf32> to vector<2x16xf32>
    %469 = vector.extract_strided_slice %436 {offsets = [0, 0], sizes = [2, 16], strides = [1, 1]} : vector<2x48xf32> to vector<2x16xf32>
    %470 = arith.addf %468, %469 : vector<2x16xf32>
    %471 = arith.negf %470 : vector<2x16xf32>
    %472 = math.exp %471 : vector<2x16xf32>
    %cst_89 = arith.constant 1.000000e+00 : f32
    %473 = vector.broadcast %cst_89 : f32 to vector<2x16xf32>
    %474 = arith.addf %473, %472 : vector<2x16xf32>
    %475 = arith.divf %473, %474 : vector<2x16xf32>
    %476 = vector.extract_strided_slice %467 {offsets = [0, 16], sizes = [2, 16], strides = [1, 1]} : vector<2x48xf32> to vector<2x16xf32>
    %477 = vector.extract_strided_slice %436 {offsets = [0, 16], sizes = [2, 16], strides = [1, 1]} : vector<2x48xf32> to vector<2x16xf32>
    %478 = arith.addf %476, %477 : vector<2x16xf32>
    %479 = arith.negf %478 : vector<2x16xf32>
    %480 = math.exp %479 : vector<2x16xf32>
    %cst_90 = arith.constant 1.000000e+00 : f32
    %481 = vector.broadcast %cst_90 : f32 to vector<2x16xf32>
    %482 = arith.addf %481, %480 : vector<2x16xf32>
    %483 = arith.divf %481, %482 : vector<2x16xf32>
    %484 = vector.extract_strided_slice %467 {offsets = [0, 32], sizes = [2, 16], strides = [1, 1]} : vector<2x48xf32> to vector<2x16xf32>
    %485 = vector.extract_strided_slice %436 {offsets = [0, 32], sizes = [2, 16], strides = [1, 1]} : vector<2x48xf32> to vector<2x16xf32>
    %486 = arith.mulf %475, %485 : vector<2x16xf32>
    %487 = arith.addf %484, %486 : vector<2x16xf32>
    %488 = math.tanh %487 : vector<2x16xf32>
    %cst_91 = arith.constant 1.000000e+00 : f32
    %489 = vector.broadcast %cst_91 : f32 to vector<2x16xf32>
    %490 = arith.subf %489, %483 : vector<2x16xf32>
    %491 = arith.mulf %490, %488 : vector<2x16xf32>
    %492 = arith.mulf %483, %424 : vector<2x16xf32>
    %493 = arith.addf %491, %492 : vector<2x16xf32>
    %494 = vector.extract_strided_slice %493 {offsets = [0, 0], sizes = [1, 16], strides = [1, 1]} : vector<2x16xf32> to vector<1x16xf32>
    %c6 = arith.constant 6 : index
    %c0_92 = arith.constant 0 : index
    %495 = vector.load %arg4[%c6, %c0_92] : memref<16x16xf32, #tpu.memory_space<vmem>>, vector<1x16xf32>
    tpu.vector_store %arg4[%c6, %c0_92], %494 {strides = array<i32>} : memref<16x16xf32, #tpu.memory_space<vmem>>, vector<1x16xf32>,
    %496 = vector.extract_strided_slice %493 {offsets = [1, 0], sizes = [1, 16], strides = [1, 1]} : vector<2x16xf32> to vector<1x16xf32>
    %c14 = arith.constant 14 : index
    %c0_93 = arith.constant 0 : index
    %497 = vector.load %arg4[%c14, %c0_93] : memref<16x16xf32, #tpu.memory_space<vmem>>, vector<1x16xf32>
    tpu.vector_store %arg4[%c14, %c0_93], %496 {strides = array<i32>} : memref<16x16xf32, #tpu.memory_space<vmem>>, vector<1x16xf32>,
    %498 = arith.truncf %463 : vector<2x16xf32> to vector<2x16xbf16>
    %cst_94 = arith.constant dense<0.000000e+00> : vector<2x48xf32>
    %499 = tpu.matmul %498, %1, %cst_94 {dimension_numbers = #tpu.dot_dimension_numbers<[1], [0], [0], [1], [0, 0, 1, 1], [], []>} : vector<2x16xbf16>, vector<16x48xbf16>, vector<2x48xf32> -> vector<2x48xf32>
    %500 = vector.broadcast %5 : vector<1x48xf32> to vector<2x48xf32>
    %501 = arith.addf %499, %500 : vector<2x48xf32>
    %502 = arith.truncf %493 : vector<2x16xf32> to vector<2x16xbf16>
    %cst_95 = arith.constant dense<0.000000e+00> : vector<2x48xf32>
    %503 = tpu.matmul %502, %3, %cst_95 {dimension_numbers = #tpu.dot_dimension_numbers<[1], [0], [0], [1], [0, 0, 1, 1], [], []>} : vector<2x16xbf16>, vector<16x48xbf16>, vector<2x48xf32> -> vector<2x48xf32>
    %504 = vector.broadcast %7 : vector<1x48xf32> to vector<2x48xf32>
    %505 = arith.addf %503, %504 : vector<2x48xf32>
    %506 = vector.extract_strided_slice %12 {offsets = [14, 0], sizes = [2, 48], strides = [1, 1]} : vector<16x48xf32> to vector<2x48xf32>
    %507 = vector.extract_strided_slice %506 {offsets = [0, 0], sizes = [2, 16], strides = [1, 1]} : vector<2x48xf32> to vector<2x16xf32>
    %508 = vector.extract_strided_slice %501 {offsets = [0, 0], sizes = [2, 16], strides = [1, 1]} : vector<2x48xf32> to vector<2x16xf32>
    %509 = arith.addf %507, %508 : vector<2x16xf32>
    %510 = arith.negf %509 : vector<2x16xf32>
    %511 = math.exp %510 : vector<2x16xf32>
    %cst_96 = arith.constant 1.000000e+00 : f32
    %512 = vector.broadcast %cst_96 : f32 to vector<2x16xf32>
    %513 = arith.addf %512, %511 : vector<2x16xf32>
    %514 = arith.divf %512, %513 : vector<2x16xf32>
    %515 = vector.extract_strided_slice %506 {offsets = [0, 16], sizes = [2, 16], strides = [1, 1]} : vector<2x48xf32> to vector<2x16xf32>
    %516 = vector.extract_strided_slice %501 {offsets = [0, 16], sizes = [2, 16], strides = [1, 1]} : vector<2x48xf32> to vector<2x16xf32>
    %517 = arith.addf %515, %516 : vector<2x16xf32>
    %518 = arith.negf %517 : vector<2x16xf32>
    %519 = math.exp %518 : vector<2x16xf32>
    %cst_97 = arith.constant 1.000000e+00 : f32
    %520 = vector.broadcast %cst_97 : f32 to vector<2x16xf32>
    %521 = arith.addf %520, %519 : vector<2x16xf32>
    %522 = arith.divf %520, %521 : vector<2x16xf32>
    %523 = vector.extract_strided_slice %506 {offsets = [0, 32], sizes = [2, 16], strides = [1, 1]} : vector<2x48xf32> to vector<2x16xf32>
    %524 = vector.extract_strided_slice %501 {offsets = [0, 32], sizes = [2, 16], strides = [1, 1]} : vector<2x48xf32> to vector<2x16xf32>
    %525 = arith.mulf %514, %524 : vector<2x16xf32>
    %526 = arith.addf %523, %525 : vector<2x16xf32>
    %527 = math.tanh %526 : vector<2x16xf32>
    %cst_98 = arith.constant 1.000000e+00 : f32
    %528 = vector.broadcast %cst_98 : f32 to vector<2x16xf32>
    %529 = arith.subf %528, %522 : vector<2x16xf32>
    %530 = arith.mulf %529, %527 : vector<2x16xf32>
    %531 = arith.mulf %522, %463 : vector<2x16xf32>
    %532 = arith.addf %530, %531 : vector<2x16xf32>
    %533 = arith.truncf %532 : vector<2x16xf32> to vector<2x16xbf16>
    %cst_99 = arith.constant dense<0.000000e+00> : vector<2x48xf32>
    %534 = tpu.matmul %533, %2, %cst_99 {dimension_numbers = #tpu.dot_dimension_numbers<[1], [0], [0], [1], [0, 0, 1, 1], [], []>} : vector<2x16xbf16>, vector<16x48xbf16>, vector<2x48xf32> -> vector<2x48xf32>
    %535 = vector.broadcast %6 : vector<1x48xf32> to vector<2x48xf32>
    %536 = arith.addf %534, %535 : vector<2x48xf32>
    %537 = vector.extract_strided_slice %536 {offsets = [0, 0], sizes = [2, 16], strides = [1, 1]} : vector<2x48xf32> to vector<2x16xf32>
    %538 = vector.extract_strided_slice %505 {offsets = [0, 0], sizes = [2, 16], strides = [1, 1]} : vector<2x48xf32> to vector<2x16xf32>
    %539 = arith.addf %537, %538 : vector<2x16xf32>
    %540 = arith.negf %539 : vector<2x16xf32>
    %541 = math.exp %540 : vector<2x16xf32>
    %cst_100 = arith.constant 1.000000e+00 : f32
    %542 = vector.broadcast %cst_100 : f32 to vector<2x16xf32>
    %543 = arith.addf %542, %541 : vector<2x16xf32>
    %544 = arith.divf %542, %543 : vector<2x16xf32>
    %545 = vector.extract_strided_slice %536 {offsets = [0, 16], sizes = [2, 16], strides = [1, 1]} : vector<2x48xf32> to vector<2x16xf32>
    %546 = vector.extract_strided_slice %505 {offsets = [0, 16], sizes = [2, 16], strides = [1, 1]} : vector<2x48xf32> to vector<2x16xf32>
    %547 = arith.addf %545, %546 : vector<2x16xf32>
    %548 = arith.negf %547 : vector<2x16xf32>
    %549 = math.exp %548 : vector<2x16xf32>
    %cst_101 = arith.constant 1.000000e+00 : f32
    %550 = vector.broadcast %cst_101 : f32 to vector<2x16xf32>
    %551 = arith.addf %550, %549 : vector<2x16xf32>
    %552 = arith.divf %550, %551 : vector<2x16xf32>
    %553 = vector.extract_strided_slice %536 {offsets = [0, 32], sizes = [2, 16], strides = [1, 1]} : vector<2x48xf32> to vector<2x16xf32>
    %554 = vector.extract_strided_slice %505 {offsets = [0, 32], sizes = [2, 16], strides = [1, 1]} : vector<2x48xf32> to vector<2x16xf32>
    %555 = arith.mulf %544, %554 : vector<2x16xf32>
    %556 = arith.addf %553, %555 : vector<2x16xf32>
    %557 = math.tanh %556 : vector<2x16xf32>
    %cst_102 = arith.constant 1.000000e+00 : f32
    %558 = vector.broadcast %cst_102 : f32 to vector<2x16xf32>
    %559 = arith.subf %558, %552 : vector<2x16xf32>
    %560 = arith.mulf %559, %557 : vector<2x16xf32>
    %561 = arith.mulf %552, %493 : vector<2x16xf32>
    %562 = arith.addf %560, %561 : vector<2x16xf32>
    %563 = vector.extract_strided_slice %562 {offsets = [0, 0], sizes = [1, 16], strides = [1, 1]} : vector<2x16xf32> to vector<1x16xf32>
    %c7 = arith.constant 7 : index
    %c0_103 = arith.constant 0 : index
    %564 = vector.load %arg4[%c7, %c0_103] : memref<16x16xf32, #tpu.memory_space<vmem>>, vector<1x16xf32>
    tpu.vector_store %arg4[%c7, %c0_103], %563 {strides = array<i32>} : memref<16x16xf32, #tpu.memory_space<vmem>>, vector<1x16xf32>,
    %565 = vector.extract_strided_slice %562 {offsets = [1, 0], sizes = [1, 16], strides = [1, 1]} : vector<2x16xf32> to vector<1x16xf32>
    %c15 = arith.constant 15 : index
    %c0_104 = arith.constant 0 : index
    %566 = vector.load %arg4[%c15, %c0_104] : memref<16x16xf32, #tpu.memory_space<vmem>>, vector<1x16xf32>
    tpu.vector_store %arg4[%c15, %c0_104], %565 {strides = array<i32>} : memref<16x16xf32, #tpu.memory_space<vmem>>, vector<1x16xf32>,
    %c0_105 = arith.constant 0 : index
    %c0_106 = arith.constant 0 : index
    %567 = vector.load %arg4[%c0_105, %c0_106] : memref<16x16xf32, #tpu.memory_space<vmem>>, vector<16x16xf32>
    %c12_107 = arith.constant 12 : index
    %c0_108 = arith.constant 0 : index
    %568 = vector.load %arg2[%c12_107, %c0_108] : memref<28x48xf32, #tpu.memory_space<vmem>>, vector<16x16xf32>
    %569 = arith.addf %567, %568 : vector<16x16xf32>
    %c80 = arith.constant 80 : index
    %c0_109 = arith.constant 0 : index
    %570 = vector.load %arg1[%c80, %c0_109] : memref<160x48xbf16, #tpu.memory_space<vmem>>, vector<16x48xbf16>
    %c4_110 = arith.constant 4 : index
    %c0_111 = arith.constant 0 : index
    %571 = vector.load %arg2[%c4_110, %c0_111] : memref<28x48xf32, #tpu.memory_space<vmem>>, vector<1x48xf32>
    %572 = arith.truncf %569 : vector<16x16xf32> to vector<16x16xbf16>
    %cst_112 = arith.constant dense<0.000000e+00> : vector<16x48xf32>
    %573 = tpu.matmul %572, %570, %cst_112 {dimension_numbers = #tpu.dot_dimension_numbers<[1], [0], [0], [1], [0, 0, 1, 1], [], []>} : vector<16x16xbf16>, vector<16x48xbf16>, vector<16x48xf32> -> vector<16x48xf32>
    %574 = vector.broadcast %571 : vector<1x48xf32> to vector<16x48xf32>
    %575 = arith.addf %573, %574 : vector<16x48xf32>
    %576 = vector.extract_strided_slice %575 {offsets = [0, 0], sizes = [16, 16], strides = [1, 1]} : vector<16x48xf32> to vector<16x16xf32>
    %577 = vector.shape_cast %576 : vector<16x16xf32> to vector<2x8x16xf32>
    %578 = arith.truncf %577 : vector<2x8x16xf32> to vector<2x8x16xbf16>
    %579 = vector.extract_strided_slice %575 {offsets = [0, 16], sizes = [16, 16], strides = [1, 1]} : vector<16x48xf32> to vector<16x16xf32>
    %580 = vector.shape_cast %579 : vector<16x16xf32> to vector<2x8x16xf32>
    %581 = arith.truncf %580 : vector<2x8x16xf32> to vector<2x8x16xbf16>
    %582 = vector.extract_strided_slice %575 {offsets = [0, 32], sizes = [16, 16], strides = [1, 1]} : vector<16x48xf32> to vector<16x16xf32>
    %583 = vector.shape_cast %582 : vector<16x16xf32> to vector<2x8x16xf32>
    %584 = arith.truncf %583 : vector<2x8x16xf32> to vector<2x8x16xbf16>
    %585 = tpu.iota {dimensions = array<i32: 0>} : vector<8x8xi32>
    %586 = tpu.iota {dimensions = array<i32: 1>} : vector<8x8xi32>
    %587 = arith.cmpi sle, %586, %585 : vector<8x8xi32>
    %cst_113 = arith.constant 0.000000e+00 : f32
    %cst_114 = arith.constant -1.000000e+30 : f32
    %588 = vector.broadcast %cst_113 : f32 to vector<8x8xf32>
    %589 = vector.broadcast %cst_114 : f32 to vector<8x8xf32>
    %590 = arith.select %587, %588, %589 : vector<8x8xi1>, vector<8x8xf32>
    %591 = vector.shape_cast %590 : vector<8x8xf32> to vector<1x8x8xf32>
    %592 = vector.extract_strided_slice %578 {offsets = [0, 0, 0], sizes = [2, 8, 4], strides = [1, 1, 1]} : vector<2x8x16xbf16> to vector<2x8x4xbf16>
    %593 = vector.extract_strided_slice %581 {offsets = [0, 0, 0], sizes = [2, 8, 4], strides = [1, 1, 1]} : vector<2x8x16xbf16> to vector<2x8x4xbf16>
    "tpu.trace_start"() <{level = 10 : i32, message = "bqd,bkd->bqk"}> : () -> ()
    %cst_115 = arith.constant dense<0.000000e+00> : vector<2x8x8xf32>
    %594 = tpu.matmul %592, %593, %cst_115 {dimension_numbers = #tpu.dot_dimension_numbers<[2], [2], [1], [1], [0, 0, 0, 1, 1, 1], [0], [0]>} : vector<2x8x4xbf16>, vector<2x8x4xbf16>, vector<2x8x8xf32> -> vector<2x8x8xf32>
    "tpu.trace_stop"() : () -> ()
    %cst_116 = arith.constant 5.000000e-01 : f32
    %595 = vector.broadcast %cst_116 : f32 to vector<2x8x8xf32>
    %596 = arith.mulf %594, %595 : vector<2x8x8xf32>
    %597 = vector.broadcast %591 : vector<1x8x8xf32> to vector<2x8x8xf32>
    %598 = arith.addf %596, %597 : vector<2x8x8xf32>
    %cst_117 = arith.constant dense<0xFF800000> : vector<2x8xf32>
    %599 = vector.multi_reduction <maximumf>, %598, %cst_117 [2] : vector<2x8x8xf32> to vector<2x8xf32>
    %600 = vector.shape_cast %599 : vector<2x8xf32> to vector<2x8x1xf32>
    %601 = vector.broadcast %600 : vector<2x8x1xf32> to vector<2x8x8xf32>
    %602 = arith.subf %598, %601 : vector<2x8x8xf32>
    %603 = math.exp %602 : vector<2x8x8xf32>
    %cst_118 = arith.constant dense<0.000000e+00> : vector<2x8xf32>
    %604 = vector.multi_reduction <add>, %603, %cst_118 [2] : vector<2x8x8xf32> to vector<2x8xf32>
    %605 = vector.shape_cast %604 : vector<2x8xf32> to vector<2x8x1xf32>
    %606 = vector.broadcast %605 : vector<2x8x1xf32> to vector<2x8x8xf32>
    %607 = arith.divf %603, %606 : vector<2x8x8xf32>
    %608 = arith.truncf %607 : vector<2x8x8xf32> to vector<2x8x8xbf16>
    %609 = vector.extract_strided_slice %584 {offsets = [0, 0, 0], sizes = [2, 8, 4], strides = [1, 1, 1]} : vector<2x8x16xbf16> to vector<2x8x4xbf16>
    "tpu.trace_start"() <{level = 10 : i32, message = "bqk,bkd->bqd"}> : () -> ()
    %cst_119 = arith.constant dense<0.000000e+00> : vector<2x8x4xf32>
    %610 = tpu.matmul %608, %609, %cst_119 {dimension_numbers = #tpu.dot_dimension_numbers<[2], [1], [1], [2], [0, 0, 0, 1, 1, 2], [0], [0]>} : vector<2x8x8xbf16>, vector<2x8x4xbf16>, vector<2x8x4xf32> -> vector<2x8x4xf32>
    "tpu.trace_stop"() : () -> ()
    %611 = vector.extract_strided_slice %578 {offsets = [0, 0, 4], sizes = [2, 8, 4], strides = [1, 1, 1]} : vector<2x8x16xbf16> to vector<2x8x4xbf16>
    %612 = vector.extract_strided_slice %581 {offsets = [0, 0, 4], sizes = [2, 8, 4], strides = [1, 1, 1]} : vector<2x8x16xbf16> to vector<2x8x4xbf16>
    "tpu.trace_start"() <{level = 10 : i32, message = "bqd,bkd->bqk"}> : () -> ()
    %cst_120 = arith.constant dense<0.000000e+00> : vector<2x8x8xf32>
    %613 = tpu.matmul %611, %612, %cst_120 {dimension_numbers = #tpu.dot_dimension_numbers<[2], [2], [1], [1], [0, 0, 0, 1, 1, 1], [0], [0]>} : vector<2x8x4xbf16>, vector<2x8x4xbf16>, vector<2x8x8xf32> -> vector<2x8x8xf32>
    "tpu.trace_stop"() : () -> ()
    %cst_121 = arith.constant 5.000000e-01 : f32
    %614 = vector.broadcast %cst_121 : f32 to vector<2x8x8xf32>
    %615 = arith.mulf %613, %614 : vector<2x8x8xf32>
    %616 = vector.broadcast %591 : vector<1x8x8xf32> to vector<2x8x8xf32>
    %617 = arith.addf %615, %616 : vector<2x8x8xf32>
    %cst_122 = arith.constant dense<0xFF800000> : vector<2x8xf32>
    %618 = vector.multi_reduction <maximumf>, %617, %cst_122 [2] : vector<2x8x8xf32> to vector<2x8xf32>
    %619 = vector.shape_cast %618 : vector<2x8xf32> to vector<2x8x1xf32>
    %620 = vector.broadcast %619 : vector<2x8x1xf32> to vector<2x8x8xf32>
    %621 = arith.subf %617, %620 : vector<2x8x8xf32>
    %622 = math.exp %621 : vector<2x8x8xf32>
    %cst_123 = arith.constant dense<0.000000e+00> : vector<2x8xf32>
    %623 = vector.multi_reduction <add>, %622, %cst_123 [2] : vector<2x8x8xf32> to vector<2x8xf32>
    %624 = vector.shape_cast %623 : vector<2x8xf32> to vector<2x8x1xf32>
    %625 = vector.broadcast %624 : vector<2x8x1xf32> to vector<2x8x8xf32>
    %626 = arith.divf %622, %625 : vector<2x8x8xf32>
    %627 = arith.truncf %626 : vector<2x8x8xf32> to vector<2x8x8xbf16>
    %628 = vector.extract_strided_slice %584 {offsets = [0, 0, 4], sizes = [2, 8, 4], strides = [1, 1, 1]} : vector<2x8x16xbf16> to vector<2x8x4xbf16>
    "tpu.trace_start"() <{level = 10 : i32, message = "bqk,bkd->bqd"}> : () -> ()
    %cst_124 = arith.constant dense<0.000000e+00> : vector<2x8x4xf32>
    %629 = tpu.matmul %627, %628, %cst_124 {dimension_numbers = #tpu.dot_dimension_numbers<[2], [1], [1], [2], [0, 0, 0, 1, 1, 2], [0], [0]>} : vector<2x8x8xbf16>, vector<2x8x4xbf16>, vector<2x8x4xf32> -> vector<2x8x4xf32>
    "tpu.trace_stop"() : () -> ()
    %630 = vector.extract_strided_slice %578 {offsets = [0, 0, 8], sizes = [2, 8, 4], strides = [1, 1, 1]} : vector<2x8x16xbf16> to vector<2x8x4xbf16>
    %631 = vector.extract_strided_slice %581 {offsets = [0, 0, 8], sizes = [2, 8, 4], strides = [1, 1, 1]} : vector<2x8x16xbf16> to vector<2x8x4xbf16>
    "tpu.trace_start"() <{level = 10 : i32, message = "bqd,bkd->bqk"}> : () -> ()
    %cst_125 = arith.constant dense<0.000000e+00> : vector<2x8x8xf32>
    %632 = tpu.matmul %630, %631, %cst_125 {dimension_numbers = #tpu.dot_dimension_numbers<[2], [2], [1], [1], [0, 0, 0, 1, 1, 1], [0], [0]>} : vector<2x8x4xbf16>, vector<2x8x4xbf16>, vector<2x8x8xf32> -> vector<2x8x8xf32>
    "tpu.trace_stop"() : () -> ()
    %cst_126 = arith.constant 5.000000e-01 : f32
    %633 = vector.broadcast %cst_126 : f32 to vector<2x8x8xf32>
    %634 = arith.mulf %632, %633 : vector<2x8x8xf32>
    %635 = vector.broadcast %591 : vector<1x8x8xf32> to vector<2x8x8xf32>
    %636 = arith.addf %634, %635 : vector<2x8x8xf32>
    %cst_127 = arith.constant dense<0xFF800000> : vector<2x8xf32>
    %637 = vector.multi_reduction <maximumf>, %636, %cst_127 [2] : vector<2x8x8xf32> to vector<2x8xf32>
    %638 = vector.shape_cast %637 : vector<2x8xf32> to vector<2x8x1xf32>
    %639 = vector.broadcast %638 : vector<2x8x1xf32> to vector<2x8x8xf32>
    %640 = arith.subf %636, %639 : vector<2x8x8xf32>
    %641 = math.exp %640 : vector<2x8x8xf32>
    %cst_128 = arith.constant dense<0.000000e+00> : vector<2x8xf32>
    %642 = vector.multi_reduction <add>, %641, %cst_128 [2] : vector<2x8x8xf32> to vector<2x8xf32>
    %643 = vector.shape_cast %642 : vector<2x8xf32> to vector<2x8x1xf32>
    %644 = vector.broadcast %643 : vector<2x8x1xf32> to vector<2x8x8xf32>
    %645 = arith.divf %641, %644 : vector<2x8x8xf32>
    %646 = arith.truncf %645 : vector<2x8x8xf32> to vector<2x8x8xbf16>
    %647 = vector.extract_strided_slice %584 {offsets = [0, 0, 8], sizes = [2, 8, 4], strides = [1, 1, 1]} : vector<2x8x16xbf16> to vector<2x8x4xbf16>
    "tpu.trace_start"() <{level = 10 : i32, message = "bqk,bkd->bqd"}> : () -> ()
    %cst_129 = arith.constant dense<0.000000e+00> : vector<2x8x4xf32>
    %648 = tpu.matmul %646, %647, %cst_129 {dimension_numbers = #tpu.dot_dimension_numbers<[2], [1], [1], [2], [0, 0, 0, 1, 1, 2], [0], [0]>} : vector<2x8x8xbf16>, vector<2x8x4xbf16>, vector<2x8x4xf32> -> vector<2x8x4xf32>
    "tpu.trace_stop"() : () -> ()
    %649 = vector.extract_strided_slice %578 {offsets = [0, 0, 12], sizes = [2, 8, 4], strides = [1, 1, 1]} : vector<2x8x16xbf16> to vector<2x8x4xbf16>
    %650 = vector.extract_strided_slice %581 {offsets = [0, 0, 12], sizes = [2, 8, 4], strides = [1, 1, 1]} : vector<2x8x16xbf16> to vector<2x8x4xbf16>
    "tpu.trace_start"() <{level = 10 : i32, message = "bqd,bkd->bqk"}> : () -> ()
    %cst_130 = arith.constant dense<0.000000e+00> : vector<2x8x8xf32>
    %651 = tpu.matmul %649, %650, %cst_130 {dimension_numbers = #tpu.dot_dimension_numbers<[2], [2], [1], [1], [0, 0, 0, 1, 1, 1], [0], [0]>} : vector<2x8x4xbf16>, vector<2x8x4xbf16>, vector<2x8x8xf32> -> vector<2x8x8xf32>
    "tpu.trace_stop"() : () -> ()
    %cst_131 = arith.constant 5.000000e-01 : f32
    %652 = vector.broadcast %cst_131 : f32 to vector<2x8x8xf32>
    %653 = arith.mulf %651, %652 : vector<2x8x8xf32>
    %654 = vector.broadcast %591 : vector<1x8x8xf32> to vector<2x8x8xf32>
    %655 = arith.addf %653, %654 : vector<2x8x8xf32>
    %cst_132 = arith.constant dense<0xFF800000> : vector<2x8xf32>
    %656 = vector.multi_reduction <maximumf>, %655, %cst_132 [2] : vector<2x8x8xf32> to vector<2x8xf32>
    %657 = vector.shape_cast %656 : vector<2x8xf32> to vector<2x8x1xf32>
    %658 = vector.broadcast %657 : vector<2x8x1xf32> to vector<2x8x8xf32>
    %659 = arith.subf %655, %658 : vector<2x8x8xf32>
    %660 = math.exp %659 : vector<2x8x8xf32>
    %cst_133 = arith.constant dense<0.000000e+00> : vector<2x8xf32>
    %661 = vector.multi_reduction <add>, %660, %cst_133 [2] : vector<2x8x8xf32> to vector<2x8xf32>
    %662 = vector.shape_cast %661 : vector<2x8xf32> to vector<2x8x1xf32>
    %663 = vector.broadcast %662 : vector<2x8x1xf32> to vector<2x8x8xf32>
    %664 = arith.divf %660, %663 : vector<2x8x8xf32>
    %665 = arith.truncf %664 : vector<2x8x8xf32> to vector<2x8x8xbf16>
    %666 = vector.extract_strided_slice %584 {offsets = [0, 0, 12], sizes = [2, 8, 4], strides = [1, 1, 1]} : vector<2x8x16xbf16> to vector<2x8x4xbf16>
    "tpu.trace_start"() <{level = 10 : i32, message = "bqk,bkd->bqd"}> : () -> ()
    %cst_134 = arith.constant dense<0.000000e+00> : vector<2x8x4xf32>
    %667 = tpu.matmul %665, %666, %cst_134 {dimension_numbers = #tpu.dot_dimension_numbers<[2], [1], [1], [2], [0, 0, 0, 1, 1, 2], [0], [0]>} : vector<2x8x8xbf16>, vector<2x8x4xbf16>, vector<2x8x4xf32> -> vector<2x8x4xf32>
    "tpu.trace_stop"() : () -> ()
    %668 = tpu.concatenate %610, %629, %648, %667 in 2 : vector<2x8x4xf32>, vector<2x8x4xf32>, vector<2x8x4xf32>, vector<2x8x4xf32> -> vector<2x8x16xf32>
    %669 = vector.shape_cast %668 : vector<2x8x16xf32> to vector<16x16xf32>
    %c96 = arith.constant 96 : index
    %c0_135 = arith.constant 0 : index
    %670 = vector.load %arg1[%c96, %c0_135] : memref<160x48xbf16, #tpu.memory_space<vmem>>, vector<16x16xbf16>
    %c5_136 = arith.constant 5 : index
    %c0_137 = arith.constant 0 : index
    %671 = vector.load %arg2[%c5_136, %c0_137] : memref<28x48xf32, #tpu.memory_space<vmem>>, vector<1x16xf32>
    %672 = arith.truncf %669 : vector<16x16xf32> to vector<16x16xbf16>
    %cst_138 = arith.constant dense<0.000000e+00> : vector<16x16xf32>
    %673 = tpu.matmul %672, %670, %cst_138 {dimension_numbers = #tpu.dot_dimension_numbers<[1], [0], [0], [1], [0, 0, 1, 1], [], []>} : vector<16x16xbf16>, vector<16x16xbf16>, vector<16x16xf32> -> vector<16x16xf32>
    %674 = vector.broadcast %671 : vector<1x16xf32> to vector<16x16xf32>
    %675 = arith.addf %673, %674 : vector<16x16xf32>
    %676 = arith.addf %569, %675 : vector<16x16xf32>
    %c6_139 = arith.constant 6 : index
    %c0_140 = arith.constant 0 : index
    %677 = vector.load %arg2[%c6_139, %c0_140] : memref<28x48xf32, #tpu.memory_space<vmem>>, vector<1x16xf32>
    %c7_141 = arith.constant 7 : index
    %c0_142 = arith.constant 0 : index
    %678 = vector.load %arg2[%c7_141, %c0_142] : memref<28x48xf32, #tpu.memory_space<vmem>>, vector<1x16xf32>
    %cst_143 = arith.constant dense<0.000000e+00> : vector<16xf32>
    %679 = vector.multi_reduction <add>, %676, %cst_143 [1] : vector<16x16xf32> to vector<16xf32>
    %680 = vector.shape_cast %679 : vector<16xf32> to vector<16x1xf32>
    %cst_144 = arith.constant 1.600000e+01 : f32
    %681 = vector.broadcast %cst_144 : f32 to vector<16x1xf32>
    %682 = arith.divf %680, %681 : vector<16x1xf32>
    %683 = vector.broadcast %682 : vector<16x1xf32> to vector<16x16xf32>
    %684 = arith.subf %676, %683 : vector<16x16xf32>
    %685 = arith.mulf %684, %684 : vector<16x16xf32>
    %cst_145 = arith.constant dense<0.000000e+00> : vector<16xf32>
    %686 = vector.multi_reduction <add>, %685, %cst_145 [1] : vector<16x16xf32> to vector<16xf32>
    %687 = vector.shape_cast %686 : vector<16xf32> to vector<16x1xf32>
    %cst_146 = arith.constant 1.600000e+01 : f32
    %688 = vector.broadcast %cst_146 : f32 to vector<16x1xf32>
    %689 = arith.divf %687, %688 : vector<16x1xf32>
    %690 = vector.broadcast %682 : vector<16x1xf32> to vector<16x16xf32>
    %691 = arith.subf %676, %690 : vector<16x16xf32>
    %cst_147 = arith.constant 9.99999974E-6 : f32
    %692 = vector.broadcast %cst_147 : f32 to vector<16x1xf32>
    %693 = arith.addf %689, %692 : vector<16x1xf32>
    %694 = math.rsqrt %693 : vector<16x1xf32>
    %695 = vector.broadcast %694 : vector<16x1xf32> to vector<16x16xf32>
    %696 = arith.mulf %691, %695 : vector<16x16xf32>
    %697 = vector.broadcast %677 : vector<1x16xf32> to vector<16x16xf32>
    %698 = arith.mulf %696, %697 : vector<16x16xf32>
    %699 = vector.broadcast %678 : vector<1x16xf32> to vector<16x16xf32>
    %700 = arith.addf %698, %699 : vector<16x16xf32>
    %c112 = arith.constant 112 : index
    %c0_148 = arith.constant 0 : index
    %701 = vector.load %arg1[%c112, %c0_148] : memref<160x48xbf16, #tpu.memory_space<vmem>>, vector<16x32xbf16>
    %c8_149 = arith.constant 8 : index
    %c0_150 = arith.constant 0 : index
    %702 = vector.load %arg2[%c8_149, %c0_150] : memref<28x48xf32, #tpu.memory_space<vmem>>, vector<1x32xf32>
    %703 = arith.truncf %700 : vector<16x16xf32> to vector<16x16xbf16>
    %cst_151 = arith.constant dense<0.000000e+00> : vector<16x32xf32>
    %704 = tpu.matmul %703, %701, %cst_151 {dimension_numbers = #tpu.dot_dimension_numbers<[1], [0], [0], [1], [0, 0, 1, 1], [], []>} : vector<16x16xbf16>, vector<16x32xbf16>, vector<16x32xf32> -> vector<16x32xf32>
    %705 = vector.broadcast %702 : vector<1x32xf32> to vector<16x32xf32>
    %706 = arith.addf %704, %705 : vector<16x32xf32>
    %cst_152 = arith.constant 5.000000e-01 : f32
    %707 = vector.broadcast %cst_152 : f32 to vector<16x32xf32>
    %708 = arith.mulf %707, %706 : vector<16x32xf32>
    %cst_153 = arith.constant 4.471500e-02 : f32
    %709 = vector.broadcast %cst_153 : f32 to vector<16x32xf32>
    %710 = arith.mulf %709, %706 : vector<16x32xf32>
    %711 = arith.mulf %710, %706 : vector<16x32xf32>
    %712 = arith.mulf %711, %706 : vector<16x32xf32>
    %713 = arith.addf %706, %712 : vector<16x32xf32>
    %cst_154 = arith.constant 0.797884583 : f32
    %714 = vector.broadcast %cst_154 : f32 to vector<16x32xf32>
    %715 = arith.mulf %714, %713 : vector<16x32xf32>
    %716 = math.tanh %715 : vector<16x32xf32>
    %cst_155 = arith.constant 1.000000e+00 : f32
    %717 = vector.broadcast %cst_155 : f32 to vector<16x32xf32>
    %718 = arith.addf %717, %716 : vector<16x32xf32>
    %719 = arith.mulf %708, %718 : vector<16x32xf32>
    %c128 = arith.constant 128 : index
    %c0_156 = arith.constant 0 : index
    %720 = vector.load %arg1[%c128, %c0_156] : memref<160x48xbf16, #tpu.memory_space<vmem>>, vector<32x16xbf16>
    %c9_157 = arith.constant 9 : index
    %c0_158 = arith.constant 0 : index
    %721 = vector.load %arg2[%c9_157, %c0_158] : memref<28x48xf32, #tpu.memory_space<vmem>>, vector<1x16xf32>
    %722 = arith.truncf %719 : vector<16x32xf32> to vector<16x32xbf16>
    %cst_159 = arith.constant dense<0.000000e+00> : vector<16x16xf32>
    %723 = tpu.matmul %722, %720, %cst_159 {dimension_numbers = #tpu.dot_dimension_numbers<[1], [0], [0], [1], [0, 0, 1, 1], [], []>} : vector<16x32xbf16>, vector<32x16xbf16>, vector<16x16xf32> -> vector<16x16xf32>
    %724 = vector.broadcast %721 : vector<1x16xf32> to vector<16x16xf32>
    %725 = arith.addf %723, %724 : vector<16x16xf32>
    %726 = arith.addf %700, %725 : vector<16x16xf32>
    %c10_160 = arith.constant 10 : index
    %c0_161 = arith.constant 0 : index
    %727 = vector.load %arg2[%c10_160, %c0_161] : memref<28x48xf32, #tpu.memory_space<vmem>>, vector<1x16xf32>
    %c11_162 = arith.constant 11 : index
    %c0_163 = arith.constant 0 : index
    %728 = vector.load %arg2[%c11_162, %c0_163] : memref<28x48xf32, #tpu.memory_space<vmem>>, vector<1x16xf32>
    %cst_164 = arith.constant dense<0.000000e+00> : vector<16xf32>
    %729 = vector.multi_reduction <add>, %726, %cst_164 [1] : vector<16x16xf32> to vector<16xf32>
    %730 = vector.shape_cast %729 : vector<16xf32> to vector<16x1xf32>
    %cst_165 = arith.constant 1.600000e+01 : f32
    %731 = vector.broadcast %cst_165 : f32 to vector<16x1xf32>
    %732 = arith.divf %730, %731 : vector<16x1xf32>
    %733 = vector.broadcast %732 : vector<16x1xf32> to vector<16x16xf32>
    %734 = arith.subf %726, %733 : vector<16x16xf32>
    %735 = arith.mulf %734, %734 : vector<16x16xf32>
    %cst_166 = arith.constant dense<0.000000e+00> : vector<16xf32>
    %736 = vector.multi_reduction <add>, %735, %cst_166 [1] : vector<16x16xf32> to vector<16xf32>
    %737 = vector.shape_cast %736 : vector<16xf32> to vector<16x1xf32>
    %cst_167 = arith.constant 1.600000e+01 : f32
    %738 = vector.broadcast %cst_167 : f32 to vector<16x1xf32>
    %739 = arith.divf %737, %738 : vector<16x1xf32>
    %740 = vector.broadcast %732 : vector<16x1xf32> to vector<16x16xf32>
    %741 = arith.subf %726, %740 : vector<16x16xf32>
    %cst_168 = arith.constant 9.99999974E-6 : f32
    %742 = vector.broadcast %cst_168 : f32 to vector<16x1xf32>
    %743 = arith.addf %739, %742 : vector<16x1xf32>
    %744 = math.rsqrt %743 : vector<16x1xf32>
    %745 = vector.broadcast %744 : vector<16x1xf32> to vector<16x16xf32>
    %746 = arith.mulf %741, %745 : vector<16x16xf32>
    %747 = vector.broadcast %727 : vector<1x16xf32> to vector<16x16xf32>
    %748 = arith.mulf %746, %747 : vector<16x16xf32>
    %749 = vector.broadcast %728 : vector<1x16xf32> to vector<16x16xf32>
    %750 = arith.addf %748, %749 : vector<16x16xf32>
    %c0_169 = arith.constant 0 : index
    %c0_170 = arith.constant 0 : index
    %751 = vector.load %arg3[%c0_169, %c0_170] : memref<16x16xf32, #tpu.memory_space<vmem>>, vector<16x16xf32>
    tpu.vector_store %arg3[%c0_169, %c0_170], %750 {strides = array<i32>} : memref<16x16xf32, #tpu.memory_space<vmem>>, vector<16x16xf32>,
    return
  }
}

</mosaic_0001>

<llo_original>
// kernel: transformer_forward.1
$region0: #{transformer_forward.1}
  #allocation0 [shape = 'u32[]', space=smem, size = 0x4, offset = 0x4, fixed_abs, tag = 'smem constant byte address 0x4 - core index']
  #allocation1 [shape = 'u32[144,128]{1,0:T(1,128)}', space=vmem, size = 0x12000, scoped, tag = 'internal scratch']
  #allocation2 [shape = 'f32[16,16]{1,0:T(8,128)}', space=vmem, size = 0x2000, scoped, tag = 'scratch operand']
  %s0 = inlined_call_operand.vmem [shape: f32[16,32], index: 0, kind: input, shape index: {}]
  %s1 = inlined_call_operand.vmem [shape: bf16[160,48], index: 1, kind: input, shape index: {}]
  %s2 = inlined_call_operand.vmem [shape: f32[28,48], index: 2, kind: input, shape index: {}]
  %s3 = inlined_call_operand.vmem [shape: f32[16,16], index: 3, kind: output, shape index: {}]
  %s4 = sld [smem:[#allocation0]]
  $region22: #{transformer_forward.1} parent=0
    _
  %s6 = ssub.s32 1, %s4
  %s7 = scalar_select 0, %s6, %s4
  // Predicated region
  $region2: #{transformer_forward.1} parent=0 // pred_check
    _
  $region3: #{transformer_forward.1} parent=0 // pred_check_branch
    %9 = sbr.rel (0) target = $region5
  $region4: #{transformer_forward.1} parent=0 // pred_region
    _
  $region5: #{transformer_forward.1} parent=0 // pred_fallthru
    _
  // Predicated region
  $region6: #{transformer_forward.1} parent=0 // pred_check
    _
  $region7: #{transformer_forward.1} parent=0 // pred_check_branch
    %11 = sbr.rel (0) target = $region9
  $region8: #{transformer_forward.1} parent=0 // pred_region
    _
  $region9: #{transformer_forward.1} parent=0 // pred_fallthru
    _
  // Predicated region
  $region10: #{transformer_forward.1} parent=0 // pred_check
    _
  $region11: #{transformer_forward.1} parent=0 // pred_check_branch
    %13 = sbr.rel (0) target = $region13
  $region12: #{transformer_forward.1} parent=0 // pred_region
    _
  $region13: #{transformer_forward.1} parent=0 // pred_fallthru
    _
  %v15 = vld [vmem:[%s1] sm:$0xf]
  %v16 = vld [vmem:[%s1 + $0x4] sm:$0xf]
  %v17 = vld [vmem:[%s1 + $0x8] sm:$0xf]
  %v18 = vld [vmem:[%s1 + $0xc] sm:$0xf]
  %v19 = vld [vmem:[%s1 + $0x10] sm:$0xf]
  %v20 = vld [vmem:[%s1 + $0x14] sm:$0xf]
  %v21 = vld [vmem:[%s1 + $0x18] sm:$0xf]
  %v22 = vld [vmem:[%s1 + $0x1c] sm:$0xf]
  %v23 = vld [vmem:[%s1 + $0x20] sm:$0xf]
  %v24 = vld [vmem:[%s1 + $0x24] sm:$0xf]
  %v25 = vld [vmem:[%s2] sm:$0x1]
  %v26 = vld [vmem:[%s2 + $0x1] sm:$0x1]
  %v27 = vld [vmem:[%s2 + $0x2] sm:$0x1]
  %v28 = vld [vmem:[%s2 + $0x3] sm:$0x1]
  %v29 = vld [vmem:[%s0] sm:$0xff]
  %v30 = vld [vmem:[%s0 + $0x8] sm:$0xff]
  %v31 = vpack.c.bf16 %v30, %v29
  %v32 = vlaneseq
  %v33 = vshrl.u32 %v32, 7
  %v34 = vsub.s32 0, %v33
  %v35 = vrot.slane %v25, %v34
  %v40 = vunpack.c.l.b16 %v15
  %v41 = vunpack.c.l.b16 %v16
  %v42 = vunpack.c.l.b16 %v17
  %v43 = vunpack.c.l.b16 %v18
  %v44 = vpack.c.b16 %v41, %v40
  %v45 = vpack.c.b16 %v43, %v42
  %vm48 = vcmask 261120
  %v50 = vsel %vm48, %v31, 0
  %52 = vmatprep.subr.bf16.mxu0 0
  %53 = vmatpush1.bf16.msra.mxu0 %v44
  %54 = vmatprep.subr.bf16.mxu0 0
  %55 = vmatpush1.bf16.msra.mxu0 %v45
  %56 = vmatprep.subr.bf16.mxu0 0
  %57 = vmatpush1.bf16.msra.mxu0 0
  %58 = vmatprep.subr.bf16.mxu0 0
  %59 = vmatpush1.bf16.msra.mxu0 0
  %60 = vmatprep.subr.bf16.mxu0 0
  %61 = vmatpush1.bf16.msra.mxu0 0
  %62 = vmatprep.subr.bf16.mxu0 0
  %63 = vmatpush1.bf16.msra.mxu0 0
  %64 = vmatprep.subr.bf16.mxu0 0
  %65 = vmatpush1.bf16.msra.mxu0 0
  %66 = vmatprep.subr.bf16.mxu0 0
  %67 = vmatpush1.bf16.msra.mxu0 0
  %68 = vmatprep.subr.bf16.mxu0 0
  %69 = vmatpush1.bf16.msra.mxu0 0
  %70 = vmatprep.subr.bf16.mxu0 0
  %71 = vmatpush1.bf16.msra.mxu0 0
  %72 = vmatprep.subr.bf16.mxu0 0
  %73 = vmatpush1.bf16.msra.mxu0 0
  %74 = vmatprep.subr.bf16.mxu0 0
  %75 = vmatpush1.bf16.msra.mxu0 0
  %76 = vmatprep.subr.bf16.mxu0 0
  %77 = vmatpush1.bf16.msra.mxu0 0
  %78 = vmatprep.subr.bf16.mxu0 0
  %79 = vmatpush1.bf16.msra.mxu0 0
  %80 = vmatprep.subr.bf16.mxu0 0
  %81 = vmatpush1.bf16.msra.mxu0 0
  %82 = vmatprep.subr.bf16.mxu0 0
  %83 = vmatpush1.bf16.msra.mxu0 0
  %84 = vmatprep.mubr.bf16.mxu0 0
  %85 = vmatmul.mubr.bf16.gmra.mrb[0].mxu0 %v50
  %v86 = vpop.f32.mrb[0].mxu0
  %v87 = vadd.f32 %v35, %v86
  %v88 = vpop.f32.mrb[0].mxu0
  %v89 = vpop.f32.mrb[0].mxu0
  %v90 = vadd.f32 %v35, %v89
  %v91 = vpop.f32.mrb[0].mxu0
  %92 = vdwg.mxu0
  %v93 = vlaneseq
  %v94 = vshrl.u32 %v93, 7
  %v95 = vsub.s32 0, %v94
  %v96 = vrot.slane %v26, %v95
  %v99 = vunpack.c.l.b16 %v19
  %v100 = vunpack.c.l.b16 %v20
  %v101 = vpack.c.b16 %v100, %v99
  %vm103 = vcmask 130048
  %v105 = vsel %vm103, 0, 0
  %107 = vmatprep.subr.bf16.mxu0 0
  %108 = vmatpush1.bf16.msra.mxu0 %v101
  %109 = vmatprep.subr.bf16.mxu0 0
  %110 = vmatpush1.bf16.msra.mxu0 0
  %111 = vmatprep.subr.bf16.mxu0 0
  %112 = vmatpush1.bf16.msra.mxu0 0
  %113 = vmatprep.subr.bf16.mxu0 0
  %114 = vmatpush1.bf16.msra.mxu0 0
  %115 = vmatprep.subr.bf16.mxu0 0
  %116 = vmatpush1.bf16.msra.mxu0 0
  %117 = vmatprep.subr.bf16.mxu0 0
  %118 = vmatpush1.bf16.msra.mxu0 0
  %119 = vmatprep.subr.bf16.mxu0 0
  %120 = vmatpush1.bf16.msra.mxu0 0
  %121 = vmatprep.subr.bf16.mxu0 0
  %122 = vmatpush1.bf16.msra.mxu0 0
  %123 = vmatprep.subr.bf16.mxu0 0
  %124 = vmatpush1.bf16.msra.mxu0 0
  %125 = vmatprep.subr.bf16.mxu0 0
  %126 = vmatpush1.bf16.msra.mxu0 0
  %127 = vmatprep.subr.bf16.mxu0 0
  %128 = vmatpush1.bf16.msra.mxu0 0
  %129 = vmatprep.subr.bf16.mxu0 0
  %130 = vmatpush1.bf16.msra.mxu0 0
  %131 = vmatprep.subr.bf16.mxu0 0
  %132 = vmatpush1.bf16.msra.mxu0 0
  %133 = vmatprep.subr.bf16.mxu0 0
  %134 = vmatpush1.bf16.msra.mxu0 0
  %135 = vmatprep.subr.bf16.mxu0 0
  %136 = vmatpush1.bf16.msra.mxu0 0
  %137 = vmatprep.subr.bf16.mxu0 0
  %138 = vmatpush1.bf16.msra.mxu0 0
  %139 = vmatprep.mubr.bf16.mxu0 0
  %140 = vmatmul.mubr.bf16.gmra.mrb[0].mxu0 %v105
  %v141 = vpop.f32.mrb[0].mxu0
  %v142 = vadd.f32 %v96, %v141
  %v143 = vpop.f32.mrb[0].mxu0
  %v144 = vpop.f32.mrb[0].mxu0
  %v145 = vpop.f32.mrb[0].mxu0
  %146 = vdwg.mxu0
  %v147 = vlaneseq
  %v148 = vshrl.u32 %v147, 7
  %v149 = vsub.s32 0, %v148
  %v150 = vrot.slane %v28, %v149
  %v153 = vunpack.c.l.b16 %v23
  %v154 = vunpack.c.l.b16 %v24
  %v155 = vpack.c.b16 %v154, %v153
  %157 = vmatprep.subr.bf16.mxu0 0
  %158 = vmatpush1.bf16.msra.mxu0 %v155
  %159 = vmatprep.subr.bf16.mxu0 0
  %160 = vmatpush1.bf16.msra.mxu0 0
  %161 = vmatprep.subr.bf16.mxu0 0
  %162 = vmatpush1.bf16.msra.mxu0 0
  %163 = vmatprep.subr.bf16.mxu0 0
  %164 = vmatpush1.bf16.msra.mxu0 0
  %165 = vmatprep.subr.bf16.mxu0 0
  %166 = vmatpush1.bf16.msra.mxu0 0
  %167 = vmatprep.subr.bf16.mxu0 0
  %168 = vmatpush1.bf16.msra.mxu0 0
  %169 = vmatprep.subr.bf16.mxu0 0
  %170 = vmatpush1.bf16.msra.mxu0 0
  %171 = vmatprep.subr.bf16.mxu0 0
  %172 = vmatpush1.bf16.msra.mxu0 0
  %173 = vmatprep.subr.bf16.mxu0 0
  %174 = vmatpush1.bf16.msra.mxu0 0
  %175 = vmatprep.subr.bf16.mxu0 0
  %176 = vmatpush1.bf16.msra.mxu0 0
  %177 = vmatprep.subr.bf16.mxu0 0
  %178 = vmatpush1.bf16.msra.mxu0 0
  %179 = vmatprep.subr.bf16.mxu0 0
  %180 = vmatpush1.bf16.msra.mxu0 0
  %181 = vmatprep.subr.bf16.mxu0 0
  %182 = vmatpush1.bf16.msra.mxu0 0
  %183 = vmatprep.subr.bf16.mxu0 0
  %184 = vmatpush1.bf16.msra.mxu0 0
  %185 = vmatprep.subr.bf16.mxu0 0
  %186 = vmatpush1.bf16.msra.mxu0 0
  %187 = vmatprep.subr.bf16.mxu0 0
  %188 = vmatpush1.bf16.msra.mxu0 0
  %189 = vmatprep.mubr.bf16.mxu0 0
  %190 = vmatmul.mubr.bf16.gmra.mrb[0].mxu0 %v105
  %v191 = vpop.f32.mrb[0].mxu0
  %v192 = vadd.f32 %v150, %v191
  %v193 = vpop.f32.mrb[0].mxu0
  %v194 = vpop.f32.mrb[0].mxu0
  %v195 = vpop.f32.mrb[0].mxu0
  %196 = vdwg.mxu0
  %v197 = vadd.f32 %v87, %v142
  %v198 = vxor.u32 %v197, 2147483648
  %v199 = vmul.f32 %v198, 1.442695
  %v200 = vpow.pop %v199
  %v201 = vadd.f32 %v200, 1.0
  %v202 = vrcp.pop %v201
  %v203 = vmul.f32 1.0, %v202
  %205 = vrot.lane.b32.xlu0 %v142, 96
  %v206 = vpop.permute.xlu0 %205
  %v208 = vmul.f32 %v203, %v206
  %210 = vrot.lane.b32.xlu0 %v208, 32
  %v211 = vpop.permute.xlu0 %210
  %v213 = vadd.f32 %v87, %v211
  %v214 = vtanh.pop %v213
  %v215 = vsub.f32 1.0, %v203
  %217 = vrot.lane.b32.xlu0 %v214, 112
  %v218 = vpop.permute.xlu0 %217
  %v220 = vmul.f32 %v215, %v218
  %v221 = vmul.f32 %v203, 0.0
  %v222 = vadd.f32 %v220, %v221
  %v223 = vpack.c.bf16 %v222, %v222
  %v224 = vlaneseq
  %v225 = vshrl.u32 %v224, 7
  %v226 = vsub.s32 0, %v225
  %v227 = vrot.slane %v27, %v226
  %229 = vrot.lane.b32.xlu0 %v223, 112
  %v230 = vpop.permute.xlu0 %229
  %v233 = vunpack.c.l.b16 %v21
  %v234 = vunpack.c.l.b16 %v22
  %v235 = vpack.c.b16 %v234, %v233
  %v238 = vsel %vm103, %v230, 0
  %240 = vmatprep.subr.bf16.mxu0 0
  %241 = vmatpush1.bf16.msra.mxu0 %v235
  %242 = vmatprep.subr.bf16.mxu0 0
  %243 = vmatpush1.bf16.msra.mxu0 0
  %244 = vmatprep.subr.bf16.mxu0 0
  %245 = vmatpush1.bf16.msra.mxu0 0
  %246 = vmatprep.subr.bf16.mxu0 0
  %247 = vmatpush1.bf16.msra.mxu0 0
  %248 = vmatprep.subr.bf16.mxu0 0
  %249 = vmatpush1.bf16.msra.mxu0 0
  %250 = vmatprep.subr.bf16.mxu0 0
  %251 = vmatpush1.bf16.msra.mxu0 0
  %252 = vmatprep.subr.bf16.mxu0 0
  %253 = vmatpush1.bf16.msra.mxu0 0
  %254 = vmatprep.subr.bf16.mxu0 0
  %255 = vmatpush1.bf16.msra.mxu0 0
  %256 = vmatprep.subr.bf16.mxu0 0
  %257 = vmatpush1.bf16.msra.mxu0 0
  %258 = vmatprep.subr.bf16.mxu0 0
  %259 = vmatpush1.bf16.msra.mxu0 0
  %260 = vmatprep.subr.bf16.mxu0 0
  %261 = vmatpush1.bf16.msra.mxu0 0
  %262 = vmatprep.subr.bf16.mxu0 0
  %263 = vmatpush1.bf16.msra.mxu0 0
  %264 = vmatprep.subr.bf16.mxu0 0
  %265 = vmatpush1.bf16.msra.mxu0 0
  %266 = vmatprep.subr.bf16.mxu0 0
  %267 = vmatpush1.bf16.msra.mxu0 0
  %268 = vmatprep.subr.bf16.mxu0 0
  %269 = vmatpush1.bf16.msra.mxu0 0
  %270 = vmatprep.subr.bf16.mxu0 0
  %271 = vmatpush1.bf16.msra.mxu0 0
  %272 = vmatprep.mubr.bf16.mxu0 0
  %273 = vmatmul.mubr.bf16.gmra.mrb[0].mxu0 %v238
  %v274 = vpop.f32.mrb[0].mxu0
  %v275 = vadd.f32 %v227, %v274
  %v276 = vpop.f32.mrb[0].mxu0
  %v277 = vpop.f32.mrb[0].mxu0
  %v278 = vpop.f32.mrb[0].mxu0
  %279 = vdwg.mxu0
  %v280 = vadd.f32 %v275, %v192
  %v281 = vxor.u32 %v280, 2147483648
  %v282 = vmul.f32 %v281, 1.442695
  %v283 = vpow.pop %v282
  %v284 = vadd.f32 %v283, 1.0
  %v285 = vrcp.pop %v284
  %v286 = vmul.f32 1.0, %v285
  %288 = vrot.lane.b32.xlu0 %v192, 96
  %v289 = vpop.permute.xlu0 %288
  %v291 = vmul.f32 %v286, %v289
  %293 = vrot.lane.b32.xlu0 %v291, 32
  %v294 = vpop.permute.xlu0 %293
  %v296 = vadd.f32 %v275, %v294
  %v297 = vtanh.pop %v296
  %v298 = vsub.f32 1.0, %v286
  %300 = vrot.lane.b32.xlu0 %v297, 112
  %v301 = vpop.permute.xlu0 %300
  %v303 = vmul.f32 %v298, %v301
  %v304 = vmul.f32 %v286, 0.0
  %v305 = vadd.f32 %v303, %v304
  %307 = vrot.lane.b32.xlu0 %v305, 112
  %v308 = vpop.permute.xlu0 %307
  %vm310 = vcmask 122880
  %311 = vst.msk [vmem:[#allocation2] sm:$0x1] %vm310, %v308
  %vm312 = vcmask 123905
  %313 = vst.msk [vmem:[#allocation2 + $0x7] sm:$0x2] %vm312, %v308
  %314 = vmatprep.subr.bf16.mxu0 0
  %315 = vmatpush1.bf16.msra.mxu0 %v101
  %316 = vmatprep.subr.bf16.mxu0 0
  %317 = vmatpush1.bf16.msra.mxu0 0
  %318 = vmatprep.subr.bf16.mxu0 0
  %319 = vmatpush1.bf16.msra.mxu0 0
  %320 = vmatprep.subr.bf16.mxu0 0
  %321 = vmatpush1.bf16.msra.mxu0 0
  %322 = vmatprep.subr.bf16.mxu0 0
  %323 = vmatpush1.bf16.msra.mxu0 0
  %324 = vmatprep.subr.bf16.mxu0 0
  %325 = vmatpush1.bf16.msra.mxu0 0
  %326 = vmatprep.subr.bf16.mxu0 0
  %327 = vmatpush1.bf16.msra.mxu0 0
  %328 = vmatprep.subr.bf16.mxu0 0
  %329 = vmatpush1.bf16.msra.mxu0 0
  %330 = vmatprep.subr.bf16.mxu0 0
  %331 = vmatpush1.bf16.msra.mxu0 0
  %332 = vmatprep.subr.bf16.mxu0 0
  %333 = vmatpush1.bf16.msra.mxu0 0
  %334 = vmatprep.subr.bf16.mxu0 0
  %335 = vmatpush1.bf16.msra.mxu0 0
  %336 = vmatprep.subr.bf16.mxu0 0
  %337 = vmatpush1.bf16.msra.mxu0 0
  %338 = vmatprep.subr.bf16.mxu0 0
  %339 = vmatpush1.bf16.msra.mxu0 0
  %340 = vmatprep.subr.bf16.mxu0 0
  %341 = vmatpush1.bf16.msra.mxu0 0
  %342 = vmatprep.subr.bf16.mxu0 0
  %343 = vmatpush1.bf16.msra.mxu0 0
  %344 = vmatprep.subr.bf16.mxu0 0
  %345 = vmatpush1.bf16.msra.mxu0 0
  %346 = vmatprep.mubr.bf16.mxu0 0
  %347 = vmatmul.mubr.bf16.gmra.mrb[0].mxu0 %v238
  %v348 = vpop.f32.mrb[0].mxu0
  %v349 = vadd.f32 %v96, %v348
  %v350 = vpop.f32.mrb[0].mxu0
  %v351 = vpop.f32.mrb[0].mxu0
  %v352 = vpop.f32.mrb[0].mxu0
  %353 = vdwg.mxu0
  %v354 = vpack.c.bf16 %v305, %v305
  %356 = vrot.lane.b32.xlu0 %v354, 112
  %v357 = vpop.permute.xlu0 %356
  %v359 = vsel %vm103, %v357, 0
  %361 = vmatprep.subr.bf16.mxu0 0
  %362 = vmatpush1.bf16.msra.mxu0 %v155
  %363 = vmatprep.subr.bf16.mxu0 0
  %364 = vmatpush1.bf16.msra.mxu0 0
  %365 = vmatprep.subr.bf16.mxu0 0
  %366 = vmatpush1.bf16.msra.mxu0 0
  %367 = vmatprep.subr.bf16.mxu0 0
  %368 = vmatpush1.bf16.msra.mxu0 0
  %369 = vmatprep.subr.bf16.mxu0 0
  %370 = vmatpush1.bf16.msra.mxu0 0
  %371 = vmatprep.subr.bf16.mxu0 0
  %372 = vmatpush1.bf16.msra.mxu0 0
  %373 = vmatprep.subr.bf16.mxu0 0
  %374 = vmatpush1.bf16.msra.mxu0 0
  %375 = vmatprep.subr.bf16.mxu0 0
  %376 = vmatpush1.bf16.msra.mxu0 0
  %377 = vmatprep.subr.bf16.mxu0 0
  %378 = vmatpush1.bf16.msra.mxu0 0
  %379 = vmatprep.subr.bf16.mxu0 0
  %380 = vmatpush1.bf16.msra.mxu0 0
  %381 = vmatprep.subr.bf16.mxu0 0
  %382 = vmatpush1.bf16.msra.mxu0 0
  %383 = vmatprep.subr.bf16.mxu0 0
  %384 = vmatpush1.bf16.msra.mxu0 0
  %385 = vmatprep.subr.bf16.mxu0 0
  %386 = vmatpush1.bf16.msra.mxu0 0
  %387 = vmatprep.subr.bf16.mxu0 0
  %388 = vmatpush1.bf16.msra.mxu0 0
  %389 = vmatprep.subr.bf16.mxu0 0
  %390 = vmatpush1.bf16.msra.mxu0 0
  %391 = vmatprep.subr.bf16.mxu0 0
  %392 = vmatpush1.bf16.msra.mxu0 0
  %393 = vmatprep.mubr.bf16.mxu0 0
  %394 = vmatmul.mubr.bf16.gmra.mrb[0].mxu0 %v359
  %v395 = vpop.f32.mrb[0].mxu0
  %v396 = vadd.f32 %v150, %v395
  %v397 = vpop.f32.mrb[0].mxu0
  %v398 = vpop.f32.mrb[0].mxu0
  %v399 = vpop.f32.mrb[0].mxu0
  %400 = vdwg.mxu0
  %v402 = vrot.slane %v349, 6
  %v404 = vadd.f32 %v87, %v402
  %v405 = vxor.u32 %v404, 2147483648
  %v406 = vmul.f32 %v405, 1.442695
  %v407 = vpow.pop %v406
  %v408 = vadd.f32 %v407, 1.0
  %v409 = vrcp.pop %v408
  %v410 = vmul.f32 1.0, %v409
  %411 = vrot.lane.b32.xlu0 %v402, 96
  %v412 = vpop.permute.xlu0 %411
  %v414 = vmul.f32 %v410, %v412
  %416 = vrot.lane.b32.xlu0 %v414, 32
  %v417 = vpop.permute.xlu0 %416
  %v419 = vadd.f32 %v87, %v417
  %v420 = vtanh.pop %v419
  %v421 = vsub.f32 1.0, %v410
  %423 = vrot.lane.b32.xlu0 %v420, 112
  %v424 = vpop.permute.xlu0 %423
  %v426 = vmul.f32 %v421, %v424
  %v428 = vrot.slane %v222, 6
  %v430 = vmul.f32 %v410, %v428
  %v431 = vadd.f32 %v426, %v430
  %v432 = vpack.c.bf16 %v431, %v431
  %v434 = vrot.slane %v432, 1
  %435 = vrot.lane.b32.xlu0 %v434, 112
  %v436 = vpop.permute.xlu0 %435
  %v438 = vsel %vm103, %v436, 0
  %440 = vmatprep.subr.bf16.mxu0 0
  %441 = vmatpush1.bf16.msra.mxu0 %v235
  %442 = vmatprep.subr.bf16.mxu0 0
  %443 = vmatpush1.bf16.msra.mxu0 0
  %444 = vmatprep.subr.bf16.mxu0 0
  %445 = vmatpush1.bf16.msra.mxu0 0
  %446 = vmatprep.subr.bf16.mxu0 0
  %447 = vmatpush1.bf16.msra.mxu0 0
  %448 = vmatprep.subr.bf16.mxu0 0
  %449 = vmatpush1.bf16.msra.mxu0 0
  %450 = vmatprep.subr.bf16.mxu0 0
  %451 = vmatpush1.bf16.msra.mxu0 0
  %452 = vmatprep.subr.bf16.mxu0 0
  %453 = vmatpush1.bf16.msra.mxu0 0
  %454 = vmatprep.subr.bf16.mxu0 0
  %455 = vmatpush1.bf16.msra.mxu0 0
  %456 = vmatprep.subr.bf16.mxu0 0
  %457 = vmatpush1.bf16.msra.mxu0 0
  %458 = vmatprep.subr.bf16.mxu0 0
  %459 = vmatpush1.bf16.msra.mxu0 0
  %460 = vmatprep.subr.bf16.mxu0 0
  %461 = vmatpush1.bf16.msra.mxu0 0
  %462 = vmatprep.subr.bf16.mxu0 0
  %463 = vmatpush1.bf16.msra.mxu0 0
  %464 = vmatprep.subr.bf16.mxu0 0
  %465 = vmatpush1.bf16.msra.mxu0 0
  %466 = vmatprep.subr.bf16.mxu0 0
  %467 = vmatpush1.bf16.msra.mxu0 0
  %468 = vmatprep.subr.bf16.mxu0 0
  %469 = vmatpush1.bf16.msra.mxu0 0
  %470 = vmatprep.subr.bf16.mxu0 0
  %471 = vmatpush1.bf16.msra.mxu0 0
  %472 = vmatprep.mubr.bf16.mxu0 0
  %473 = vmatmul.mubr.bf16.gmra.mrb[0].mxu0 %v438
  %v474 = vpop.f32.mrb[0].mxu0
  %v475 = vadd.f32 %v227, %v474
  %v476 = vpop.f32.mrb[0].mxu0
  %v477 = vpop.f32.mrb[0].mxu0
  %v478 = vpop.f32.mrb[0].mxu0
  %479 = vdwg.mxu0
  %v480 = vadd.f32 %v475, %v396
  %v481 = vxor.u32 %v480, 2147483648
  %v482 = vmul.f32 %v481, 1.442695
  %v483 = vpow.pop %v482
  %v484 = vadd.f32 %v483, 1.0
  %v485 = vrcp.pop %v484
  %v486 = vmul.f32 1.0, %v485
  %488 = vrot.lane.b32.xlu0 %v396, 96
  %v489 = vpop.permute.xlu0 %488
  %v491 = vmul.f32 %v486, %v489
  %493 = vrot.lane.b32.xlu0 %v491, 32
  %v494 = vpop.permute.xlu0 %493
  %v496 = vadd.f32 %v475, %v494
  %v497 = vtanh.pop %v496
  %v498 = vsub.f32 1.0, %v486
  %500 = vrot.lane.b32.xlu0 %v497, 112
  %v501 = vpop.permute.xlu0 %500
  %v503 = vmul.f32 %v498, %v501
  %v504 = vmul.f32 %v486, %v305
  %v505 = vadd.f32 %v503, %v504
  %507 = vrot.lane.b32.xlu0 %v505, 112
  %v508 = vpop.permute.xlu0 %507
  %510 = vst.msk [vmem:[#allocation2 + $0x1] sm:$0x1] %vm310, %v508
  %511 = vst.msk [vmem:[#allocation2 + $0x8] sm:$0x2] %vm312, %v508
  %512 = vmatprep.subr.bf16.mxu0 0
  %513 = vmatpush1.bf16.msra.mxu0 %v101
  %514 = vmatprep.subr.bf16.mxu0 0
  %515 = vmatpush1.bf16.msra.mxu0 0
  %516 = vmatprep.subr.bf16.mxu0 0
  %517 = vmatpush1.bf16.msra.mxu0 0
  %518 = vmatprep.subr.bf16.mxu0 0
  %519 = vmatpush1.bf16.msra.mxu0 0
  %520 = vmatprep.subr.bf16.mxu0 0
  %521 = vmatpush1.bf16.msra.mxu0 0
  %522 = vmatprep.subr.bf16.mxu0 0
  %523 = vmatpush1.bf16.msra.mxu0 0
  %524 = vmatprep.subr.bf16.mxu0 0
  %525 = vmatpush1.bf16.msra.mxu0 0
  %526 = vmatprep.subr.bf16.mxu0 0
  %527 = vmatpush1.bf16.msra.mxu0 0
  %528 = vmatprep.subr.bf16.mxu0 0
  %529 = vmatpush1.bf16.msra.mxu0 0
  %530 = vmatprep.subr.bf16.mxu0 0
  %531 = vmatpush1.bf16.msra.mxu0 0
  %532 = vmatprep.subr.bf16.mxu0 0
  %533 = vmatpush1.bf16.msra.mxu0 0
  %534 = vmatprep.subr.bf16.mxu0 0
  %535 = vmatpush1.bf16.msra.mxu0 0
  %536 = vmatprep.subr.bf16.mxu0 0
  %537 = vmatpush1.bf16.msra.mxu0 0
  %538 = vmatprep.subr.bf16.mxu0 0
  %539 = vmatpush1.bf16.msra.mxu0 0
  %540 = vmatprep.subr.bf16.mxu0 0
  %541 = vmatpush1.bf16.msra.mxu0 0
  %542 = vmatprep.subr.bf16.mxu0 0
  %543 = vmatpush1.bf16.msra.mxu0 0
  %544 = vmatprep.mubr.bf16.mxu0 0
  %545 = vmatmul.mubr.bf16.gmra.mrb[0].mxu0 %v438
  %v546 = vpop.f32.mrb[0].mxu0
  %v547 = vadd.f32 %v96, %v546
  %v548 = vpop.f32.mrb[0].mxu0
  %v549 = vpop.f32.mrb[0].mxu0
  %v550 = vpop.f32.mrb[0].mxu0
  %551 = vdwg.mxu0
  %v552 = vpack.c.bf16 %v505, %v505
  %554 = vrot.lane.b32.xlu0 %v552, 112
  %v555 = vpop.permute.xlu0 %554
  %v557 = vsel %vm103, %v555, 0
  %559 = vmatprep.subr.bf16.mxu0 0
  %560 = vmatpush1.bf16.msra.mxu0 %v155
  %561 = vmatprep.subr.bf16.mxu0 0
  %562 = vmatpush1.bf16.msra.mxu0 0
  %563 = vmatprep.subr.bf16.mxu0 0
  %564 = vmatpush1.bf16.msra.mxu0 0
  %565 = vmatprep.subr.bf16.mxu0 0
  %566 = vmatpush1.bf16.msra.mxu0 0
  %567 = vmatprep.subr.bf16.mxu0 0
  %568 = vmatpush1.bf16.msra.mxu0 0
  %569 = vmatprep.subr.bf16.mxu0 0
  %570 = vmatpush1.bf16.msra.mxu0 0
  %571 = vmatprep.subr.bf16.mxu0 0
  %572 = vmatpush1.bf16.msra.mxu0 0
  %573 = vmatprep.subr.bf16.mxu0 0
  %574 = vmatpush1.bf16.msra.mxu0 0
  %575 = vmatprep.subr.bf16.mxu0 0
  %576 = vmatpush1.bf16.msra.mxu0 0
  %577 = vmatprep.subr.bf16.mxu0 0
  %578 = vmatpush1.bf16.msra.mxu0 0
  %579 = vmatprep.subr.bf16.mxu0 0
  %580 = vmatpush1.bf16.msra.mxu0 0
  %581 = vmatprep.subr.bf16.mxu0 0
  %582 = vmatpush1.bf16.msra.mxu0 0
  %583 = vmatprep.subr.bf16.mxu0 0
  %584 = vmatpush1.bf16.msra.mxu0 0
  %585 = vmatprep.subr.bf16.mxu0 0
  %586 = vmatpush1.bf16.msra.mxu0 0
  %587 = vmatprep.subr.bf16.mxu0 0
  %588 = vmatpush1.bf16.msra.mxu0 0
  %589 = vmatprep.subr.bf16.mxu0 0
  %590 = vmatpush1.bf16.msra.mxu0 0
  %591 = vmatprep.mubr.bf16.mxu0 0
  %592 = vmatmul.mubr.bf16.gmra.mrb[0].mxu0 %v557
  %v593 = vpop.f32.mrb[0].mxu0
  %v594 = vadd.f32 %v150, %v593
  %v595 = vpop.f32.mrb[0].mxu0
  %v596 = vpop.f32.mrb[0].mxu0
  %v597 = vpop.f32.mrb[0].mxu0
  %598 = vdwg.mxu0
  %v600 = vrot.slane %v547, 4
  %v602 = vadd.f32 %v87, %v600
  %v603 = vxor.u32 %v602, 2147483648
  %v604 = vmul.f32 %v603, 1.442695
  %v605 = vpow.pop %v604
  %v606 = vadd.f32 %v605, 1.0
  %v607 = vrcp.pop %v606
  %v608 = vmul.f32 1.0, %v607
  %609 = vrot.lane.b32.xlu0 %v600, 96
  %v610 = vpop.permute.xlu0 %609
  %v612 = vmul.f32 %v608, %v610
  %614 = vrot.lane.b32.xlu0 %v612, 32
  %v615 = vpop.permute.xlu0 %614
  %v617 = vadd.f32 %v87, %v615
  %v618 = vtanh.pop %v617
  %v619 = vsub.f32 1.0, %v608
  %621 = vrot.lane.b32.xlu0 %v618, 112
  %v622 = vpop.permute.xlu0 %621
  %v624 = vmul.f32 %v619, %v622
  %v626 = vrot.slane %v431, 6
  %v628 = vmul.f32 %v608, %v626
  %v629 = vadd.f32 %v624, %v628
  %v630 = vpack.c.bf16 %v629, %v629
  %v632 = vrot.slane %v630, 2
  %633 = vrot.lane.b32.xlu0 %v632, 112
  %v634 = vpop.permute.xlu0 %633
  %v636 = vsel %vm103, %v634, 0
  %638 = vmatprep.subr.bf16.mxu0 0
  %639 = vmatpush1.bf16.msra.mxu0 %v235
  %640 = vmatprep.subr.bf16.mxu0 0
  %641 = vmatpush1.bf16.msra.mxu0 0
  %642 = vmatprep.subr.bf16.mxu0 0
  %643 = vmatpush1.bf16.msra.mxu0 0
  %644 = vmatprep.subr.bf16.mxu0 0
  %645 = vmatpush1.bf16.msra.mxu0 0
  %646 = vmatprep.subr.bf16.mxu0 0
  %647 = vmatpush1.bf16.msra.mxu0 0
  %648 = vmatprep.subr.bf16.mxu0 0
  %649 = vmatpush1.bf16.msra.mxu0 0
  %650 = vmatprep.subr.bf16.mxu0 0
  %651 = vmatpush1.bf16.msra.mxu0 0
  %652 = vmatprep.subr.bf16.mxu0 0
  %653 = vmatpush1.bf16.msra.mxu0 0
  %654 = vmatprep.subr.bf16.mxu0 0
  %655 = vmatpush1.bf16.msra.mxu0 0
  %656 = vmatprep.subr.bf16.mxu0 0
  %657 = vmatpush1.bf16.msra.mxu0 0
  %658 = vmatprep.subr.bf16.mxu0 0
  %659 = vmatpush1.bf16.msra.mxu0 0
  %660 = vmatprep.subr.bf16.mxu0 0
  %661 = vmatpush1.bf16.msra.mxu0 0
  %662 = vmatprep.subr.bf16.mxu0 0
  %663 = vmatpush1.bf16.msra.mxu0 0
  %664 = vmatprep.subr.bf16.mxu0 0
  %665 = vmatpush1.bf16.msra.mxu0 0
  %666 = vmatprep.subr.bf16.mxu0 0
  %667 = vmatpush1.bf16.msra.mxu0 0
  %668 = vmatprep.subr.bf16.mxu0 0
  %669 = vmatpush1.bf16.msra.mxu0 0
  %670 = vmatprep.mubr.bf16.mxu0 0
  %671 = vmatmul.mubr.bf16.gmra.mrb[0].mxu0 %v636
  %v672 = vpop.f32.mrb[0].mxu0
  %v673 = vadd.f32 %v227, %v672
  %v674 = vpop.f32.mrb[0].mxu0
  %v675 = vpop.f32.mrb[0].mxu0
  %v676 = vpop.f32.mrb[0].mxu0
  %677 = vdwg.mxu0
  %v678 = vadd.f32 %v673, %v594
  %v679 = vxor.u32 %v678, 2147483648
  %v680 = vmul.f32 %v679, 1.442695
  %v681 = vpow.pop %v680
  %v682 = vadd.f32 %v681, 1.0
  %v683 = vrcp.pop %v682
  %v684 = vmul.f32 1.0, %v683
  %686 = vrot.lane.b32.xlu0 %v594, 96
  %v687 = vpop.permute.xlu0 %686
  %v689 = vmul.f32 %v684, %v687
  %691 = vrot.lane.b32.xlu0 %v689, 32
  %v692 = vpop.permute.xlu0 %691
  %v694 = vadd.f32 %v673, %v692
  %v695 = vtanh.pop %v694
  %v696 = vsub.f32 1.0, %v684
  %698 = vrot.lane.b32.xlu0 %v695, 112
  %v699 = vpop.permute.xlu0 %698
  %v701 = vmul.f32 %v696, %v699
  %v702 = vmul.f32 %v684, %v505
  %v703 = vadd.f32 %v701, %v702
  %705 = vrot.lane.b32.xlu0 %v703, 112
  %v706 = vpop.permute.xlu0 %705
  %708 = vst.msk [vmem:[#allocation2 + $0x2] sm:$0x1] %vm310, %v706
  %709 = vst.msk [vmem:[#allocation2 + $0x9] sm:$0x2] %vm312, %v706
  %710 = vmatprep.subr.bf16.mxu0 0
  %711 = vmatpush1.bf16.msra.mxu0 %v101
  %712 = vmatprep.subr.bf16.mxu0 0
  %713 = vmatpush1.bf16.msra.mxu0 0
  %714 = vmatprep.subr.bf16.mxu0 0
  %715 = vmatpush1.bf16.msra.mxu0 0
  %716 = vmatprep.subr.bf16.mxu0 0
  %717 = vmatpush1.bf16.msra.mxu0 0
  %718 = vmatprep.subr.bf16.mxu0 0
  %719 = vmatpush1.bf16.msra.mxu0 0
  %720 = vmatprep.subr.bf16.mxu0 0
  %721 = vmatpush1.bf16.msra.mxu0 0
  %722 = vmatprep.subr.bf16.mxu0 0
  %723 = vmatpush1.bf16.msra.mxu0 0
  %724 = vmatprep.subr.bf16.mxu0 0
  %725 = vmatpush1.bf16.msra.mxu0 0
  %726 = vmatprep.subr.bf16.mxu0 0
  %727 = vmatpush1.bf16.msra.mxu0 0
  %728 = vmatprep.subr.bf16.mxu0 0
  %729 = vmatpush1.bf16.msra.mxu0 0
  %730 = vmatprep.subr.bf16.mxu0 0
  %731 = vmatpush1.bf16.msra.mxu0 0
  %732 = vmatprep.subr.bf16.mxu0 0
  %733 = vmatpush1.bf16.msra.mxu0 0
  %734 = vmatprep.subr.bf16.mxu0 0
  %735 = vmatpush1.bf16.msra.mxu0 0
  %736 = vmatprep.subr.bf16.mxu0 0
  %737 = vmatpush1.bf16.msra.mxu0 0
  %738 = vmatprep.subr.bf16.mxu0 0
  %739 = vmatpush1.bf16.msra.mxu0 0
  %740 = vmatprep.subr.bf16.mxu0 0
  %741 = vmatpush1.bf16.msra.mxu0 0
  %742 = vmatprep.mubr.bf16.mxu0 0
  %743 = vmatmul.mubr.bf16.gmra.mrb[0].mxu0 %v636
  %v744 = vpop.f32.mrb[0].mxu0
  %v745 = vadd.f32 %v96, %v744
  %v746 = vpop.f32.mrb[0].mxu0
  %v747 = vpop.f32.mrb[0].mxu0
  %v748 = vpop.f32.mrb[0].mxu0
  %749 = vdwg.mxu0
  %v750 = vpack.c.bf16 %v703, %v703
  %752 = vrot.lane.b32.xlu0 %v750, 112
  %v753 = vpop.permute.xlu0 %752
  %v755 = vsel %vm103, %v753, 0
  %757 = vmatprep.subr.bf16.mxu0 0
  %758 = vmatpush1.bf16.msra.mxu0 %v155
  %759 = vmatprep.subr.bf16.mxu0 0
  %760 = vmatpush1.bf16.msra.mxu0 0
  %761 = vmatprep.subr.bf16.mxu0 0
  %762 = vmatpush1.bf16.msra.mxu0 0
  %763 = vmatprep.subr.bf16.mxu0 0
  %764 = vmatpush1.bf16.msra.mxu0 0
  %765 = vmatprep.subr.bf16.mxu0 0
  %766 = vmatpush1.bf16.msra.mxu0 0
  %767 = vmatprep.subr.bf16.mxu0 0
  %768 = vmatpush1.bf16.msra.mxu0 0
  %769 = vmatprep.subr.bf16.mxu0 0
  %770 = vmatpush1.bf16.msra.mxu0 0
  %771 = vmatprep.subr.bf16.mxu0 0
  %772 = vmatpush1.bf16.msra.mxu0 0
  %773 = vmatprep.subr.bf16.mxu0 0
  %774 = vmatpush1.bf16.msra.mxu0 0
  %775 = vmatprep.subr.bf16.mxu0 0
  %776 = vmatpush1.bf16.msra.mxu0 0
  %777 = vmatprep.subr.bf16.mxu0 0
  %778 = vmatpush1.bf16.msra.mxu0 0
  %779 = vmatprep.subr.bf16.mxu0 0
  %780 = vmatpush1.bf16.msra.mxu0 0
  %781 = vmatprep.subr.bf16.mxu0 0
  %782 = vmatpush1.bf16.msra.mxu0 0
  %783 = vmatprep.subr.bf16.mxu0 0
  %784 = vmatpush1.bf16.msra.mxu0 0
  %785 = vmatprep.subr.bf16.mxu0 0
  %786 = vmatpush1.bf16.msra.mxu0 0
  %787 = vmatprep.subr.bf16.mxu0 0
  %788 = vmatpush1.bf16.msra.mxu0 0
  %789 = vmatprep.mubr.bf16.mxu0 0
  %790 = vmatmul.mubr.bf16.gmra.mrb[0].mxu0 %v755
  %v791 = vpop.f32.mrb[0].mxu0
  %v792 = vadd.f32 %v150, %v791
  %v793 = vpop.f32.mrb[0].mxu0
  %v794 = vpop.f32.mrb[0].mxu0
  %v795 = vpop.f32.mrb[0].mxu0
  %796 = vdwg.mxu0
  %v798 = vrot.slane %v745, 2
  %v800 = vadd.f32 %v87, %v798
  %v801 = vxor.u32 %v800, 2147483648
  %v802 = vmul.f32 %v801, 1.442695
  %v803 = vpow.pop %v802
  %v804 = vadd.f32 %v803, 1.0
  %v805 = vrcp.pop %v804
  %v806 = vmul.f32 1.0, %v805
  %807 = vrot.lane.b32.xlu0 %v798, 96
  %v808 = vpop.permute.xlu0 %807
  %v810 = vmul.f32 %v806, %v808
  %812 = vrot.lane.b32.xlu0 %v810, 32
  %v813 = vpop.permute.xlu0 %812
  %v815 = vadd.f32 %v87, %v813
  %v816 = vtanh.pop %v815
  %v817 = vsub.f32 1.0, %v806
  %819 = vrot.lane.b32.xlu0 %v816, 112
  %v820 = vpop.permute.xlu0 %819
  %v822 = vmul.f32 %v817, %v820
  %v824 = vrot.slane %v629, 6
  %v826 = vmul.f32 %v806, %v824
  %v827 = vadd.f32 %v822, %v826
  %v828 = vpack.c.bf16 %v827, %v827
  %v830 = vrot.slane %v828, 3
  %831 = vrot.lane.b32.xlu0 %v830, 112
  %v832 = vpop.permute.xlu0 %831
  %v834 = vsel %vm103, %v832, 0
  %836 = vmatprep.subr.bf16.mxu0 0
  %837 = vmatpush1.bf16.msra.mxu0 %v235
  %838 = vmatprep.subr.bf16.mxu0 0
  %839 = vmatpush1.bf16.msra.mxu0 0
  %840 = vmatprep.subr.bf16.mxu0 0
  %841 = vmatpush1.bf16.msra.mxu0 0
  %842 = vmatprep.subr.bf16.mxu0 0
  %843 = vmatpush1.bf16.msra.mxu0 0
  %844 = vmatprep.subr.bf16.mxu0 0
  %845 = vmatpush1.bf16.msra.mxu0 0
  %846 = vmatprep.subr.bf16.mxu0 0
  %847 = vmatpush1.bf16.msra.mxu0 0
  %848 = vmatprep.subr.bf16.mxu0 0
  %849 = vmatpush1.bf16.msra.mxu0 0
  %850 = vmatprep.subr.bf16.mxu0 0
  %851 = vmatpush1.bf16.msra.mxu0 0
  %852 = vmatprep.subr.bf16.mxu0 0
  %853 = vmatpush1.bf16.msra.mxu0 0
  %854 = vmatprep.subr.bf16.mxu0 0
  %855 = vmatpush1.bf16.msra.mxu0 0
  %856 = vmatprep.subr.bf16.mxu0 0
  %857 = vmatpush1.bf16.msra.mxu0 0
  %858 = vmatprep.subr.bf16.mxu0 0
  %859 = vmatpush1.bf16.msra.mxu0 0
  %860 = vmatprep.subr.bf16.mxu0 0
  %861 = vmatpush1.bf16.msra.mxu0 0
  %862 = vmatprep.subr.bf16.mxu0 0
  %863 = vmatpush1.bf16.msra.mxu0 0
  %864 = vmatprep.subr.bf16.mxu0 0
  %865 = vmatpush1.bf16.msra.mxu0 0
  %866 = vmatprep.subr.bf16.mxu0 0
  %867 = vmatpush1.bf16.msra.mxu0 0
  %868 = vmatprep.mubr.bf16.mxu0 0
  %869 = vmatmul.mubr.bf16.gmra.mrb[0].mxu0 %v834
  %v870 = vpop.f32.mrb[0].mxu0
  %v871 = vadd.f32 %v227, %v870
  %v872 = vpop.f32.mrb[0].mxu0
  %v873 = vpop.f32.mrb[0].mxu0
  %v874 = vpop.f32.mrb[0].mxu0
  %875 = vdwg.mxu0
  %v876 = vadd.f32 %v871, %v792
  %v877 = vxor.u32 %v876, 2147483648
  %v878 = vmul.f32 %v877, 1.442695
  %v879 = vpow.pop %v878
  %v880 = vadd.f32 %v879, 1.0
  %v881 = vrcp.pop %v880
  %v882 = vmul.f32 1.0, %v881
  %884 = vrot.lane.b32.xlu0 %v792, 96
  %v885 = vpop.permute.xlu0 %884
  %v887 = vmul.f32 %v882, %v885
  %889 = vrot.lane.b32.xlu0 %v887, 32
  %v890 = vpop.permute.xlu0 %889
  %v892 = vadd.f32 %v871, %v890
  %v893 = vtanh.pop %v892
  %v894 = vsub.f32 1.0, %v882
  %896 = vrot.lane.b32.xlu0 %v893, 112
  %v897 = vpop.permute.xlu0 %896
  %v899 = vmul.f32 %v894, %v897
  %v900 = vmul.f32 %v882, %v703
  %v901 = vadd.f32 %v899, %v900
  %903 = vrot.lane.b32.xlu0 %v901, 112
  %v904 = vpop.permute.xlu0 %903
  %906 = vst.msk [vmem:[#allocation2 + $0x3] sm:$0x1] %vm310, %v904
  %907 = vst.msk [vmem:[#allocation2 + $0xa] sm:$0x2] %vm312, %v904
  %908 = vmatprep.subr.bf16.mxu0 0
  %909 = vmatpush1.bf16.msra.mxu0 %v101
  %910 = vmatprep.subr.bf16.mxu0 0
  %911 = vmatpush1.bf16.msra.mxu0 0
  %912 = vmatprep.subr.bf16.mxu0 0
  %913 = vmatpush1.bf16.msra.mxu0 0
  %914 = vmatprep.subr.bf16.mxu0 0
  %915 = vmatpush1.bf16.msra.mxu0 0
  %916 = vmatprep.subr.bf16.mxu0 0
  %917 = vmatpush1.bf16.msra.mxu0 0
  %918 = vmatprep.subr.bf16.mxu0 0
  %919 = vmatpush1.bf16.msra.mxu0 0
  %920 = vmatprep.subr.bf16.mxu0 0
  %921 = vmatpush1.bf16.msra.mxu0 0
  %922 = vmatprep.subr.bf16.mxu0 0
  %923 = vmatpush1.bf16.msra.mxu0 0
  %924 = vmatprep.subr.bf16.mxu0 0
  %925 = vmatpush1.bf16.msra.mxu0 0
  %926 = vmatprep.subr.bf16.mxu0 0
  %927 = vmatpush1.bf16.msra.mxu0 0
  %928 = vmatprep.subr.bf16.mxu0 0
  %929 = vmatpush1.bf16.msra.mxu0 0
  %930 = vmatprep.subr.bf16.mxu0 0
  %931 = vmatpush1.bf16.msra.mxu0 0
  %932 = vmatprep.subr.bf16.mxu0 0
  %933 = vmatpush1.bf16.msra.mxu0 0
  %934 = vmatprep.subr.bf16.mxu0 0
  %935 = vmatpush1.bf16.msra.mxu0 0
  %936 = vmatprep.subr.bf16.mxu0 0
  %937 = vmatpush1.bf16.msra.mxu0 0
  %938 = vmatprep.subr.bf16.mxu0 0
  %939 = vmatpush1.bf16.msra.mxu0 0
  %940 = vmatprep.mubr.bf16.mxu0 0
  %941 = vmatmul.mubr.bf16.gmra.mrb[0].mxu0 %v834
  %v942 = vpop.f32.mrb[0].mxu0
  %v943 = vadd.f32 %v96, %v942
  %v944 = vpop.f32.mrb[0].mxu0
  %v945 = vpop.f32.mrb[0].mxu0
  %v946 = vpop.f32.mrb[0].mxu0
  %947 = vdwg.mxu0
  %v948 = vpack.c.bf16 %v901, %v901
  %950 = vrot.lane.b32.xlu0 %v948, 112
  %v951 = vpop.permute.xlu0 %950
  %v953 = vsel %vm103, %v951, 0
  %955 = vmatprep.subr.bf16.mxu0 0
  %956 = vmatpush1.bf16.msra.mxu0 %v155
  %957 = vmatprep.subr.bf16.mxu0 0
  %958 = vmatpush1.bf16.msra.mxu0 0
  %959 = vmatprep.subr.bf16.mxu0 0
  %960 = vmatpush1.bf16.msra.mxu0 0
  %961 = vmatprep.subr.bf16.mxu0 0
  %962 = vmatpush1.bf16.msra.mxu0 0
  %963 = vmatprep.subr.bf16.mxu0 0
  %964 = vmatpush1.bf16.msra.mxu0 0
  %965 = vmatprep.subr.bf16.mxu0 0
  %966 = vmatpush1.bf16.msra.mxu0 0
  %967 = vmatprep.subr.bf16.mxu0 0
  %968 = vmatpush1.bf16.msra.mxu0 0
  %969 = vmatprep.subr.bf16.mxu0 0
  %970 = vmatpush1.bf16.msra.mxu0 0
  %971 = vmatprep.subr.bf16.mxu0 0
  %972 = vmatpush1.bf16.msra.mxu0 0
  %973 = vmatprep.subr.bf16.mxu0 0
  %974 = vmatpush1.bf16.msra.mxu0 0
  %975 = vmatprep.subr.bf16.mxu0 0
  %976 = vmatpush1.bf16.msra.mxu0 0
  %977 = vmatprep.subr.bf16.mxu0 0
  %978 = vmatpush1.bf16.msra.mxu0 0
  %979 = vmatprep.subr.bf16.mxu0 0
  %980 = vmatpush1.bf16.msra.mxu0 0
  %981 = vmatprep.subr.bf16.mxu0 0
  %982 = vmatpush1.bf16.msra.mxu0 0
  %983 = vmatprep.subr.bf16.mxu0 0
  %984 = vmatpush1.bf16.msra.mxu0 0
  %985 = vmatprep.subr.bf16.mxu0 0
  %986 = vmatpush1.bf16.msra.mxu0 0
  %987 = vmatprep.mubr.bf16.mxu0 0
  %988 = vmatmul.mubr.bf16.gmra.mrb[0].mxu0 %v953
  %v989 = vpop.f32.mrb[0].mxu0
  %v990 = vadd.f32 %v150, %v989
  %v991 = vpop.f32.mrb[0].mxu0
  %v992 = vpop.f32.mrb[0].mxu0
  %v993 = vpop.f32.mrb[0].mxu0
  %994 = vdwg.mxu0
  %v995 = vadd.f32 %v90, %v943
  %v996 = vxor.u32 %v995, 2147483648
  %v997 = vmul.f32 %v996, 1.442695
  %v998 = vpow.pop %v997
  %v999 = vadd.f32 %v998, 1.0
  %v1000 = vrcp.pop %v999
  %v1001 = vmul.f32 1.0, %v1000
  %1003 = vrot.lane.b32.xlu0 %v943, 96
  %v1004 = vpop.permute.xlu0 %1003
  %v1006 = vmul.f32 %v1001, %v1004
  %1008 = vrot.lane.b32.xlu0 %v1006, 32
  %v1009 = vpop.permute.xlu0 %1008
  %v1011 = vadd.f32 %v90, %v1009
  %v1012 = vtanh.pop %v1011
  %v1013 = vsub.f32 1.0, %v1001
  %1015 = vrot.lane.b32.xlu0 %v1012, 112
  %v1016 = vpop.permute.xlu0 %1015
  %v1018 = vmul.f32 %v1013, %v1016
  %v1020 = vrot.slane %v827, 6
  %v1022 = vmul.f32 %v1001, %v1020
  %v1023 = vadd.f32 %v1018, %v1022
  %v1024 = vpack.c.bf16 %v1023, %v1023
  %1026 = vrot.lane.b32.xlu0 %v1024, 112
  %v1027 = vpop.permute.xlu0 %1026
  %v1029 = vsel %vm103, %v1027, 0
  %1031 = vmatprep.subr.bf16.mxu0 0
  %1032 = vmatpush1.bf16.msra.mxu0 %v235
  %1033 = vmatprep.subr.bf16.mxu0 0
  %1034 = vmatpush1.bf16.msra.mxu0 0
  %1035 = vmatprep.subr.bf16.mxu0 0
  %1036 = vmatpush1.bf16.msra.mxu0 0
  %1037 = vmatprep.subr.bf16.mxu0 0
  %1038 = vmatpush1.bf16.msra.mxu0 0
  %1039 = vmatprep.subr.bf16.mxu0 0
  %1040 = vmatpush1.bf16.msra.mxu0 0
  %1041 = vmatprep.subr.bf16.mxu0 0
  %1042 = vmatpush1.bf16.msra.mxu0 0
  %1043 = vmatprep.subr.bf16.mxu0 0
  %1044 = vmatpush1.bf16.msra.mxu0 0
  %1045 = vmatprep.subr.bf16.mxu0 0
  %1046 = vmatpush1.bf16.msra.mxu0 0
  %1047 = vmatprep.subr.bf16.mxu0 0
  %1048 = vmatpush1.bf16.msra.mxu0 0
  %1049 = vmatprep.subr.bf16.mxu0 0
  %1050 = vmatpush1.bf16.msra.mxu0 0
  %1051 = vmatprep.subr.bf16.mxu0 0
  %1052 = vmatpush1.bf16.msra.mxu0 0
  %1053 = vmatprep.subr.bf16.mxu0 0
  %1054 = vmatpush1.bf16.msra.mxu0 0
  %1055 = vmatprep.subr.bf16.mxu0 0
  %1056 = vmatpush1.bf16.msra.mxu0 0
  %1057 = vmatprep.subr.bf16.mxu0 0
  %1058 = vmatpush1.bf16.msra.mxu0 0
  %1059 = vmatprep.subr.bf16.mxu0 0
  %1060 = vmatpush1.bf16.msra.mxu0 0
  %1061 = vmatprep.subr.bf16.mxu0 0
  %1062 = vmatpush1.bf16.msra.mxu0 0
  %1063 = vmatprep.mubr.bf16.mxu0 0
  %1064 = vmatmul.mubr.bf16.gmra.mrb[0].mxu0 %v1029
  %v1065 = vpop.f32.mrb[0].mxu0
  %v1066 = vadd.f32 %v227, %v1065
  %v1067 = vpop.f32.mrb[0].mxu0
  %v1068 = vpop.f32.mrb[0].mxu0
  %v1069 = vpop.f32.mrb[0].mxu0
  %1070 = vdwg.mxu0
  %v1071 = vadd.f32 %v1066, %v990
  %v1072 = vxor.u32 %v1071, 2147483648
  %v1073 = vmul.f32 %v1072, 1.442695
  %v1074 = vpow.pop %v1073
  %v1075 = vadd.f32 %v1074, 1.0
  %v1076 = vrcp.pop %v1075
  %v1077 = vmul.f32 1.0, %v1076
  %1079 = vrot.lane.b32.xlu0 %v990, 96
  %v1080 = vpop.permute.xlu0 %1079
  %v1082 = vmul.f32 %v1077, %v1080
  %1084 = vrot.lane.b32.xlu0 %v1082, 32
  %v1085 = vpop.permute.xlu0 %1084
  %v1087 = vadd.f32 %v1066, %v1085
  %v1088 = vtanh.pop %v1087
  %v1089 = vsub.f32 1.0, %v1077
  %1091 = vrot.lane.b32.xlu0 %v1088, 112
  %v1092 = vpop.permute.xlu0 %1091
  %v1094 = vmul.f32 %v1089, %v1092
  %v1095 = vmul.f32 %v1077, %v901
  %v1096 = vadd.f32 %v1094, %v1095
  %1098 = vrot.lane.b32.xlu0 %v1096, 112
  %v1099 = vpop.permute.xlu0 %1098
  %1101 = vst.msk [vmem:[#allocation2 + $0x4] sm:$0x1] %vm310, %v1099
  %1102 = vst.msk [vmem:[#allocation2 + $0xb] sm:$0x2] %vm312, %v1099
  %1103 = vmatprep.subr.bf16.mxu0 0
  %1104 = vmatpush1.bf16.msra.mxu0 %v101
  %1105 = vmatprep.subr.bf16.mxu0 0
  %1106 = vmatpush1.bf16.msra.mxu0 0
  %1107 = vmatprep.subr.bf16.mxu0 0
  %1108 = vmatpush1.bf16.msra.mxu0 0
  %1109 = vmatprep.subr.bf16.mxu0 0
  %1110 = vmatpush1.bf16.msra.mxu0 0
  %1111 = vmatprep.subr.bf16.mxu0 0
  %1112 = vmatpush1.bf16.msra.mxu0 0
  %1113 = vmatprep.subr.bf16.mxu0 0
  %1114 = vmatpush1.bf16.msra.mxu0 0
  %1115 = vmatprep.subr.bf16.mxu0 0
  %1116 = vmatpush1.bf16.msra.mxu0 0
  %1117 = vmatprep.subr.bf16.mxu0 0
  %1118 = vmatpush1.bf16.msra.mxu0 0
  %1119 = vmatprep.subr.bf16.mxu0 0
  %1120 = vmatpush1.bf16.msra.mxu0 0
  %1121 = vmatprep.subr.bf16.mxu0 0
  %1122 = vmatpush1.bf16.msra.mxu0 0
  %1123 = vmatprep.subr.bf16.mxu0 0
  %1124 = vmatpush1.bf16.msra.mxu0 0
  %1125 = vmatprep.subr.bf16.mxu0 0
  %1126 = vmatpush1.bf16.msra.mxu0 0
  %1127 = vmatprep.subr.bf16.mxu0 0
  %1128 = vmatpush1.bf16.msra.mxu0 0
  %1129 = vmatprep.subr.bf16.mxu0 0
  %1130 = vmatpush1.bf16.msra.mxu0 0
  %1131 = vmatprep.subr.bf16.mxu0 0
  %1132 = vmatpush1.bf16.msra.mxu0 0
  %1133 = vmatprep.subr.bf16.mxu0 0
  %1134 = vmatpush1.bf16.msra.mxu0 0
  %1135 = vmatprep.mubr.bf16.mxu0 0
  %1136 = vmatmul.mubr.bf16.gmra.mrb[0].mxu0 %v1029
  %v1137 = vpop.f32.mrb[0].mxu0
  %v1138 = vadd.f32 %v96, %v1137
  %v1139 = vpop.f32.mrb[0].mxu0
  %v1140 = vpop.f32.mrb[0].mxu0
  %v1141 = vpop.f32.mrb[0].mxu0
  %1142 = vdwg.mxu0
  %v1143 = vpack.c.bf16 %v1096, %v1096
  %1145 = vrot.lane.b32.xlu0 %v1143, 112
  %v1146 = vpop.permute.xlu0 %1145
  %v1148 = vsel %vm103, %v1146, 0
  %1150 = vmatprep.subr.bf16.mxu0 0
  %1151 = vmatpush1.bf16.msra.mxu0 %v155
  %1152 = vmatprep.subr.bf16.mxu0 0
  %1153 = vmatpush1.bf16.msra.mxu0 0
  %1154 = vmatprep.subr.bf16.mxu0 0
  %1155 = vmatpush1.bf16.msra.mxu0 0
  %1156 = vmatprep.subr.bf16.mxu0 0
  %1157 = vmatpush1.bf16.msra.mxu0 0
  %1158 = vmatprep.subr.bf16.mxu0 0
  %1159 = vmatpush1.bf16.msra.mxu0 0
  %1160 = vmatprep.subr.bf16.mxu0 0
  %1161 = vmatpush1.bf16.msra.mxu0 0
  %1162 = vmatprep.subr.bf16.mxu0 0
  %1163 = vmatpush1.bf16.msra.mxu0 0
  %1164 = vmatprep.subr.bf16.mxu0 0
  %1165 = vmatpush1.bf16.msra.mxu0 0
  %1166 = vmatprep.subr.bf16.mxu0 0
  %1167 = vmatpush1.bf16.msra.mxu0 0
  %1168 = vmatprep.subr.bf16.mxu0 0
  %1169 = vmatpush1.bf16.msra.mxu0 0
  %1170 = vmatprep.subr.bf16.mxu0 0
  %1171 = vmatpush1.bf16.msra.mxu0 0
  %1172 = vmatprep.subr.bf16.mxu0 0
  %1173 = vmatpush1.bf16.msra.mxu0 0
  %1174 = vmatprep.subr.bf16.mxu0 0
  %1175 = vmatpush1.bf16.msra.mxu0 0
  %1176 = vmatprep.subr.bf16.mxu0 0
  %1177 = vmatpush1.bf16.msra.mxu0 0
  %1178 = vmatprep.subr.bf16.mxu0 0
  %1179 = vmatpush1.bf16.msra.mxu0 0
  %1180 = vmatprep.subr.bf16.mxu0 0
  %1181 = vmatpush1.bf16.msra.mxu0 0
  %1182 = vmatprep.mubr.bf16.mxu0 0
  %1183 = vmatmul.mubr.bf16.gmra.mrb[0].mxu0 %v1148
  %v1184 = vpop.f32.mrb[0].mxu0
  %v1185 = vadd.f32 %v150, %v1184
  %v1186 = vpop.f32.mrb[0].mxu0
  %v1187 = vpop.f32.mrb[0].mxu0
  %v1188 = vpop.f32.mrb[0].mxu0
  %1189 = vdwg.mxu0
  %v1191 = vrot.slane %v1138, 6
  %v1193 = vadd.f32 %v90, %v1191
  %v1194 = vxor.u32 %v1193, 2147483648
  %v1195 = vmul.f32 %v1194, 1.442695
  %v1196 = vpow.pop %v1195
  %v1197 = vadd.f32 %v1196, 1.0
  %v1198 = vrcp.pop %v1197
  %v1199 = vmul.f32 1.0, %v1198
  %1200 = vrot.lane.b32.xlu0 %v1191, 96
  %v1201 = vpop.permute.xlu0 %1200
  %v1203 = vmul.f32 %v1199, %v1201
  %1205 = vrot.lane.b32.xlu0 %v1203, 32
  %v1206 = vpop.permute.xlu0 %1205
  %v1208 = vadd.f32 %v90, %v1206
  %v1209 = vtanh.pop %v1208
  %v1210 = vsub.f32 1.0, %v1199
  %1212 = vrot.lane.b32.xlu0 %v1209, 112
  %v1213 = vpop.permute.xlu0 %1212
  %v1215 = vmul.f32 %v1210, %v1213
  %v1217 = vrot.slane %v1023, 6
  %v1219 = vmul.f32 %v1199, %v1217
  %v1220 = vadd.f32 %v1215, %v1219
  %v1221 = vpack.c.bf16 %v1220, %v1220
  %v1223 = vrot.slane %v1221, 1
  %1224 = vrot.lane.b32.xlu0 %v1223, 112
  %v1225 = vpop.permute.xlu0 %1224
  %v1227 = vsel %vm103, %v1225, 0
  %1229 = vmatprep.subr.bf16.mxu0 0
  %1230 = vmatpush1.bf16.msra.mxu0 %v235
  %1231 = vmatprep.subr.bf16.mxu0 0
  %1232 = vmatpush1.bf16.msra.mxu0 0
  %1233 = vmatprep.subr.bf16.mxu0 0
  %1234 = vmatpush1.bf16.msra.mxu0 0
  %1235 = vmatprep.subr.bf16.mxu0 0
  %1236 = vmatpush1.bf16.msra.mxu0 0
  %1237 = vmatprep.subr.bf16.mxu0 0
  %1238 = vmatpush1.bf16.msra.mxu0 0
  %1239 = vmatprep.subr.bf16.mxu0 0
  %1240 = vmatpush1.bf16.msra.mxu0 0
  %1241 = vmatprep.subr.bf16.mxu0 0
  %1242 = vmatpush1.bf16.msra.mxu0 0
  %1243 = vmatprep.subr.bf16.mxu0 0
  %1244 = vmatpush1.bf16.msra.mxu0 0
  %1245 = vmatprep.subr.bf16.mxu0 0
  %1246 = vmatpush1.bf16.msra.mxu0 0
  %1247 = vmatprep.subr.bf16.mxu0 0
  %1248 = vmatpush1.bf16.msra.mxu0 0
  %1249 = vmatprep.subr.bf16.mxu0 0
  %1250 = vmatpush1.bf16.msra.mxu0 0
  %1251 = vmatprep.subr.bf16.mxu0 0
  %1252 = vmatpush1.bf16.msra.mxu0 0
  %1253 = vmatprep.subr.bf16.mxu0 0
  %1254 = vmatpush1.bf16.msra.mxu0 0
  %1255 = vmatprep.subr.bf16.mxu0 0
  %1256 = vmatpush1.bf16.msra.mxu0 0
  %1257 = vmatprep.subr.bf16.mxu0 0
  %1258 = vmatpush1.bf16.msra.mxu0 0
  %1259 = vmatprep.subr.bf16.mxu0 0
  %1260 = vmatpush1.bf16.msra.mxu0 0
  %1261 = vmatprep.mubr.bf16.mxu0 0
  %1262 = vmatmul.mubr.bf16.gmra.mrb[0].mxu0 %v1227
  %v1263 = vpop.f32.mrb[0].mxu0
  %v1264 = vadd.f32 %v227, %v1263
  %v1265 = vpop.f32.mrb[0].mxu0
  %v1266 = vpop.f32.mrb[0].mxu0
  %v1267 = vpop.f32.mrb[0].mxu0
  %1268 = vdwg.mxu0
  %v1269 = vadd.f32 %v1264, %v1185
  %v1270 = vxor.u32 %v1269, 2147483648
  %v1271 = vmul.f32 %v1270, 1.442695
  %v1272 = vpow.pop %v1271
  %v1273 = vadd.f32 %v1272, 1.0
  %v1274 = vrcp.pop %v1273
  %v1275 = vmul.f32 1.0, %v1274
  %1277 = vrot.lane.b32.xlu0 %v1185, 96
  %v1278 = vpop.permute.xlu0 %1277
  %v1280 = vmul.f32 %v1275, %v1278
  %1282 = vrot.lane.b32.xlu0 %v1280, 32
  %v1283 = vpop.permute.xlu0 %1282
  %v1285 = vadd.f32 %v1264, %v1283
  %v1286 = vtanh.pop %v1285
  %v1287 = vsub.f32 1.0, %v1275
  %1289 = vrot.lane.b32.xlu0 %v1286, 112
  %v1290 = vpop.permute.xlu0 %1289
  %v1292 = vmul.f32 %v1287, %v1290
  %v1293 = vmul.f32 %v1275, %v1096
  %v1294 = vadd.f32 %v1292, %v1293
  %1296 = vrot.lane.b32.xlu0 %v1294, 112
  %v1297 = vpop.permute.xlu0 %1296
  %1299 = vst.msk [vmem:[#allocation2 + $0x5] sm:$0x1] %vm310, %v1297
  %1300 = vst.msk [vmem:[#allocation2 + $0xc] sm:$0x2] %vm312, %v1297
  %1301 = vmatprep.subr.bf16.mxu0 0
  %1302 = vmatpush1.bf16.msra.mxu0 %v101
  %1303 = vmatprep.subr.bf16.mxu0 0
  %1304 = vmatpush1.bf16.msra.mxu0 0
  %1305 = vmatprep.subr.bf16.mxu0 0
  %1306 = vmatpush1.bf16.msra.mxu0 0
  %1307 = vmatprep.subr.bf16.mxu0 0
  %1308 = vmatpush1.bf16.msra.mxu0 0
  %1309 = vmatprep.subr.bf16.mxu0 0
  %1310 = vmatpush1.bf16.msra.mxu0 0
  %1311 = vmatprep.subr.bf16.mxu0 0
  %1312 = vmatpush1.bf16.msra.mxu0 0
  %1313 = vmatprep.subr.bf16.mxu0 0
  %1314 = vmatpush1.bf16.msra.mxu0 0
  %1315 = vmatprep.subr.bf16.mxu0 0
  %1316 = vmatpush1.bf16.msra.mxu0 0
  %1317 = vmatprep.subr.bf16.mxu0 0
  %1318 = vmatpush1.bf16.msra.mxu0 0
  %1319 = vmatprep.subr.bf16.mxu0 0
  %1320 = vmatpush1.bf16.msra.mxu0 0
  %1321 = vmatprep.subr.bf16.mxu0 0
  %1322 = vmatpush1.bf16.msra.mxu0 0
  %1323 = vmatprep.subr.bf16.mxu0 0
  %1324 = vmatpush1.bf16.msra.mxu0 0
  %1325 = vmatprep.subr.bf16.mxu0 0
  %1326 = vmatpush1.bf16.msra.mxu0 0
  %1327 = vmatprep.subr.bf16.mxu0 0
  %1328 = vmatpush1.bf16.msra.mxu0 0
  %1329 = vmatprep.subr.bf16.mxu0 0
  %1330 = vmatpush1.bf16.msra.mxu0 0
  %1331 = vmatprep.subr.bf16.mxu0 0
  %1332 = vmatpush1.bf16.msra.mxu0 0
  %1333 = vmatprep.mubr.bf16.mxu0 0
  %1334 = vmatmul.mubr.bf16.gmra.mrb[0].mxu0 %v1227
  %v1335 = vpop.f32.mrb[0].mxu0
  %v1336 = vadd.f32 %v96, %v1335
  %v1337 = vpop.f32.mrb[0].mxu0
  %v1338 = vpop.f32.mrb[0].mxu0
  %v1339 = vpop.f32.mrb[0].mxu0
  %1340 = vdwg.mxu0
  %v1341 = vpack.c.bf16 %v1294, %v1294
  %1343 = vrot.lane.b32.xlu0 %v1341, 112
  %v1344 = vpop.permute.xlu0 %1343
  %v1346 = vsel %vm103, %v1344, 0
  %1348 = vmatprep.subr.bf16.mxu0 0
  %1349 = vmatpush1.bf16.msra.mxu0 %v155
  %1350 = vmatprep.subr.bf16.mxu0 0
  %1351 = vmatpush1.bf16.msra.mxu0 0
  %1352 = vmatprep.subr.bf16.mxu0 0
  %1353 = vmatpush1.bf16.msra.mxu0 0
  %1354 = vmatprep.subr.bf16.mxu0 0
  %1355 = vmatpush1.bf16.msra.mxu0 0
  %1356 = vmatprep.subr.bf16.mxu0 0
  %1357 = vmatpush1.bf16.msra.mxu0 0
  %1358 = vmatprep.subr.bf16.mxu0 0
  %1359 = vmatpush1.bf16.msra.mxu0 0
  %1360 = vmatprep.subr.bf16.mxu0 0
  %1361 = vmatpush1.bf16.msra.mxu0 0
  %1362 = vmatprep.subr.bf16.mxu0 0
  %1363 = vmatpush1.bf16.msra.mxu0 0
  %1364 = vmatprep.subr.bf16.mxu0 0
  %1365 = vmatpush1.bf16.msra.mxu0 0
  %1366 = vmatprep.subr.bf16.mxu0 0
  %1367 = vmatpush1.bf16.msra.mxu0 0
  %1368 = vmatprep.subr.bf16.mxu0 0
  %1369 = vmatpush1.bf16.msra.mxu0 0
  %1370 = vmatprep.subr.bf16.mxu0 0
  %1371 = vmatpush1.bf16.msra.mxu0 0
  %1372 = vmatprep.subr.bf16.mxu0 0
  %1373 = vmatpush1.bf16.msra.mxu0 0
  %1374 = vmatprep.subr.bf16.mxu0 0
  %1375 = vmatpush1.bf16.msra.mxu0 0
  %1376 = vmatprep.subr.bf16.mxu0 0
  %1377 = vmatpush1.bf16.msra.mxu0 0
  %1378 = vmatprep.subr.bf16.mxu0 0
  %1379 = vmatpush1.bf16.msra.mxu0 0
  %1380 = vmatprep.mubr.bf16.mxu0 0
  %1381 = vmatmul.mubr.bf16.gmra.mrb[0].mxu0 %v1346
  %v1382 = vpop.f32.mrb[0].mxu0
  %v1383 = vadd.f32 %v150, %v1382
  %v1384 = vpop.f32.mrb[0].mxu0
  %v1385 = vpop.f32.mrb[0].mxu0
  %v1386 = vpop.f32.mrb[0].mxu0
  %1387 = vdwg.mxu0
  %v1389 = vrot.slane %v1336, 4
  %v1391 = vadd.f32 %v90, %v1389
  %v1392 = vxor.u32 %v1391, 2147483648
  %v1393 = vmul.f32 %v1392, 1.442695
  %v1394 = vpow.pop %v1393
  %v1395 = vadd.f32 %v1394, 1.0
  %v1396 = vrcp.pop %v1395
  %v1397 = vmul.f32 1.0, %v1396
  %1398 = vrot.lane.b32.xlu0 %v1389, 96
  %v1399 = vpop.permute.xlu0 %1398
  %v1401 = vmul.f32 %v1397, %v1399
  %1403 = vrot.lane.b32.xlu0 %v1401, 32
  %v1404 = vpop.permute.xlu0 %1403
  %v1406 = vadd.f32 %v90, %v1404
  %v1407 = vtanh.pop %v1406
  %v1408 = vsub.f32 1.0, %v1397
  %1410 = vrot.lane.b32.xlu0 %v1407, 112
  %v1411 = vpop.permute.xlu0 %1410
  %v1413 = vmul.f32 %v1408, %v1411
  %v1415 = vrot.slane %v1220, 6
  %v1417 = vmul.f32 %v1397, %v1415
  %v1418 = vadd.f32 %v1413, %v1417
  %v1419 = vpack.c.bf16 %v1418, %v1418
  %v1421 = vrot.slane %v1419, 2
  %1422 = vrot.lane.b32.xlu0 %v1421, 112
  %v1423 = vpop.permute.xlu0 %1422
  %v1425 = vsel %vm103, %v1423, 0
  %1427 = vmatprep.subr.bf16.mxu0 0
  %1428 = vmatpush1.bf16.msra.mxu0 %v235
  %1429 = vmatprep.subr.bf16.mxu0 0
  %1430 = vmatpush1.bf16.msra.mxu0 0
  %1431 = vmatprep.subr.bf16.mxu0 0
  %1432 = vmatpush1.bf16.msra.mxu0 0
  %1433 = vmatprep.subr.bf16.mxu0 0
  %1434 = vmatpush1.bf16.msra.mxu0 0
  %1435 = vmatprep.subr.bf16.mxu0 0
  %1436 = vmatpush1.bf16.msra.mxu0 0
  %1437 = vmatprep.subr.bf16.mxu0 0
  %1438 = vmatpush1.bf16.msra.mxu0 0
  %1439 = vmatprep.subr.bf16.mxu0 0
  %1440 = vmatpush1.bf16.msra.mxu0 0
  %1441 = vmatprep.subr.bf16.mxu0 0
  %1442 = vmatpush1.bf16.msra.mxu0 0
  %1443 = vmatprep.subr.bf16.mxu0 0
  %1444 = vmatpush1.bf16.msra.mxu0 0
  %1445 = vmatprep.subr.bf16.mxu0 0
  %1446 = vmatpush1.bf16.msra.mxu0 0
  %1447 = vmatprep.subr.bf16.mxu0 0
  %1448 = vmatpush1.bf16.msra.mxu0 0
  %1449 = vmatprep.subr.bf16.mxu0 0
  %1450 = vmatpush1.bf16.msra.mxu0 0
  %1451 = vmatprep.subr.bf16.mxu0 0
  %1452 = vmatpush1.bf16.msra.mxu0 0
  %1453 = vmatprep.subr.bf16.mxu0 0
  %1454 = vmatpush1.bf16.msra.mxu0 0
  %1455 = vmatprep.subr.bf16.mxu0 0
  %1456 = vmatpush1.bf16.msra.mxu0 0
  %1457 = vmatprep.subr.bf16.mxu0 0
  %1458 = vmatpush1.bf16.msra.mxu0 0
  %1459 = vmatprep.mubr.bf16.mxu0 0
  %1460 = vmatmul.mubr.bf16.gmra.mrb[0].mxu0 %v1425
  %v1461 = vpop.f32.mrb[0].mxu0
  %v1462 = vadd.f32 %v227, %v1461
  %v1463 = vpop.f32.mrb[0].mxu0
  %v1464 = vpop.f32.mrb[0].mxu0
  %v1465 = vpop.f32.mrb[0].mxu0
  %1466 = vdwg.mxu0
  %v1467 = vadd.f32 %v1462, %v1383
  %v1468 = vxor.u32 %v1467, 2147483648
  %v1469 = vmul.f32 %v1468, 1.442695
  %v1470 = vpow.pop %v1469
  %v1471 = vadd.f32 %v1470, 1.0
  %v1472 = vrcp.pop %v1471
  %v1473 = vmul.f32 1.0, %v1472
  %1475 = vrot.lane.b32.xlu0 %v1383, 96
  %v1476 = vpop.permute.xlu0 %1475
  %v1478 = vmul.f32 %v1473, %v1476
  %1480 = vrot.lane.b32.xlu0 %v1478, 32
  %v1481 = vpop.permute.xlu0 %1480
  %v1483 = vadd.f32 %v1462, %v1481
  %v1484 = vtanh.pop %v1483
  %v1485 = vsub.f32 1.0, %v1473
  %1487 = vrot.lane.b32.xlu0 %v1484, 112
  %v1488 = vpop.permute.xlu0 %1487
  %v1490 = vmul.f32 %v1485, %v1488
  %v1491 = vmul.f32 %v1473, %v1294
  %v1492 = vadd.f32 %v1490, %v1491
  %1494 = vrot.lane.b32.xlu0 %v1492, 112
  %v1495 = vpop.permute.xlu0 %1494
  %1497 = vst.msk [vmem:[#allocation2 + $0x6] sm:$0x1] %vm310, %v1495
  %1498 = vst.msk [vmem:[#allocation2 + $0xd] sm:$0x2] %vm312, %v1495
  %1499 = vmatprep.subr.bf16.mxu0 0
  %1500 = vmatpush1.bf16.msra.mxu0 %v101
  %1501 = vmatprep.subr.bf16.mxu0 0
  %1502 = vmatpush1.bf16.msra.mxu0 0
  %1503 = vmatprep.subr.bf16.mxu0 0
  %1504 = vmatpush1.bf16.msra.mxu0 0
  %1505 = vmatprep.subr.bf16.mxu0 0
  %1506 = vmatpush1.bf16.msra.mxu0 0
  %1507 = vmatprep.subr.bf16.mxu0 0
  %1508 = vmatpush1.bf16.msra.mxu0 0
  %1509 = vmatprep.subr.bf16.mxu0 0
  %1510 = vmatpush1.bf16.msra.mxu0 0
  %1511 = vmatprep.subr.bf16.mxu0 0
  %1512 = vmatpush1.bf16.msra.mxu0 0
  %1513 = vmatprep.subr.bf16.mxu0 0
  %1514 = vmatpush1.bf16.msra.mxu0 0
  %1515 = vmatprep.subr.bf16.mxu0 0
  %1516 = vmatpush1.bf16.msra.mxu0 0
  %1517 = vmatprep.subr.bf16.mxu0 0
  %1518 = vmatpush1.bf16.msra.mxu0 0
  %1519 = vmatprep.subr.bf16.mxu0 0
  %1520 = vmatpush1.bf16.msra.mxu0 0
  %1521 = vmatprep.subr.bf16.mxu0 0
  %1522 = vmatpush1.bf16.msra.mxu0 0
  %1523 = vmatprep.subr.bf16.mxu0 0
  %1524 = vmatpush1.bf16.msra.mxu0 0
  %1525 = vmatprep.subr.bf16.mxu0 0
  %1526 = vmatpush1.bf16.msra.mxu0 0
  %1527 = vmatprep.subr.bf16.mxu0 0
  %1528 = vmatpush1.bf16.msra.mxu0 0
  %1529 = vmatprep.subr.bf16.mxu0 0
  %1530 = vmatpush1.bf16.msra.mxu0 0
  %1531 = vmatprep.mubr.bf16.mxu0 0
  %1532 = vmatmul.mubr.bf16.gmra.mrb[0].mxu0 %v1425
  %v1533 = vpop.f32.mrb[0].mxu0
  %v1534 = vadd.f32 %v96, %v1533
  %v1535 = vpop.f32.mrb[0].mxu0
  %v1536 = vpop.f32.mrb[0].mxu0
  %v1537 = vpop.f32.mrb[0].mxu0
  %1538 = vdwg.mxu0
  %v1539 = vpack.c.bf16 %v1492, %v1492
  %1541 = vrot.lane.b32.xlu0 %v1539, 112
  %v1542 = vpop.permute.xlu0 %1541
  %v1544 = vsel %vm103, %v1542, 0
  %1546 = vmatprep.subr.bf16.mxu0 0
  %1547 = vmatpush1.bf16.msra.mxu0 %v155
  %1548 = vmatprep.subr.bf16.mxu0 0
  %1549 = vmatpush1.bf16.msra.mxu0 0
  %1550 = vmatprep.subr.bf16.mxu0 0
  %1551 = vmatpush1.bf16.msra.mxu0 0
  %1552 = vmatprep.subr.bf16.mxu0 0
  %1553 = vmatpush1.bf16.msra.mxu0 0
  %1554 = vmatprep.subr.bf16.mxu0 0
  %1555 = vmatpush1.bf16.msra.mxu0 0
  %1556 = vmatprep.subr.bf16.mxu0 0
  %1557 = vmatpush1.bf16.msra.mxu0 0
  %1558 = vmatprep.subr.bf16.mxu0 0
  %1559 = vmatpush1.bf16.msra.mxu0 0
  %1560 = vmatprep.subr.bf16.mxu0 0
  %1561 = vmatpush1.bf16.msra.mxu0 0
  %1562 = vmatprep.subr.bf16.mxu0 0
  %1563 = vmatpush1.bf16.msra.mxu0 0
  %1564 = vmatprep.subr.bf16.mxu0 0
  %1565 = vmatpush1.bf16.msra.mxu0 0
  %1566 = vmatprep.subr.bf16.mxu0 0
  %1567 = vmatpush1.bf16.msra.mxu0 0
  %1568 = vmatprep.subr.bf16.mxu0 0
  %1569 = vmatpush1.bf16.msra.mxu0 0
  %1570 = vmatprep.subr.bf16.mxu0 0
  %1571 = vmatpush1.bf16.msra.mxu0 0
  %1572 = vmatprep.subr.bf16.mxu0 0
  %1573 = vmatpush1.bf16.msra.mxu0 0
  %1574 = vmatprep.subr.bf16.mxu0 0
  %1575 = vmatpush1.bf16.msra.mxu0 0
  %1576 = vmatprep.subr.bf16.mxu0 0
  %1577 = vmatpush1.bf16.msra.mxu0 0
  %1578 = vmatprep.mubr.bf16.mxu0 0
  %1579 = vmatmul.mubr.bf16.gmra.mrb[0].mxu0 %v1544
  %v1580 = vpop.f32.mrb[0].mxu0
  %v1581 = vadd.f32 %v150, %v1580
  %v1582 = vpop.f32.mrb[0].mxu0
  %v1583 = vpop.f32.mrb[0].mxu0
  %v1584 = vpop.f32.mrb[0].mxu0
  %1585 = vdwg.mxu0
  %v1587 = vrot.slane %v1534, 2
  %v1589 = vadd.f32 %v90, %v1587
  %v1590 = vxor.u32 %v1589, 2147483648
  %v1591 = vmul.f32 %v1590, 1.442695
  %v1592 = vpow.pop %v1591
  %v1593 = vadd.f32 %v1592, 1.0
  %v1594 = vrcp.pop %v1593
  %v1595 = vmul.f32 1.0, %v1594
  %1596 = vrot.lane.b32.xlu0 %v1587, 96
  %v1597 = vpop.permute.xlu0 %1596
  %v1599 = vmul.f32 %v1595, %v1597
  %1601 = vrot.lane.b32.xlu0 %v1599, 32
  %v1602 = vpop.permute.xlu0 %1601
  %v1604 = vadd.f32 %v90, %v1602
  %v1605 = vtanh.pop %v1604
  %v1606 = vsub.f32 1.0, %v1595
  %1608 = vrot.lane.b32.xlu0 %v1605, 112
  %v1609 = vpop.permute.xlu0 %1608
  %v1611 = vmul.f32 %v1606, %v1609
  %v1613 = vrot.slane %v1418, 6
  %v1615 = vmul.f32 %v1595, %v1613
  %v1616 = vadd.f32 %v1611, %v1615
  %v1617 = vpack.c.bf16 %v1616, %v1616
  %v1619 = vrot.slane %v1617, 3
  %1620 = vrot.lane.b32.xlu0 %v1619, 112
  %v1621 = vpop.permute.xlu0 %1620
  %v1623 = vsel %vm103, %v1621, 0
  %1625 = vmatprep.subr.bf16.mxu0 0
  %1626 = vmatpush1.bf16.msra.mxu0 %v235
  %1627 = vmatprep.subr.bf16.mxu0 0
  %1628 = vmatpush1.bf16.msra.mxu0 0
  %1629 = vmatprep.subr.bf16.mxu0 0
  %1630 = vmatpush1.bf16.msra.mxu0 0
  %1631 = vmatprep.subr.bf16.mxu0 0
  %1632 = vmatpush1.bf16.msra.mxu0 0
  %1633 = vmatprep.subr.bf16.mxu0 0
  %1634 = vmatpush1.bf16.msra.mxu0 0
  %1635 = vmatprep.subr.bf16.mxu0 0
  %1636 = vmatpush1.bf16.msra.mxu0 0
  %1637 = vmatprep.subr.bf16.mxu0 0
  %1638 = vmatpush1.bf16.msra.mxu0 0
  %1639 = vmatprep.subr.bf16.mxu0 0
  %1640 = vmatpush1.bf16.msra.mxu0 0
  %1641 = vmatprep.subr.bf16.mxu0 0
  %1642 = vmatpush1.bf16.msra.mxu0 0
  %1643 = vmatprep.subr.bf16.mxu0 0
  %1644 = vmatpush1.bf16.msra.mxu0 0
  %1645 = vmatprep.subr.bf16.mxu0 0
  %1646 = vmatpush1.bf16.msra.mxu0 0
  %1647 = vmatprep.subr.bf16.mxu0 0
  %1648 = vmatpush1.bf16.msra.mxu0 0
  %1649 = vmatprep.subr.bf16.mxu0 0
  %1650 = vmatpush1.bf16.msra.mxu0 0
  %1651 = vmatprep.subr.bf16.mxu0 0
  %1652 = vmatpush1.bf16.msra.mxu0 0
  %1653 = vmatprep.subr.bf16.mxu0 0
  %1654 = vmatpush1.bf16.msra.mxu0 0
  %1655 = vmatprep.subr.bf16.mxu0 0
  %1656 = vmatpush1.bf16.msra.mxu0 0
  %1657 = vmatprep.mubr.bf16.mxu0 0
  %1658 = vmatmul.mubr.bf16.gmra.mrb[0].mxu0 %v1623
  %v1659 = vpop.f32.mrb[0].mxu0
  %v1660 = vadd.f32 %v227, %v1659
  %v1661 = vpop.f32.mrb[0].mxu0
  %v1662 = vpop.f32.mrb[0].mxu0
  %v1663 = vpop.f32.mrb[0].mxu0
  %1664 = vdwg.mxu0
  %v1665 = vadd.f32 %v1660, %v1581
  %v1666 = vxor.u32 %v1665, 2147483648
  %v1667 = vmul.f32 %v1666, 1.442695
  %v1668 = vpow.pop %v1667
  %v1669 = vadd.f32 %v1668, 1.0
  %v1670 = vrcp.pop %v1669
  %v1671 = vmul.f32 1.0, %v1670
  %1673 = vrot.lane.b32.xlu0 %v1581, 96
  %v1674 = vpop.permute.xlu0 %1673
  %v1676 = vmul.f32 %v1671, %v1674
  %1678 = vrot.lane.b32.xlu0 %v1676, 32
  %v1679 = vpop.permute.xlu0 %1678
  %v1681 = vadd.f32 %v1660, %v1679
  %v1682 = vtanh.pop %v1681
  %v1683 = vsub.f32 1.0, %v1671
  %1685 = vrot.lane.b32.xlu0 %v1682, 112
  %v1686 = vpop.permute.xlu0 %1685
  %v1688 = vmul.f32 %v1683, %v1686
  %v1689 = vmul.f32 %v1671, %v1492
  %v1690 = vadd.f32 %v1688, %v1689
  %1692 = vrot.lane.b32.xlu0 %v1690, 112
  %v1693 = vpop.permute.xlu0 %1692
  %1695 = vst.msk [vmem:[#allocation2 + $0x7] sm:$0x1] %vm310, %v1693
  %1696 = vst.msk [vmem:[#allocation2 + $0xe] sm:$0x2] %vm312, %v1693
  %v1697 = vld [vmem:[#allocation2] sm:$0xff]
  %v1698 = vld [vmem:[#allocation2 + $0x8] sm:$0xff]
  %v1699 = vld [vmem:[%s2 + $0xc] sm:$0xff]
  %v1700 = vld [vmem:[%s2 + $0x14] sm:$0xff]
  %v1701 = vadd.f32 %v1697, %v1699
  %v1702 = vadd.f32 %v1698, %v1700
  %v1703 = vld [vmem:[%s1 + $0x28] sm:$0xf]
  %v1704 = vld [vmem:[%s1 + $0x2c] sm:$0xf]
  %v1705 = vld [vmem:[%s2 + $0x4] sm:$0x1]
  %v1706 = vpack.c.bf16 %v1702, %v1701
  %v1707 = vlaneseq
  %v1708 = vshrl.u32 %v1707, 7
  %v1709 = vsub.s32 0, %v1708
  %v1710 = vrot.slane %v1705, %v1709
  %v1713 = vunpack.c.l.b16 %v1703
  %v1714 = vunpack.c.l.b16 %v1704
  %v1715 = vpack.c.b16 %v1714, %v1713
  %v1718 = vsel %vm103, %v1706, 0
  %1720 = vmatprep.subr.bf16.mxu0 0
  %1721 = vmatpush1.bf16.msra.mxu0 %v1715
  %1722 = vmatprep.subr.bf16.mxu0 0
  %1723 = vmatpush1.bf16.msra.mxu0 0
  %1724 = vmatprep.subr.bf16.mxu0 0
  %1725 = vmatpush1.bf16.msra.mxu0 0
  %1726 = vmatprep.subr.bf16.mxu0 0
  %1727 = vmatpush1.bf16.msra.mxu0 0
  %1728 = vmatprep.subr.bf16.mxu0 0
  %1729 = vmatpush1.bf16.msra.mxu0 0
  %1730 = vmatprep.subr.bf16.mxu0 0
  %1731 = vmatpush1.bf16.msra.mxu0 0
  %1732 = vmatprep.subr.bf16.mxu0 0
  %1733 = vmatpush1.bf16.msra.mxu0 0
  %1734 = vmatprep.subr.bf16.mxu0 0
  %1735 = vmatpush1.bf16.msra.mxu0 0
  %1736 = vmatprep.subr.bf16.mxu0 0
  %1737 = vmatpush1.bf16.msra.mxu0 0
  %1738 = vmatprep.subr.bf16.mxu0 0
  %1739 = vmatpush1.bf16.msra.mxu0 0
  %1740 = vmatprep.subr.bf16.mxu0 0
  %1741 = vmatpush1.bf16.msra.mxu0 0
  %1742 = vmatprep.subr.bf16.mxu0 0
  %1743 = vmatpush1.bf16.msra.mxu0 0
  %1744 = vmatprep.subr.bf16.mxu0 0
  %1745 = vmatpush1.bf16.msra.mxu0 0
  %1746 = vmatprep.subr.bf16.mxu0 0
  %1747 = vmatpush1.bf16.msra.mxu0 0
  %1748 = vmatprep.subr.bf16.mxu0 0
  %1749 = vmatpush1.bf16.msra.mxu0 0
  %1750 = vmatprep.subr.bf16.mxu0 0
  %1751 = vmatpush1.bf16.msra.mxu0 0
  %1752 = vmatprep.mubr.bf16.mxu0 0
  %1753 = vmatmul.mubr.bf16.gmra.mrb[0].mxu0 %v1718
  %v1754 = vpop.f32.mrb[0].mxu0
  %v1755 = vadd.f32 %v1710, %v1754
  %v1756 = vpop.f32.mrb[0].mxu0
  %v1757 = vpop.f32.mrb[0].mxu0
  %v1758 = vadd.f32 %v1710, %v1757
  %v1759 = vpop.f32.mrb[0].mxu0
  %1760 = vdwg.mxu0
  %v1761 = vpack.c.bf16 %v1755, %v1755
  %v1762 = vpack.c.bf16 %v1758, %v1758
  %v1763 = vlaneseq
  %v1764 = vshrl.u32 %v1763, 7
  %v1765 = vlaneseq
  %v1766 = vand.u32 %v1765, 127
  %vm1767 = vcmp.le.s32.totalorder %v1766, %v1764
  %v1768 = vsel %vm1767, 0.0, -1e+30
  %1770 = vrot.lane.b32.xlu0 %v1761, 112
  %v1771 = vpop.permute.xlu0 %1770
  %vm1772 = vcmask 31744
  %v1774 = vsel %vm1772, %v1761, 0
  %v1777 = vsel %vm1772, %v1771, 0
  %1779 = vmatprep.subr.bf16.mxu0 0
  %1780 = vmatpush1.bf16.xpose.msra.mxu0 %v1777
  %1781 = vmatprep.subr.bf16.mxu0 0
  %1782 = vmatpush1.bf16.xpose.msra.mxu0 0
  %1783 = vmatprep.subr.bf16.mxu0 0
  %1784 = vmatpush1.bf16.xpose.msra.mxu0 0
  %1785 = vmatprep.subr.bf16.mxu0 0
  %1786 = vmatpush1.bf16.xpose.msra.mxu0 0
  %1787 = vmatprep.subr.bf16.mxu0 0
  %1788 = vmatpush1.bf16.xpose.msra.mxu0 0
  %1789 = vmatprep.subr.bf16.mxu0 0
  %1790 = vmatpush1.bf16.xpose.msra.mxu0 0
  %1791 = vmatprep.subr.bf16.mxu0 0
  %1792 = vmatpush1.bf16.xpose.msra.mxu0 0
  %1793 = vmatprep.subr.bf16.mxu0 0
  %1794 = vmatpush1.bf16.xpose.msra.mxu0 0
  %1795 = vmatprep.subr.bf16.mxu0 0
  %1796 = vmatpush1.bf16.xpose.msra.mxu0 0
  %1797 = vmatprep.subr.bf16.mxu0 0
  %1798 = vmatpush1.bf16.xpose.msra.mxu0 0
  %1799 = vmatprep.subr.bf16.mxu0 0
  %1800 = vmatpush1.bf16.xpose.msra.mxu0 0
  %1801 = vmatprep.subr.bf16.mxu0 0
  %1802 = vmatpush1.bf16.xpose.msra.mxu0 0
  %1803 = vmatprep.subr.bf16.mxu0 0
  %1804 = vmatpush1.bf16.xpose.msra.mxu0 0
  %1805 = vmatprep.subr.bf16.mxu0 0
  %1806 = vmatpush1.bf16.xpose.msra.mxu0 0
  %1807 = vmatprep.subr.bf16.mxu0 0
  %1808 = vmatpush1.bf16.xpose.msra.mxu0 0
  %1809 = vmatprep.subr.bf16.mxu0 0
  %1810 = vmatpush1.bf16.xpose.msra.mxu0 0
  %1811 = vmatprep.mubr.bf16.mxu0 0
  %1812 = vmatmul.mubr.bf16.gmra.mrb[0].mxu0 %v1774
  %v1813 = vpop.f32.mrb[0].mxu0
  %v1814 = vadd.f32 0.0, %v1813
  %v1815 = vpop.f32.mrb[0].mxu0
  %v1816 = vpop.f32.mrb[0].mxu0
  %v1817 = vpop.f32.mrb[0].mxu0
  %1818 = vdwg.mxu0
  %1820 = vrot.lane.b32.xlu0 %v1762, 112
  %v1821 = vpop.permute.xlu0 %1820
  %v1823 = vsel %vm1772, %v1762, 0
  %v1826 = vsel %vm1772, %v1821, 0
  %1828 = vmatprep.subr.bf16.mxu0 0
  %1829 = vmatpush1.bf16.xpose.msra.mxu0 %v1826
  %1830 = vmatprep.subr.bf16.mxu0 0
  %1831 = vmatpush1.bf16.xpose.msra.mxu0 0
  %1832 = vmatprep.subr.bf16.mxu0 0
  %1833 = vmatpush1.bf16.xpose.msra.mxu0 0
  %1834 = vmatprep.subr.bf16.mxu0 0
  %1835 = vmatpush1.bf16.xpose.msra.mxu0 0
  %1836 = vmatprep.subr.bf16.mxu0 0
  %1837 = vmatpush1.bf16.xpose.msra.mxu0 0
  %1838 = vmatprep.subr.bf16.mxu0 0
  %1839 = vmatpush1.bf16.xpose.msra.mxu0 0
  %1840 = vmatprep.subr.bf16.mxu0 0
  %1841 = vmatpush1.bf16.xpose.msra.mxu0 0
  %1842 = vmatprep.subr.bf16.mxu0 0
  %1843 = vmatpush1.bf16.xpose.msra.mxu0 0
  %1844 = vmatprep.subr.bf16.mxu0 0
  %1845 = vmatpush1.bf16.xpose.msra.mxu0 0
  %1846 = vmatprep.subr.bf16.mxu0 0
  %1847 = vmatpush1.bf16.xpose.msra.mxu0 0
  %1848 = vmatprep.subr.bf16.mxu0 0
  %1849 = vmatpush1.bf16.xpose.msra.mxu0 0
  %1850 = vmatprep.subr.bf16.mxu0 0
  %1851 = vmatpush1.bf16.xpose.msra.mxu0 0
  %1852 = vmatprep.subr.bf16.mxu0 0
  %1853 = vmatpush1.bf16.xpose.msra.mxu0 0
  %1854 = vmatprep.subr.bf16.mxu0 0
  %1855 = vmatpush1.bf16.xpose.msra.mxu0 0
  %1856 = vmatprep.subr.bf16.mxu0 0
  %1857 = vmatpush1.bf16.xpose.msra.mxu0 0
  %1858 = vmatprep.subr.bf16.mxu0 0
  %1859 = vmatpush1.bf16.xpose.msra.mxu0 0
  %1860 = vmatprep.mubr.bf16.mxu0 0
  %1861 = vmatmul.mubr.bf16.gmra.mrb[0].mxu0 %v1823
  %v1862 = vpop.f32.mrb[0].mxu0
  %v1863 = vadd.f32 0.0, %v1862
  %v1864 = vpop.f32.mrb[0].mxu0
  %v1865 = vpop.f32.mrb[0].mxu0
  %v1866 = vpop.f32.mrb[0].mxu0
  %1867 = vdwg.mxu0
  %v1868 = vmul.f32 %v1814, 0.5
  %v1869 = vmul.f32 %v1863, 0.5
  %v1870 = vadd.f32 %v1868, %v1768
  %v1871 = vadd.f32 %v1869, %v1768
  %vm1872 = vcmask 64512
  %v1873 = vsel %vm1872, %v1870, -inf
  %1874 = vmax.xlane.f32.xlu0 %v1873
  %v1875 = vpop.xlane.xlu0 %1874
  %v1876 = vsel %vm1872, %v1871, -inf
  %1877 = vmax.xlane.f32.xlu0 %v1876
  %v1878 = vpop.xlane.xlu0 %1877
  %v1879 = vsub.f32 %v1870, %v1875
  %v1880 = vsub.f32 %v1871, %v1878
  %v1881 = vmul.f32 %v1879, 1.442695
  %v1882 = vpow.pop %v1881
  %v1883 = vmul.f32 %v1880, 1.442695
  %v1884 = vpow.pop %v1883
  %v1885 = vsel %vm1872, %v1882, 0.0
  %1886 = vadd.xlane.f32.xlu0 %v1885
  %v1887 = vpop.xlane.xlu0 %1886
  %v1888 = vsel %vm1872, %v1884, 0.0
  %1889 = vadd.xlane.f32.xlu0 %v1888
  %v1890 = vpop.xlane.xlu0 %1889
  %v1891 = vrcp.pop %v1887
  %v1892 = vmul.f32 %v1882, %v1891
  %v1893 = vrcp.pop %v1890
  %v1894 = vmul.f32 %v1884, %v1893
  %v1895 = vpack.c.bf16 %v1892, %v1892
  %v1896 = vpack.c.bf16 %v1894, %v1894
  %1897 = vrot.lane.b32.xlu0 %v1761, 96
  %v1898 = vpop.permute.xlu0 %1897
  %v1900 = vsel %vm1872, %v1895, 0
  %vm1902 = vcmask 1043456
  %v1904 = vsel %vm1902, %v1898, 0
  %1906 = vmatprep.subr.bf16.mxu0 0
  %1907 = vmatpush1.bf16.msra.mxu0 %v1904
  %1908 = vmatprep.subr.bf16.mxu0 0
  %1909 = vmatpush1.bf16.msra.mxu0 0
  %1910 = vmatprep.subr.bf16.mxu0 0
  %1911 = vmatpush1.bf16.msra.mxu0 0
  %1912 = vmatprep.subr.bf16.mxu0 0
  %1913 = vmatpush1.bf16.msra.mxu0 0
  %1914 = vmatprep.subr.bf16.mxu0 0
  %1915 = vmatpush1.bf16.msra.mxu0 0
  %1916 = vmatprep.subr.bf16.mxu0 0
  %1917 = vmatpush1.bf16.msra.mxu0 0
  %1918 = vmatprep.subr.bf16.mxu0 0
  %1919 = vmatpush1.bf16.msra.mxu0 0
  %1920 = vmatprep.subr.bf16.mxu0 0
  %1921 = vmatpush1.bf16.msra.mxu0 0
  %1922 = vmatprep.subr.bf16.mxu0 0
  %1923 = vmatpush1.bf16.msra.mxu0 0
  %1924 = vmatprep.subr.bf16.mxu0 0
  %1925 = vmatpush1.bf16.msra.mxu0 0
  %1926 = vmatprep.subr.bf16.mxu0 0
  %1927 = vmatpush1.bf16.msra.mxu0 0
  %1928 = vmatprep.subr.bf16.mxu0 0
  %1929 = vmatpush1.bf16.msra.mxu0 0
  %1930 = vmatprep.subr.bf16.mxu0 0
  %1931 = vmatpush1.bf16.msra.mxu0 0
  %1932 = vmatprep.subr.bf16.mxu0 0
  %1933 = vmatpush1.bf16.msra.mxu0 0
  %1934 = vmatprep.subr.bf16.mxu0 0
  %1935 = vmatpush1.bf16.msra.mxu0 0
  %1936 = vmatprep.subr.bf16.mxu0 0
  %1937 = vmatpush1.bf16.msra.mxu0 0
  %1938 = vmatprep.mubr.bf16.mxu0 0
  %1939 = vmatmul.mubr.bf16.gmra.mrb[0].mxu0 %v1900
  %v1940 = vpop.f32.mrb[0].mxu0
  %v1941 = vadd.f32 0.0, %v1940
  %v1942 = vpop.f32.mrb[0].mxu0
  %v1943 = vpop.f32.mrb[0].mxu0
  %v1944 = vpop.f32.mrb[0].mxu0
  %1945 = vdwg.mxu0
  %1946 = vrot.lane.b32.xlu0 %v1762, 96
  %v1947 = vpop.permute.xlu0 %1946
  %v1949 = vsel %vm1872, %v1896, 0
  %v1952 = vsel %vm1902, %v1947, 0
  %1954 = vmatprep.subr.bf16.mxu0 0
  %1955 = vmatpush1.bf16.msra.mxu0 %v1952
  %1956 = vmatprep.subr.bf16.mxu0 0
  %1957 = vmatpush1.bf16.msra.mxu0 0
  %1958 = vmatprep.subr.bf16.mxu0 0
  %1959 = vmatpush1.bf16.msra.mxu0 0
  %1960 = vmatprep.subr.bf16.mxu0 0
  %1961 = vmatpush1.bf16.msra.mxu0 0
  %1962 = vmatprep.subr.bf16.mxu0 0
  %1963 = vmatpush1.bf16.msra.mxu0 0
  %1964 = vmatprep.subr.bf16.mxu0 0
  %1965 = vmatpush1.bf16.msra.mxu0 0
  %1966 = vmatprep.subr.bf16.mxu0 0
  %1967 = vmatpush1.bf16.msra.mxu0 0
  %1968 = vmatprep.subr.bf16.mxu0 0
  %1969 = vmatpush1.bf16.msra.mxu0 0
  %1970 = vmatprep.subr.bf16.mxu0 0
  %1971 = vmatpush1.bf16.msra.mxu0 0
  %1972 = vmatprep.subr.bf16.mxu0 0
  %1973 = vmatpush1.bf16.msra.mxu0 0
  %1974 = vmatprep.subr.bf16.mxu0 0
  %1975 = vmatpush1.bf16.msra.mxu0 0
  %1976 = vmatprep.subr.bf16.mxu0 0
  %1977 = vmatpush1.bf16.msra.mxu0 0
  %1978 = vmatprep.subr.bf16.mxu0 0
  %1979 = vmatpush1.bf16.msra.mxu0 0
  %1980 = vmatprep.subr.bf16.mxu0 0
  %1981 = vmatpush1.bf16.msra.mxu0 0
  %1982 = vmatprep.subr.bf16.mxu0 0
  %1983 = vmatpush1.bf16.msra.mxu0 0
  %1984 = vmatprep.subr.bf16.mxu0 0
  %1985 = vmatpush1.bf16.msra.mxu0 0
  %1986 = vmatprep.mubr.bf16.mxu0 0
  %1987 = vmatmul.mubr.bf16.gmra.mrb[0].mxu0 %v1949
  %v1988 = vpop.f32.mrb[0].mxu0
  %v1989 = vadd.f32 0.0, %v1988
  %v1990 = vpop.f32.mrb[0].mxu0
  %v1991 = vpop.f32.mrb[0].mxu0
  %v1992 = vpop.f32.mrb[0].mxu0
  %1993 = vdwg.mxu0
  %1994 = vrot.lane.b32.xlu0 %v1761, 124
  %v1995 = vpop.permute.xlu0 %1994
  %1996 = vrot.lane.b32.xlu0 %v1761, 108
  %v1997 = vpop.permute.xlu0 %1996
  %v1999 = vsel %vm1772, %v1995, 0
  %v2002 = vsel %vm1772, %v1997, 0
  %2004 = vmatprep.subr.bf16.mxu0 0
  %2005 = vmatpush1.bf16.xpose.msra.mxu0 %v2002
  %2006 = vmatprep.subr.bf16.mxu0 0
  %2007 = vmatpush1.bf16.xpose.msra.mxu0 0
  %2008 = vmatprep.subr.bf16.mxu0 0
  %2009 = vmatpush1.bf16.xpose.msra.mxu0 0
  %2010 = vmatprep.subr.bf16.mxu0 0
  %2011 = vmatpush1.bf16.xpose.msra.mxu0 0
  %2012 = vmatprep.subr.bf16.mxu0 0
  %2013 = vmatpush1.bf16.xpose.msra.mxu0 0
  %2014 = vmatprep.subr.bf16.mxu0 0
  %2015 = vmatpush1.bf16.xpose.msra.mxu0 0
  %2016 = vmatprep.subr.bf16.mxu0 0
  %2017 = vmatpush1.bf16.xpose.msra.mxu0 0
  %2018 = vmatprep.subr.bf16.mxu0 0
  %2019 = vmatpush1.bf16.xpose.msra.mxu0 0
  %2020 = vmatprep.subr.bf16.mxu0 0
  %2021 = vmatpush1.bf16.xpose.msra.mxu0 0
  %2022 = vmatprep.subr.bf16.mxu0 0
  %2023 = vmatpush1.bf16.xpose.msra.mxu0 0
  %2024 = vmatprep.subr.bf16.mxu0 0
  %2025 = vmatpush1.bf16.xpose.msra.mxu0 0
  %2026 = vmatprep.subr.bf16.mxu0 0
  %2027 = vmatpush1.bf16.xpose.msra.mxu0 0
  %2028 = vmatprep.subr.bf16.mxu0 0
  %2029 = vmatpush1.bf16.xpose.msra.mxu0 0
  %2030 = vmatprep.subr.bf16.mxu0 0
  %2031 = vmatpush1.bf16.xpose.msra.mxu0 0
  %2032 = vmatprep.subr.bf16.mxu0 0
  %2033 = vmatpush1.bf16.xpose.msra.mxu0 0
  %2034 = vmatprep.subr.bf16.mxu0 0
  %2035 = vmatpush1.bf16.xpose.msra.mxu0 0
  %2036 = vmatprep.mubr.bf16.mxu0 0
  %2037 = vmatmul.mubr.bf16.gmra.mrb[0].mxu0 %v1999
  %v2038 = vpop.f32.mrb[0].mxu0
  %v2039 = vadd.f32 0.0, %v2038
  %v2040 = vpop.f32.mrb[0].mxu0
  %v2041 = vpop.f32.mrb[0].mxu0
  %v2042 = vpop.f32.mrb[0].mxu0
  %2043 = vdwg.mxu0
  %2044 = vrot.lane.b32.xlu0 %v1762, 124
  %v2045 = vpop.permute.xlu0 %2044
  %2046 = vrot.lane.b32.xlu0 %v1762, 108
  %v2047 = vpop.permute.xlu0 %2046
  %v2049 = vsel %vm1772, %v2045, 0
  %v2052 = vsel %vm1772, %v2047, 0
  %2054 = vmatprep.subr.bf16.mxu0 0
  %2055 = vmatpush1.bf16.xpose.msra.mxu0 %v2052
  %2056 = vmatprep.subr.bf16.mxu0 0
  %2057 = vmatpush1.bf16.xpose.msra.mxu0 0
  %2058 = vmatprep.subr.bf16.mxu0 0
  %2059 = vmatpush1.bf16.xpose.msra.mxu0 0
  %2060 = vmatprep.subr.bf16.mxu0 0
  %2061 = vmatpush1.bf16.xpose.msra.mxu0 0
  %2062 = vmatprep.subr.bf16.mxu0 0
  %2063 = vmatpush1.bf16.xpose.msra.mxu0 0
  %2064 = vmatprep.subr.bf16.mxu0 0
  %2065 = vmatpush1.bf16.xpose.msra.mxu0 0
  %2066 = vmatprep.subr.bf16.mxu0 0
  %2067 = vmatpush1.bf16.xpose.msra.mxu0 0
  %2068 = vmatprep.subr.bf16.mxu0 0
  %2069 = vmatpush1.bf16.xpose.msra.mxu0 0
  %2070 = vmatprep.subr.bf16.mxu0 0
  %2071 = vmatpush1.bf16.xpose.msra.mxu0 0
  %2072 = vmatprep.subr.bf16.mxu0 0
  %2073 = vmatpush1.bf16.xpose.msra.mxu0 0
  %2074 = vmatprep.subr.bf16.mxu0 0
  %2075 = vmatpush1.bf16.xpose.msra.mxu0 0
  %2076 = vmatprep.subr.bf16.mxu0 0
  %2077 = vmatpush1.bf16.xpose.msra.mxu0 0
  %2078 = vmatprep.subr.bf16.mxu0 0
  %2079 = vmatpush1.bf16.xpose.msra.mxu0 0
  %2080 = vmatprep.subr.bf16.mxu0 0
  %2081 = vmatpush1.bf16.xpose.msra.mxu0 0
  %2082 = vmatprep.subr.bf16.mxu0 0
  %2083 = vmatpush1.bf16.xpose.msra.mxu0 0
  %2084 = vmatprep.subr.bf16.mxu0 0
  %2085 = vmatpush1.bf16.xpose.msra.mxu0 0
  %2086 = vmatprep.mubr.bf16.mxu0 0
  %2087 = vmatmul.mubr.bf16.gmra.mrb[0].mxu0 %v2049
  %v2088 = vpop.f32.mrb[0].mxu0
  %v2089 = vadd.f32 0.0, %v2088
  %v2090 = vpop.f32.mrb[0].mxu0
  %v2091 = vpop.f32.mrb[0].mxu0
  %v2092 = vpop.f32.mrb[0].mxu0
  %2093 = vdwg.mxu0
  %v2094 = vmul.f32 %v2039, 0.5
  %v2095 = vmul.f32 %v2089, 0.5
  %v2096 = vadd.f32 %v2094, %v1768
  %v2097 = vadd.f32 %v2095, %v1768
  %v2098 = vsel %vm1872, %v2096, -inf
  %2099 = vmax.xlane.f32.xlu0 %v2098
  %v2100 = vpop.xlane.xlu0 %2099
  %v2101 = vsel %vm1872, %v2097, -inf
  %2102 = vmax.xlane.f32.xlu0 %v2101
  %v2103 = vpop.xlane.xlu0 %2102
  %v2104 = vsub.f32 %v2096, %v2100
  %v2105 = vsub.f32 %v2097, %v2103
  %v2106 = vmul.f32 %v2104, 1.442695
  %v2107 = vpow.pop %v2106
  %v2108 = vmul.f32 %v2105, 1.442695
  %v2109 = vpow.pop %v2108
  %v2110 = vsel %vm1872, %v2107, 0.0
  %2111 = vadd.xlane.f32.xlu0 %v2110
  %v2112 = vpop.xlane.xlu0 %2111
  %v2113 = vsel %vm1872, %v2109, 0.0
  %2114 = vadd.xlane.f32.xlu0 %v2113
  %v2115 = vpop.xlane.xlu0 %2114
  %v2116 = vrcp.pop %v2112
  %v2117 = vmul.f32 %v2107, %v2116
  %v2118 = vrcp.pop %v2115
  %v2119 = vmul.f32 %v2109, %v2118
  %v2120 = vpack.c.bf16 %v2117, %v2117
  %v2121 = vpack.c.bf16 %v2119, %v2119
  %2122 = vrot.lane.b32.xlu0 %v1761, 92
  %v2123 = vpop.permute.xlu0 %2122
  %v2125 = vsel %vm1872, %v2120, 0
  %v2128 = vsel %vm1902, %v2123, 0
  %2130 = vmatprep.subr.bf16.mxu0 0
  %2131 = vmatpush1.bf16.msra.mxu0 %v2128
  %2132 = vmatprep.subr.bf16.mxu0 0
  %2133 = vmatpush1.bf16.msra.mxu0 0
  %2134 = vmatprep.subr.bf16.mxu0 0
  %2135 = vmatpush1.bf16.msra.mxu0 0
  %2136 = vmatprep.subr.bf16.mxu0 0
  %2137 = vmatpush1.bf16.msra.mxu0 0
  %2138 = vmatprep.subr.bf16.mxu0 0
  %2139 = vmatpush1.bf16.msra.mxu0 0
  %2140 = vmatprep.subr.bf16.mxu0 0
  %2141 = vmatpush1.bf16.msra.mxu0 0
  %2142 = vmatprep.subr.bf16.mxu0 0
  %2143 = vmatpush1.bf16.msra.mxu0 0
  %2144 = vmatprep.subr.bf16.mxu0 0
  %2145 = vmatpush1.bf16.msra.mxu0 0
  %2146 = vmatprep.subr.bf16.mxu0 0
  %2147 = vmatpush1.bf16.msra.mxu0 0
  %2148 = vmatprep.subr.bf16.mxu0 0
  %2149 = vmatpush1.bf16.msra.mxu0 0
  %2150 = vmatprep.subr.bf16.mxu0 0
  %2151 = vmatpush1.bf16.msra.mxu0 0
  %2152 = vmatprep.subr.bf16.mxu0 0
  %2153 = vmatpush1.bf16.msra.mxu0 0
  %2154 = vmatprep.subr.bf16.mxu0 0
  %2155 = vmatpush1.bf16.msra.mxu0 0
  %2156 = vmatprep.subr.bf16.mxu0 0
  %2157 = vmatpush1.bf16.msra.mxu0 0
  %2158 = vmatprep.subr.bf16.mxu0 0
  %2159 = vmatpush1.bf16.msra.mxu0 0
  %2160 = vmatprep.subr.bf16.mxu0 0
  %2161 = vmatpush1.bf16.msra.mxu0 0
  %2162 = vmatprep.mubr.bf16.mxu0 0
  %2163 = vmatmul.mubr.bf16.gmra.mrb[0].mxu0 %v2125
  %v2164 = vpop.f32.mrb[0].mxu0
  %v2165 = vadd.f32 0.0, %v2164
  %v2166 = vpop.f32.mrb[0].mxu0
  %v2167 = vpop.f32.mrb[0].mxu0
  %v2168 = vpop.f32.mrb[0].mxu0
  %2169 = vdwg.mxu0
  %2170 = vrot.lane.b32.xlu0 %v1762, 92
  %v2171 = vpop.permute.xlu0 %2170
  %v2173 = vsel %vm1872, %v2121, 0
  %v2176 = vsel %vm1902, %v2171, 0
  %2178 = vmatprep.subr.bf16.mxu0 0
  %2179 = vmatpush1.bf16.msra.mxu0 %v2176
  %2180 = vmatprep.subr.bf16.mxu0 0
  %2181 = vmatpush1.bf16.msra.mxu0 0
  %2182 = vmatprep.subr.bf16.mxu0 0
  %2183 = vmatpush1.bf16.msra.mxu0 0
  %2184 = vmatprep.subr.bf16.mxu0 0
  %2185 = vmatpush1.bf16.msra.mxu0 0
  %2186 = vmatprep.subr.bf16.mxu0 0
  %2187 = vmatpush1.bf16.msra.mxu0 0
  %2188 = vmatprep.subr.bf16.mxu0 0
  %2189 = vmatpush1.bf16.msra.mxu0 0
  %2190 = vmatprep.subr.bf16.mxu0 0
  %2191 = vmatpush1.bf16.msra.mxu0 0
  %2192 = vmatprep.subr.bf16.mxu0 0
  %2193 = vmatpush1.bf16.msra.mxu0 0
  %2194 = vmatprep.subr.bf16.mxu0 0
  %2195 = vmatpush1.bf16.msra.mxu0 0
  %2196 = vmatprep.subr.bf16.mxu0 0
  %2197 = vmatpush1.bf16.msra.mxu0 0
  %2198 = vmatprep.subr.bf16.mxu0 0
  %2199 = vmatpush1.bf16.msra.mxu0 0
  %2200 = vmatprep.subr.bf16.mxu0 0
  %2201 = vmatpush1.bf16.msra.mxu0 0
  %2202 = vmatprep.subr.bf16.mxu0 0
  %2203 = vmatpush1.bf16.msra.mxu0 0
  %2204 = vmatprep.subr.bf16.mxu0 0
  %2205 = vmatpush1.bf16.msra.mxu0 0
  %2206 = vmatprep.subr.bf16.mxu0 0
  %2207 = vmatpush1.bf16.msra.mxu0 0
  %2208 = vmatprep.subr.bf16.mxu0 0
  %2209 = vmatpush1.bf16.msra.mxu0 0
  %2210 = vmatprep.mubr.bf16.mxu0 0
  %2211 = vmatmul.mubr.bf16.gmra.mrb[0].mxu0 %v2173
  %v2212 = vpop.f32.mrb[0].mxu0
  %v2213 = vadd.f32 0.0, %v2212
  %v2214 = vpop.f32.mrb[0].mxu0
  %v2215 = vpop.f32.mrb[0].mxu0
  %v2216 = vpop.f32.mrb[0].mxu0
  %2217 = vdwg.mxu0
  %2218 = vrot.lane.b32.xlu0 %v1761, 120
  %v2219 = vpop.permute.xlu0 %2218
  %2220 = vrot.lane.b32.xlu0 %v1761, 104
  %v2221 = vpop.permute.xlu0 %2220
  %v2223 = vsel %vm1772, %v2219, 0
  %v2226 = vsel %vm1772, %v2221, 0
  %2228 = vmatprep.subr.bf16.mxu0 0
  %2229 = vmatpush1.bf16.xpose.msra.mxu0 %v2226
  %2230 = vmatprep.subr.bf16.mxu0 0
  %2231 = vmatpush1.bf16.xpose.msra.mxu0 0
  %2232 = vmatprep.subr.bf16.mxu0 0
  %2233 = vmatpush1.bf16.xpose.msra.mxu0 0
  %2234 = vmatprep.subr.bf16.mxu0 0
  %2235 = vmatpush1.bf16.xpose.msra.mxu0 0
  %2236 = vmatprep.subr.bf16.mxu0 0
  %2237 = vmatpush1.bf16.xpose.msra.mxu0 0
  %2238 = vmatprep.subr.bf16.mxu0 0
  %2239 = vmatpush1.bf16.xpose.msra.mxu0 0
  %2240 = vmatprep.subr.bf16.mxu0 0
  %2241 = vmatpush1.bf16.xpose.msra.mxu0 0
  %2242 = vmatprep.subr.bf16.mxu0 0
  %2243 = vmatpush1.bf16.xpose.msra.mxu0 0
  %2244 = vmatprep.subr.bf16.mxu0 0
  %2245 = vmatpush1.bf16.xpose.msra.mxu0 0
  %2246 = vmatprep.subr.bf16.mxu0 0
  %2247 = vmatpush1.bf16.xpose.msra.mxu0 0
  %2248 = vmatprep.subr.bf16.mxu0 0
  %2249 = vmatpush1.bf16.xpose.msra.mxu0 0
  %2250 = vmatprep.subr.bf16.mxu0 0
  %2251 = vmatpush1.bf16.xpose.msra.mxu0 0
  %2252 = vmatprep.subr.bf16.mxu0 0
  %2253 = vmatpush1.bf16.xpose.msra.mxu0 0
  %2254 = vmatprep.subr.bf16.mxu0 0
  %2255 = vmatpush1.bf16.xpose.msra.mxu0 0
  %2256 = vmatprep.subr.bf16.mxu0 0
  %2257 = vmatpush1.bf16.xpose.msra.mxu0 0
  %2258 = vmatprep.subr.bf16.mxu0 0
  %2259 = vmatpush1.bf16.xpose.msra.mxu0 0
  %2260 = vmatprep.mubr.bf16.mxu0 0
  %2261 = vmatmul.mubr.bf16.gmra.mrb[0].mxu0 %v2223
  %v2262 = vpop.f32.mrb[0].mxu0
  %v2263 = vadd.f32 0.0, %v2262
  %v2264 = vpop.f32.mrb[0].mxu0
  %v2265 = vpop.f32.mrb[0].mxu0
  %v2266 = vpop.f32.mrb[0].mxu0
  %2267 = vdwg.mxu0
  %2268 = vrot.lane.b32.xlu0 %v1762, 120
  %v2269 = vpop.permute.xlu0 %2268
  %2270 = vrot.lane.b32.xlu0 %v1762, 104
  %v2271 = vpop.permute.xlu0 %2270
  %v2273 = vsel %vm1772, %v2269, 0
  %v2276 = vsel %vm1772, %v2271, 0
  %2278 = vmatprep.subr.bf16.mxu0 0
  %2279 = vmatpush1.bf16.xpose.msra.mxu0 %v2276
  %2280 = vmatprep.subr.bf16.mxu0 0
  %2281 = vmatpush1.bf16.xpose.msra.mxu0 0
  %2282 = vmatprep.subr.bf16.mxu0 0
  %2283 = vmatpush1.bf16.xpose.msra.mxu0 0
  %2284 = vmatprep.subr.bf16.mxu0 0
  %2285 = vmatpush1.bf16.xpose.msra.mxu0 0
  %2286 = vmatprep.subr.bf16.mxu0 0
  %2287 = vmatpush1.bf16.xpose.msra.mxu0 0
  %2288 = vmatprep.subr.bf16.mxu0 0
  %2289 = vmatpush1.bf16.xpose.msra.mxu0 0
  %2290 = vmatprep.subr.bf16.mxu0 0
  %2291 = vmatpush1.bf16.xpose.msra.mxu0 0
  %2292 = vmatprep.subr.bf16.mxu0 0
  %2293 = vmatpush1.bf16.xpose.msra.mxu0 0
  %2294 = vmatprep.subr.bf16.mxu0 0
  %2295 = vmatpush1.bf16.xpose.msra.mxu0 0
  %2296 = vmatprep.subr.bf16.mxu0 0
  %2297 = vmatpush1.bf16.xpose.msra.mxu0 0
  %2298 = vmatprep.subr.bf16.mxu0 0
  %2299 = vmatpush1.bf16.xpose.msra.mxu0 0
  %2300 = vmatprep.subr.bf16.mxu0 0
  %2301 = vmatpush1.bf16.xpose.msra.mxu0 0
  %2302 = vmatprep.subr.bf16.mxu0 0
  %2303 = vmatpush1.bf16.xpose.msra.mxu0 0
  %2304 = vmatprep.subr.bf16.mxu0 0
  %2305 = vmatpush1.bf16.xpose.msra.mxu0 0
  %2306 = vmatprep.subr.bf16.mxu0 0
  %2307 = vmatpush1.bf16.xpose.msra.mxu0 0
  %2308 = vmatprep.subr.bf16.mxu0 0
  %2309 = vmatpush1.bf16.xpose.msra.mxu0 0
  %2310 = vmatprep.mubr.bf16.mxu0 0
  %2311 = vmatmul.mubr.bf16.gmra.mrb[0].mxu0 %v2273
  %v2312 = vpop.f32.mrb[0].mxu0
  %v2313 = vadd.f32 0.0, %v2312
  %v2314 = vpop.f32.mrb[0].mxu0
  %v2315 = vpop.f32.mrb[0].mxu0
  %v2316 = vpop.f32.mrb[0].mxu0
  %2317 = vdwg.mxu0
  %v2318 = vmul.f32 %v2263, 0.5
  %v2319 = vmul.f32 %v2313, 0.5
  %v2320 = vadd.f32 %v2318, %v1768
  %v2321 = vadd.f32 %v2319, %v1768
  %v2322 = vsel %vm1872, %v2320, -inf
  %2323 = vmax.xlane.f32.xlu0 %v2322
  %v2324 = vpop.xlane.xlu0 %2323
  %v2325 = vsel %vm1872, %v2321, -inf
  %2326 = vmax.xlane.f32.xlu0 %v2325
  %v2327 = vpop.xlane.xlu0 %2326
  %v2328 = vsub.f32 %v2320, %v2324
  %v2329 = vsub.f32 %v2321, %v2327
  %v2330 = vmul.f32 %v2328, 1.442695
  %v2331 = vpow.pop %v2330
  %v2332 = vmul.f32 %v2329, 1.442695
  %v2333 = vpow.pop %v2332
  %v2334 = vsel %vm1872, %v2331, 0.0
  %2335 = vadd.xlane.f32.xlu0 %v2334
  %v2336 = vpop.xlane.xlu0 %2335
  %v2337 = vsel %vm1872, %v2333, 0.0
  %2338 = vadd.xlane.f32.xlu0 %v2337
  %v2339 = vpop.xlane.xlu0 %2338
  %v2340 = vrcp.pop %v2336
  %v2341 = vmul.f32 %v2331, %v2340
  %v2342 = vrcp.pop %v2339
  %v2343 = vmul.f32 %v2333, %v2342
  %v2344 = vpack.c.bf16 %v2341, %v2341
  %v2345 = vpack.c.bf16 %v2343, %v2343
  %2346 = vrot.lane.b32.xlu0 %v1761, 88
  %v2347 = vpop.permute.xlu0 %2346
  %v2349 = vsel %vm1872, %v2344, 0
  %v2352 = vsel %vm1902, %v2347, 0
  %2354 = vmatprep.subr.bf16.mxu0 0
  %2355 = vmatpush1.bf16.msra.mxu0 %v2352
  %2356 = vmatprep.subr.bf16.mxu0 0
  %2357 = vmatpush1.bf16.msra.mxu0 0
  %2358 = vmatprep.subr.bf16.mxu0 0
  %2359 = vmatpush1.bf16.msra.mxu0 0
  %2360 = vmatprep.subr.bf16.mxu0 0
  %2361 = vmatpush1.bf16.msra.mxu0 0
  %2362 = vmatprep.subr.bf16.mxu0 0
  %2363 = vmatpush1.bf16.msra.mxu0 0
  %2364 = vmatprep.subr.bf16.mxu0 0
  %2365 = vmatpush1.bf16.msra.mxu0 0
  %2366 = vmatprep.subr.bf16.mxu0 0
  %2367 = vmatpush1.bf16.msra.mxu0 0
  %2368 = vmatprep.subr.bf16.mxu0 0
  %2369 = vmatpush1.bf16.msra.mxu0 0
  %2370 = vmatprep.subr.bf16.mxu0 0
  %2371 = vmatpush1.bf16.msra.mxu0 0
  %2372 = vmatprep.subr.bf16.mxu0 0
  %2373 = vmatpush1.bf16.msra.mxu0 0
  %2374 = vmatprep.subr.bf16.mxu0 0
  %2375 = vmatpush1.bf16.msra.mxu0 0
  %2376 = vmatprep.subr.bf16.mxu0 0
  %2377 = vmatpush1.bf16.msra.mxu0 0
  %2378 = vmatprep.subr.bf16.mxu0 0
  %2379 = vmatpush1.bf16.msra.mxu0 0
  %2380 = vmatprep.subr.bf16.mxu0 0
  %2381 = vmatpush1.bf16.msra.mxu0 0
  %2382 = vmatprep.subr.bf16.mxu0 0
  %2383 = vmatpush1.bf16.msra.mxu0 0
  %2384 = vmatprep.subr.bf16.mxu0 0
  %2385 = vmatpush1.bf16.msra.mxu0 0
  %2386 = vmatprep.mubr.bf16.mxu0 0
  %2387 = vmatmul.mubr.bf16.gmra.mrb[0].mxu0 %v2349
  %v2388 = vpop.f32.mrb[0].mxu0
  %v2389 = vadd.f32 0.0, %v2388
  %v2390 = vpop.f32.mrb[0].mxu0
  %v2391 = vpop.f32.mrb[0].mxu0
  %v2392 = vpop.f32.mrb[0].mxu0
  %2393 = vdwg.mxu0
  %2394 = vrot.lane.b32.xlu0 %v1762, 88
  %v2395 = vpop.permute.xlu0 %2394
  %v2397 = vsel %vm1872, %v2345, 0
  %v2400 = vsel %vm1902, %v2395, 0
  %2402 = vmatprep.subr.bf16.mxu0 0
  %2403 = vmatpush1.bf16.msra.mxu0 %v2400
  %2404 = vmatprep.subr.bf16.mxu0 0
  %2405 = vmatpush1.bf16.msra.mxu0 0
  %2406 = vmatprep.subr.bf16.mxu0 0
  %2407 = vmatpush1.bf16.msra.mxu0 0
  %2408 = vmatprep.subr.bf16.mxu0 0
  %2409 = vmatpush1.bf16.msra.mxu0 0
  %2410 = vmatprep.subr.bf16.mxu0 0
  %2411 = vmatpush1.bf16.msra.mxu0 0
  %2412 = vmatprep.subr.bf16.mxu0 0
  %2413 = vmatpush1.bf16.msra.mxu0 0
  %2414 = vmatprep.subr.bf16.mxu0 0
  %2415 = vmatpush1.bf16.msra.mxu0 0
  %2416 = vmatprep.subr.bf16.mxu0 0
  %2417 = vmatpush1.bf16.msra.mxu0 0
  %2418 = vmatprep.subr.bf16.mxu0 0
  %2419 = vmatpush1.bf16.msra.mxu0 0
  %2420 = vmatprep.subr.bf16.mxu0 0
  %2421 = vmatpush1.bf16.msra.mxu0 0
  %2422 = vmatprep.subr.bf16.mxu0 0
  %2423 = vmatpush1.bf16.msra.mxu0 0
  %2424 = vmatprep.subr.bf16.mxu0 0
  %2425 = vmatpush1.bf16.msra.mxu0 0
  %2426 = vmatprep.subr.bf16.mxu0 0
  %2427 = vmatpush1.bf16.msra.mxu0 0
  %2428 = vmatprep.subr.bf16.mxu0 0
  %2429 = vmatpush1.bf16.msra.mxu0 0
  %2430 = vmatprep.subr.bf16.mxu0 0
  %2431 = vmatpush1.bf16.msra.mxu0 0
  %2432 = vmatprep.subr.bf16.mxu0 0
  %2433 = vmatpush1.bf16.msra.mxu0 0
  %2434 = vmatprep.mubr.bf16.mxu0 0
  %2435 = vmatmul.mubr.bf16.gmra.mrb[0].mxu0 %v2397
  %v2436 = vpop.f32.mrb[0].mxu0
  %v2437 = vadd.f32 0.0, %v2436
  %v2438 = vpop.f32.mrb[0].mxu0
  %v2439 = vpop.f32.mrb[0].mxu0
  %v2440 = vpop.f32.mrb[0].mxu0
  %2441 = vdwg.mxu0
  %2442 = vrot.lane.b32.xlu0 %v1761, 116
  %v2443 = vpop.permute.xlu0 %2442
  %2444 = vrot.lane.b32.xlu0 %v1761, 100
  %v2445 = vpop.permute.xlu0 %2444
  %v2447 = vsel %vm1772, %v2443, 0
  %v2450 = vsel %vm1772, %v2445, 0
  %2452 = vmatprep.subr.bf16.mxu0 0
  %2453 = vmatpush1.bf16.xpose.msra.mxu0 %v2450
  %2454 = vmatprep.subr.bf16.mxu0 0
  %2455 = vmatpush1.bf16.xpose.msra.mxu0 0
  %2456 = vmatprep.subr.bf16.mxu0 0
  %2457 = vmatpush1.bf16.xpose.msra.mxu0 0
  %2458 = vmatprep.subr.bf16.mxu0 0
  %2459 = vmatpush1.bf16.xpose.msra.mxu0 0
  %2460 = vmatprep.subr.bf16.mxu0 0
  %2461 = vmatpush1.bf16.xpose.msra.mxu0 0
  %2462 = vmatprep.subr.bf16.mxu0 0
  %2463 = vmatpush1.bf16.xpose.msra.mxu0 0
  %2464 = vmatprep.subr.bf16.mxu0 0
  %2465 = vmatpush1.bf16.xpose.msra.mxu0 0
  %2466 = vmatprep.subr.bf16.mxu0 0
  %2467 = vmatpush1.bf16.xpose.msra.mxu0 0
  %2468 = vmatprep.subr.bf16.mxu0 0
  %2469 = vmatpush1.bf16.xpose.msra.mxu0 0
  %2470 = vmatprep.subr.bf16.mxu0 0
  %2471 = vmatpush1.bf16.xpose.msra.mxu0 0
  %2472 = vmatprep.subr.bf16.mxu0 0
  %2473 = vmatpush1.bf16.xpose.msra.mxu0 0
  %2474 = vmatprep.subr.bf16.mxu0 0
  %2475 = vmatpush1.bf16.xpose.msra.mxu0 0
  %2476 = vmatprep.subr.bf16.mxu0 0
  %2477 = vmatpush1.bf16.xpose.msra.mxu0 0
  %2478 = vmatprep.subr.bf16.mxu0 0
  %2479 = vmatpush1.bf16.xpose.msra.mxu0 0
  %2480 = vmatprep.subr.bf16.mxu0 0
  %2481 = vmatpush1.bf16.xpose.msra.mxu0 0
  %2482 = vmatprep.subr.bf16.mxu0 0
  %2483 = vmatpush1.bf16.xpose.msra.mxu0 0
  %2484 = vmatprep.mubr.bf16.mxu0 0
  %2485 = vmatmul.mubr.bf16.gmra.mrb[0].mxu0 %v2447
  %v2486 = vpop.f32.mrb[0].mxu0
  %v2487 = vadd.f32 0.0, %v2486
  %v2488 = vpop.f32.mrb[0].mxu0
  %v2489 = vpop.f32.mrb[0].mxu0
  %v2490 = vpop.f32.mrb[0].mxu0
  %2491 = vdwg.mxu0
  %2492 = vrot.lane.b32.xlu0 %v1762, 116
  %v2493 = vpop.permute.xlu0 %2492
  %2494 = vrot.lane.b32.xlu0 %v1762, 100
  %v2495 = vpop.permute.xlu0 %2494
  %v2497 = vsel %vm1772, %v2493, 0
  %v2500 = vsel %vm1772, %v2495, 0
  %2502 = vmatprep.subr.bf16.mxu0 0
  %2503 = vmatpush1.bf16.xpose.msra.mxu0 %v2500
  %2504 = vmatprep.subr.bf16.mxu0 0
  %2505 = vmatpush1.bf16.xpose.msra.mxu0 0
  %2506 = vmatprep.subr.bf16.mxu0 0
  %2507 = vmatpush1.bf16.xpose.msra.mxu0 0
  %2508 = vmatprep.subr.bf16.mxu0 0
  %2509 = vmatpush1.bf16.xpose.msra.mxu0 0
  %2510 = vmatprep.subr.bf16.mxu0 0
  %2511 = vmatpush1.bf16.xpose.msra.mxu0 0
  %2512 = vmatprep.subr.bf16.mxu0 0
  %2513 = vmatpush1.bf16.xpose.msra.mxu0 0
  %2514 = vmatprep.subr.bf16.mxu0 0
  %2515 = vmatpush1.bf16.xpose.msra.mxu0 0
  %2516 = vmatprep.subr.bf16.mxu0 0
  %2517 = vmatpush1.bf16.xpose.msra.mxu0 0
  %2518 = vmatprep.subr.bf16.mxu0 0
  %2519 = vmatpush1.bf16.xpose.msra.mxu0 0
  %2520 = vmatprep.subr.bf16.mxu0 0
  %2521 = vmatpush1.bf16.xpose.msra.mxu0 0
  %2522 = vmatprep.subr.bf16.mxu0 0
  %2523 = vmatpush1.bf16.xpose.msra.mxu0 0
  %2524 = vmatprep.subr.bf16.mxu0 0
  %2525 = vmatpush1.bf16.xpose.msra.mxu0 0
  %2526 = vmatprep.subr.bf16.mxu0 0
  %2527 = vmatpush1.bf16.xpose.msra.mxu0 0
  %2528 = vmatprep.subr.bf16.mxu0 0
  %2529 = vmatpush1.bf16.xpose.msra.mxu0 0
  %2530 = vmatprep.subr.bf16.mxu0 0
  %2531 = vmatpush1.bf16.xpose.msra.mxu0 0
  %2532 = vmatprep.subr.bf16.mxu0 0
  %2533 = vmatpush1.bf16.xpose.msra.mxu0 0
  %2534 = vmatprep.mubr.bf16.mxu0 0
  %2535 = vmatmul.mubr.bf16.gmra.mrb[0].mxu0 %v2497
  %v2536 = vpop.f32.mrb[0].mxu0
  %v2537 = vadd.f32 0.0, %v2536
  %v2538 = vpop.f32.mrb[0].mxu0
  %v2539 = vpop.f32.mrb[0].mxu0
  %v2540 = vpop.f32.mrb[0].mxu0
  %2541 = vdwg.mxu0
  %v2542 = vmul.f32 %v2487, 0.5
  %v2543 = vmul.f32 %v2537, 0.5
  %v2544 = vadd.f32 %v2542, %v1768
  %v2545 = vadd.f32 %v2543, %v1768
  %v2546 = vsel %vm1872, %v2544, -inf
  %2547 = vmax.xlane.f32.xlu0 %v2546
  %v2548 = vpop.xlane.xlu0 %2547
  %v2549 = vsel %vm1872, %v2545, -inf
  %2550 = vmax.xlane.f32.xlu0 %v2549
  %v2551 = vpop.xlane.xlu0 %2550
  %v2552 = vsub.f32 %v2544, %v2548
  %v2553 = vsub.f32 %v2545, %v2551
  %v2554 = vmul.f32 %v2552, 1.442695
  %v2555 = vpow.pop %v2554
  %v2556 = vmul.f32 %v2553, 1.442695
  %v2557 = vpow.pop %v2556
  %v2558 = vsel %vm1872, %v2555, 0.0
  %2559 = vadd.xlane.f32.xlu0 %v2558
  %v2560 = vpop.xlane.xlu0 %2559
  %v2561 = vsel %vm1872, %v2557, 0.0
  %2562 = vadd.xlane.f32.xlu0 %v2561
  %v2563 = vpop.xlane.xlu0 %2562
  %v2564 = vrcp.pop %v2560
  %v2565 = vmul.f32 %v2555, %v2564
  %v2566 = vrcp.pop %v2563
  %v2567 = vmul.f32 %v2557, %v2566
  %v2568 = vpack.c.bf16 %v2565, %v2565
  %v2569 = vpack.c.bf16 %v2567, %v2567
  %2570 = vrot.lane.b32.xlu0 %v1761, 84
  %v2571 = vpop.permute.xlu0 %2570
  %v2573 = vsel %vm1872, %v2568, 0
  %v2576 = vsel %vm1902, %v2571, 0
  %2578 = vmatprep.subr.bf16.mxu0 0
  %2579 = vmatpush1.bf16.msra.mxu0 %v2576
  %2580 = vmatprep.subr.bf16.mxu0 0
  %2581 = vmatpush1.bf16.msra.mxu0 0
  %2582 = vmatprep.subr.bf16.mxu0 0
  %2583 = vmatpush1.bf16.msra.mxu0 0
  %2584 = vmatprep.subr.bf16.mxu0 0
  %2585 = vmatpush1.bf16.msra.mxu0 0
  %2586 = vmatprep.subr.bf16.mxu0 0
  %2587 = vmatpush1.bf16.msra.mxu0 0
  %2588 = vmatprep.subr.bf16.mxu0 0
  %2589 = vmatpush1.bf16.msra.mxu0 0
  %2590 = vmatprep.subr.bf16.mxu0 0
  %2591 = vmatpush1.bf16.msra.mxu0 0
  %2592 = vmatprep.subr.bf16.mxu0 0
  %2593 = vmatpush1.bf16.msra.mxu0 0
  %2594 = vmatprep.subr.bf16.mxu0 0
  %2595 = vmatpush1.bf16.msra.mxu0 0
  %2596 = vmatprep.subr.bf16.mxu0 0
  %2597 = vmatpush1.bf16.msra.mxu0 0
  %2598 = vmatprep.subr.bf16.mxu0 0
  %2599 = vmatpush1.bf16.msra.mxu0 0
  %2600 = vmatprep.subr.bf16.mxu0 0
  %2601 = vmatpush1.bf16.msra.mxu0 0
  %2602 = vmatprep.subr.bf16.mxu0 0
  %2603 = vmatpush1.bf16.msra.mxu0 0
  %2604 = vmatprep.subr.bf16.mxu0 0
  %2605 = vmatpush1.bf16.msra.mxu0 0
  %2606 = vmatprep.subr.bf16.mxu0 0
  %2607 = vmatpush1.bf16.msra.mxu0 0
  %2608 = vmatprep.subr.bf16.mxu0 0
  %2609 = vmatpush1.bf16.msra.mxu0 0
  %2610 = vmatprep.mubr.bf16.mxu0 0
  %2611 = vmatmul.mubr.bf16.gmra.mrb[0].mxu0 %v2573
  %v2612 = vpop.f32.mrb[0].mxu0
  %v2613 = vadd.f32 0.0, %v2612
  %v2614 = vpop.f32.mrb[0].mxu0
  %v2615 = vpop.f32.mrb[0].mxu0
  %v2616 = vpop.f32.mrb[0].mxu0
  %2617 = vdwg.mxu0
  %2618 = vrot.lane.b32.xlu0 %v1762, 84
  %v2619 = vpop.permute.xlu0 %2618
  %v2621 = vsel %vm1872, %v2569, 0
  %v2624 = vsel %vm1902, %v2619, 0
  %2626 = vmatprep.subr.bf16.mxu0 0
  %2627 = vmatpush1.bf16.msra.mxu0 %v2624
  %2628 = vmatprep.subr.bf16.mxu0 0
  %2629 = vmatpush1.bf16.msra.mxu0 0
  %2630 = vmatprep.subr.bf16.mxu0 0
  %2631 = vmatpush1.bf16.msra.mxu0 0
  %2632 = vmatprep.subr.bf16.mxu0 0
  %2633 = vmatpush1.bf16.msra.mxu0 0
  %2634 = vmatprep.subr.bf16.mxu0 0
  %2635 = vmatpush1.bf16.msra.mxu0 0
  %2636 = vmatprep.subr.bf16.mxu0 0
  %2637 = vmatpush1.bf16.msra.mxu0 0
  %2638 = vmatprep.subr.bf16.mxu0 0
  %2639 = vmatpush1.bf16.msra.mxu0 0
  %2640 = vmatprep.subr.bf16.mxu0 0
  %2641 = vmatpush1.bf16.msra.mxu0 0
  %2642 = vmatprep.subr.bf16.mxu0 0
  %2643 = vmatpush1.bf16.msra.mxu0 0
  %2644 = vmatprep.subr.bf16.mxu0 0
  %2645 = vmatpush1.bf16.msra.mxu0 0
  %2646 = vmatprep.subr.bf16.mxu0 0
  %2647 = vmatpush1.bf16.msra.mxu0 0
  %2648 = vmatprep.subr.bf16.mxu0 0
  %2649 = vmatpush1.bf16.msra.mxu0 0
  %2650 = vmatprep.subr.bf16.mxu0 0
  %2651 = vmatpush1.bf16.msra.mxu0 0
  %2652 = vmatprep.subr.bf16.mxu0 0
  %2653 = vmatpush1.bf16.msra.mxu0 0
  %2654 = vmatprep.subr.bf16.mxu0 0
  %2655 = vmatpush1.bf16.msra.mxu0 0
  %2656 = vmatprep.subr.bf16.mxu0 0
  %2657 = vmatpush1.bf16.msra.mxu0 0
  %2658 = vmatprep.mubr.bf16.mxu0 0
  %2659 = vmatmul.mubr.bf16.gmra.mrb[0].mxu0 %v2621
  %v2660 = vpop.f32.mrb[0].mxu0
  %v2661 = vadd.f32 0.0, %v2660
  %v2662 = vpop.f32.mrb[0].mxu0
  %v2663 = vpop.f32.mrb[0].mxu0
  %v2664 = vpop.f32.mrb[0].mxu0
  %2665 = vdwg.mxu0
  %2668 = vrot.lane.b32.xlu0 %v2165, 4
  %v2669 = vpop.permute.xlu0 %2668
  %2670 = vrot.lane.b32.xlu0 %v2213, 4
  %v2671 = vpop.permute.xlu0 %2670
  %2676 = vrot.lane.b32.xlu0 %v2389, 8
  %v2677 = vpop.permute.xlu0 %2676
  %2678 = vrot.lane.b32.xlu0 %v2437, 8
  %v2679 = vpop.permute.xlu0 %2678
  %2684 = vrot.lane.b32.xlu0 %v2613, 12
  %v2685 = vpop.permute.xlu0 %2684
  %2686 = vrot.lane.b32.xlu0 %v2661, 12
  %v2687 = vpop.permute.xlu0 %2686
  %v2690 = vsel %vm1772, %v1941, %v2669
  %v2691 = vsel %vm1772, %v1989, %v2671
  %v2692 = vsel %vm1872, %v2690, %v2677
  %v2693 = vsel %vm1872, %v2691, %v2679
  %vm2694 = vcmask 97280
  %v2695 = vsel %vm2694, %v2692, %v2685
  %v2696 = vsel %vm2694, %v2693, %v2687
  %v2697 = vld [vmem:[%s1 + $0x30] sm:$0xf]
  %v2698 = vld [vmem:[%s1 + $0x34] sm:$0xf]
  %v2699 = vld [vmem:[%s2 + $0x5] sm:$0x1]
  %v2700 = vpack.c.bf16 %v2696, %v2695
  %v2701 = vlaneseq
  %v2702 = vshrl.u32 %v2701, 7
  %v2703 = vsub.s32 0, %v2702
  %v2704 = vrot.slane %v2699, %v2703
  %v2707 = vunpack.c.l.b16 %v2697
  %v2708 = vunpack.c.l.b16 %v2698
  %v2709 = vpack.c.b16 %v2708, %v2707
  %v2712 = vsel %vm103, %v2700, 0
  %2714 = vmatprep.subr.bf16.mxu0 0
  %2715 = vmatpush1.bf16.msra.mxu0 %v2709
  %2716 = vmatprep.subr.bf16.mxu0 0
  %2717 = vmatpush1.bf16.msra.mxu0 0
  %2718 = vmatprep.subr.bf16.mxu0 0
  %2719 = vmatpush1.bf16.msra.mxu0 0
  %2720 = vmatprep.subr.bf16.mxu0 0
  %2721 = vmatpush1.bf16.msra.mxu0 0
  %2722 = vmatprep.subr.bf16.mxu0 0
  %2723 = vmatpush1.bf16.msra.mxu0 0
  %2724 = vmatprep.subr.bf16.mxu0 0
  %2725 = vmatpush1.bf16.msra.mxu0 0
  %2726 = vmatprep.subr.bf16.mxu0 0
  %2727 = vmatpush1.bf16.msra.mxu0 0
  %2728 = vmatprep.subr.bf16.mxu0 0
  %2729 = vmatpush1.bf16.msra.mxu0 0
  %2730 = vmatprep.subr.bf16.mxu0 0
  %2731 = vmatpush1.bf16.msra.mxu0 0
  %2732 = vmatprep.subr.bf16.mxu0 0
  %2733 = vmatpush1.bf16.msra.mxu0 0
  %2734 = vmatprep.subr.bf16.mxu0 0
  %2735 = vmatpush1.bf16.msra.mxu0 0
  %2736 = vmatprep.subr.bf16.mxu0 0
  %2737 = vmatpush1.bf16.msra.mxu0 0
  %2738 = vmatprep.subr.bf16.mxu0 0
  %2739 = vmatpush1.bf16.msra.mxu0 0
  %2740 = vmatprep.subr.bf16.mxu0 0
  %2741 = vmatpush1.bf16.msra.mxu0 0
  %2742 = vmatprep.subr.bf16.mxu0 0
  %2743 = vmatpush1.bf16.msra.mxu0 0
  %2744 = vmatprep.subr.bf16.mxu0 0
  %2745 = vmatpush1.bf16.msra.mxu0 0
  %2746 = vmatprep.mubr.bf16.mxu0 0
  %2747 = vmatmul.mubr.bf16.gmra.mrb[0].mxu0 %v2712
  %v2748 = vpop.f32.mrb[0].mxu0
  %v2749 = vadd.f32 %v2704, %v2748
  %v2750 = vpop.f32.mrb[0].mxu0
  %v2751 = vpop.f32.mrb[0].mxu0
  %v2752 = vadd.f32 %v2704, %v2751
  %v2753 = vpop.f32.mrb[0].mxu0
  %2754 = vdwg.mxu0
  %v2755 = vadd.f32 %v1701, %v2749
  %v2756 = vadd.f32 %v1702, %v2752
  %v2757 = vld [vmem:[%s2 + $0x6] sm:$0x1]
  %v2758 = vld [vmem:[%s2 + $0x7] sm:$0x1]
  %v2759 = vsel %vm103, %v2755, 0.0
  %2760 = vadd.xlane.f32.xlu0 %v2759
  %v2761 = vpop.xlane.xlu0 %2760
  %v2762 = vsel %vm103, %v2756, 0.0
  %2763 = vadd.xlane.f32.xlu0 %v2762
  %v2764 = vpop.xlane.xlu0 %2763
  %v2765 = vrcp.pop 16.0
  %v2766 = vmul.f32 %v2761, %v2765
  %v2767 = vmul.f32 %v2764, %v2765
  %v2768 = vsub.f32 %v2755, %v2766
  %v2769 = vsub.f32 %v2756, %v2767
  %v2770 = vmul.f32 %v2768, %v2768
  %v2771 = vmul.f32 %v2769, %v2769
  %v2772 = vsel %vm103, %v2770, 0.0
  %2773 = vadd.xlane.f32.xlu0 %v2772
  %v2774 = vpop.xlane.xlu0 %2773
  %v2775 = vsel %vm103, %v2771, 0.0
  %2776 = vadd.xlane.f32.xlu0 %v2775
  %v2777 = vpop.xlane.xlu0 %2776
  %v2778 = vmul.f32 %v2774, %v2765
  %v2779 = vmul.f32 %v2777, %v2765
  %v2780 = vadd.f32 %v2778, 1e-05
  %v2781 = vadd.f32 %v2779, 1e-05
  %v2782 = vrsqrt.pop %v2780
  %v2783 = vrsqrt.pop %v2781
  %v2784 = vmul.f32 %v2768, %v2782
  %v2785 = vmul.f32 %v2769, %v2783
  %v2786 = vlaneseq
  %v2787 = vshrl.u32 %v2786, 7
  %v2788 = vsub.s32 0, %v2787
  %v2789 = vrot.slane %v2757, %v2788
  %v2790 = vmul.f32 %v2784, %v2789
  %v2791 = vmul.f32 %v2785, %v2789
  %v2792 = vlaneseq
  %v2793 = vshrl.u32 %v2792, 7
  %v2794 = vsub.s32 0, %v2793
  %v2795 = vrot.slane %v2758, %v2794
  %v2796 = vadd.f32 %v2790, %v2795
  %v2797 = vadd.f32 %v2791, %v2795
  %v2798 = vld [vmem:[%s1 + $0x38] sm:$0xf]
  %v2799 = vld [vmem:[%s1 + $0x3c] sm:$0xf]
  %v2800 = vld [vmem:[%s2 + $0x8] sm:$0x1]
  %v2801 = vpack.c.bf16 %v2797, %v2796
  %v2802 = vlaneseq
  %v2803 = vshrl.u32 %v2802, 7
  %v2804 = vsub.s32 0, %v2803
  %v2805 = vrot.slane %v2800, %v2804
  %v2808 = vunpack.c.l.b16 %v2798
  %v2809 = vunpack.c.l.b16 %v2799
  %v2810 = vpack.c.b16 %v2809, %v2808
  %v2813 = vsel %vm103, %v2801, 0
  %2815 = vmatprep.subr.bf16.mxu0 0
  %2816 = vmatpush1.bf16.msra.mxu0 %v2810
  %2817 = vmatprep.subr.bf16.mxu0 0
  %2818 = vmatpush1.bf16.msra.mxu0 0
  %2819 = vmatprep.subr.bf16.mxu0 0
  %2820 = vmatpush1.bf16.msra.mxu0 0
  %2821 = vmatprep.subr.bf16.mxu0 0
  %2822 = vmatpush1.bf16.msra.mxu0 0
  %2823 = vmatprep.subr.bf16.mxu0 0
  %2824 = vmatpush1.bf16.msra.mxu0 0
  %2825 = vmatprep.subr.bf16.mxu0 0
  %2826 = vmatpush1.bf16.msra.mxu0 0
  %2827 = vmatprep.subr.bf16.mxu0 0
  %2828 = vmatpush1.bf16.msra.mxu0 0
  %2829 = vmatprep.subr.bf16.mxu0 0
  %2830 = vmatpush1.bf16.msra.mxu0 0
  %2831 = vmatprep.subr.bf16.mxu0 0
  %2832 = vmatpush1.bf16.msra.mxu0 0
  %2833 = vmatprep.subr.bf16.mxu0 0
  %2834 = vmatpush1.bf16.msra.mxu0 0
  %2835 = vmatprep.subr.bf16.mxu0 0
  %2836 = vmatpush1.bf16.msra.mxu0 0
  %2837 = vmatprep.subr.bf16.mxu0 0
  %2838 = vmatpush1.bf16.msra.mxu0 0
  %2839 = vmatprep.subr.bf16.mxu0 0
  %2840 = vmatpush1.bf16.msra.mxu0 0
  %2841 = vmatprep.subr.bf16.mxu0 0
  %2842 = vmatpush1.bf16.msra.mxu0 0
  %2843 = vmatprep.subr.bf16.mxu0 0
  %2844 = vmatpush1.bf16.msra.mxu0 0
  %2845 = vmatprep.subr.bf16.mxu0 0
  %2846 = vmatpush1.bf16.msra.mxu0 0
  %2847 = vmatprep.mubr.bf16.mxu0 0
  %2848 = vmatmul.mubr.bf16.gmra.mrb[0].mxu0 %v2813
  %v2849 = vpop.f32.mrb[0].mxu0
  %v2850 = vadd.f32 %v2805, %v2849
  %v2851 = vpop.f32.mrb[0].mxu0
  %v2852 = vpop.f32.mrb[0].mxu0
  %v2853 = vadd.f32 %v2805, %v2852
  %v2854 = vpop.f32.mrb[0].mxu0
  %2855 = vdwg.mxu0
  %v2856 = vmul.f32 %v2850, 0.5
  %v2857 = vmul.f32 %v2853, 0.5
  %v2858 = vmul.f32 %v2850, 0.044715
  %v2859 = vmul.f32 %v2853, 0.044715
  %v2860 = vmul.f32 %v2858, %v2850
  %v2861 = vmul.f32 %v2859, %v2853
  %v2862 = vmul.f32 %v2860, %v2850
  %v2863 = vmul.f32 %v2861, %v2853
  %v2864 = vadd.f32 %v2850, %v2862
  %v2865 = vadd.f32 %v2853, %v2863
  %v2866 = vmul.f32 %v2864, 0.7978846
  %v2867 = vmul.f32 %v2865, 0.7978846
  %v2868 = vtanh.pop %v2866
  %v2869 = vtanh.pop %v2867
  %v2870 = vadd.f32 %v2868, 1.0
  %v2871 = vadd.f32 %v2869, 1.0
  %v2872 = vmul.f32 %v2856, %v2870
  %v2873 = vmul.f32 %v2857, %v2871
  %v2874 = vld [vmem:[%s1 + $0x40] sm:$0xf]
  %v2875 = vld [vmem:[%s1 + $0x44] sm:$0xf]
  %v2876 = vld [vmem:[%s1 + $0x48] sm:$0xf]
  %v2877 = vld [vmem:[%s1 + $0x4c] sm:$0xf]
  %v2878 = vld [vmem:[%s2 + $0x9] sm:$0x1]
  %v2879 = vpack.c.bf16 %v2873, %v2872
  %v2880 = vlaneseq
  %v2881 = vshrl.u32 %v2880, 7
  %v2882 = vsub.s32 0, %v2881
  %v2883 = vrot.slane %v2878, %v2882
  %v2888 = vunpack.c.l.b16 %v2874
  %v2889 = vunpack.c.l.b16 %v2875
  %v2890 = vunpack.c.l.b16 %v2876
  %v2891 = vunpack.c.l.b16 %v2877
  %v2892 = vpack.c.b16 %v2889, %v2888
  %v2893 = vpack.c.b16 %v2891, %v2890
  %v2897 = vsel %vm48, %v2879, 0
  %2899 = vmatprep.subr.bf16.mxu0 0
  %2900 = vmatpush1.bf16.msra.mxu0 %v2892
  %2901 = vmatprep.subr.bf16.mxu0 0
  %2902 = vmatpush1.bf16.msra.mxu0 %v2893
  %2903 = vmatprep.subr.bf16.mxu0 0
  %2904 = vmatpush1.bf16.msra.mxu0 0
  %2905 = vmatprep.subr.bf16.mxu0 0
  %2906 = vmatpush1.bf16.msra.mxu0 0
  %2907 = vmatprep.subr.bf16.mxu0 0
  %2908 = vmatpush1.bf16.msra.mxu0 0
  %2909 = vmatprep.subr.bf16.mxu0 0
  %2910 = vmatpush1.bf16.msra.mxu0 0
  %2911 = vmatprep.subr.bf16.mxu0 0
  %2912 = vmatpush1.bf16.msra.mxu0 0
  %2913 = vmatprep.subr.bf16.mxu0 0
  %2914 = vmatpush1.bf16.msra.mxu0 0
  %2915 = vmatprep.subr.bf16.mxu0 0
  %2916 = vmatpush1.bf16.msra.mxu0 0
  %2917 = vmatprep.subr.bf16.mxu0 0
  %2918 = vmatpush1.bf16.msra.mxu0 0
  %2919 = vmatprep.subr.bf16.mxu0 0
  %2920 = vmatpush1.bf16.msra.mxu0 0
  %2921 = vmatprep.subr.bf16.mxu0 0
  %2922 = vmatpush1.bf16.msra.mxu0 0
  %2923 = vmatprep.subr.bf16.mxu0 0
  %2924 = vmatpush1.bf16.msra.mxu0 0
  %2925 = vmatprep.subr.bf16.mxu0 0
  %2926 = vmatpush1.bf16.msra.mxu0 0
  %2927 = vmatprep.subr.bf16.mxu0 0
  %2928 = vmatpush1.bf16.msra.mxu0 0
  %2929 = vmatprep.subr.bf16.mxu0 0
  %2930 = vmatpush1.bf16.msra.mxu0 0
  %2931 = vmatprep.mubr.bf16.mxu0 0
  %2932 = vmatmul.mubr.bf16.gmra.mrb[0].mxu0 %v2897
  %v2933 = vpop.f32.mrb[0].mxu0
  %v2934 = vadd.f32 %v2883, %v2933
  %v2935 = vpop.f32.mrb[0].mxu0
  %v2936 = vpop.f32.mrb[0].mxu0
  %v2937 = vadd.f32 %v2883, %v2936
  %v2938 = vpop.f32.mrb[0].mxu0
  %2939 = vdwg.mxu0
  %v2940 = vadd.f32 %v2796, %v2934
  %v2941 = vadd.f32 %v2797, %v2937
  %v2942 = vld [vmem:[%s2 + $0xa] sm:$0x1]
  %v2943 = vld [vmem:[%s2 + $0xb] sm:$0x1]
  %v2944 = vsel %vm103, %v2940, 0.0
  %2945 = vadd.xlane.f32.xlu0 %v2944
  %v2946 = vpop.xlane.xlu0 %2945
  %v2947 = vsel %vm103, %v2941, 0.0
  %2948 = vadd.xlane.f32.xlu0 %v2947
  %v2949 = vpop.xlane.xlu0 %2948
  %v2950 = vmul.f32 %v2946, %v2765
  %v2951 = vmul.f32 %v2949, %v2765
  %v2952 = vsub.f32 %v2940, %v2950
  %v2953 = vsub.f32 %v2941, %v2951
  %v2954 = vmul.f32 %v2952, %v2952
  %v2955 = vmul.f32 %v2953, %v2953
  %v2956 = vsel %vm103, %v2954, 0.0
  %2957 = vadd.xlane.f32.xlu0 %v2956
  %v2958 = vpop.xlane.xlu0 %2957
  %v2959 = vsel %vm103, %v2955, 0.0
  %2960 = vadd.xlane.f32.xlu0 %v2959
  %v2961 = vpop.xlane.xlu0 %2960
  %v2962 = vmul.f32 %v2958, %v2765
  %v2963 = vmul.f32 %v2961, %v2765
  %v2964 = vadd.f32 %v2962, 1e-05
  %v2965 = vadd.f32 %v2963, 1e-05
  %v2966 = vrsqrt.pop %v2964
  %v2967 = vrsqrt.pop %v2965
  %v2968 = vmul.f32 %v2952, %v2966
  %v2969 = vmul.f32 %v2953, %v2967
  %v2970 = vlaneseq
  %v2971 = vshrl.u32 %v2970, 7
  %v2972 = vsub.s32 0, %v2971
  %v2973 = vrot.slane %v2942, %v2972
  %v2974 = vmul.f32 %v2968, %v2973
  %v2975 = vmul.f32 %v2969, %v2973
  %v2976 = vlaneseq
  %v2977 = vshrl.u32 %v2976, 7
  %v2978 = vsub.s32 0, %v2977
  %v2979 = vrot.slane %v2943, %v2978
  %v2980 = vadd.f32 %v2974, %v2979
  %v2981 = vadd.f32 %v2975, %v2979
  %2982 = vst.msk [vmem:[%s3] sm:$0xff] %vm103, %v2980
  %2983 = vst.msk [vmem:[%s3 + $0x8] sm:$0xff] %vm103, %v2981
  // Predicated region
  $region14: #{transformer_forward.1} parent=0 // pred_check
    _
  $region15: #{transformer_forward.1} parent=0 // pred_check_branch
    %2985 = sbr.rel (0) target = $region17
  $region16: #{transformer_forward.1} parent=0 // pred_region
    _
  $region17: #{transformer_forward.1} parent=0 // pred_fallthru
    _
  // Predicated region
  $region18: #{transformer_forward.1} parent=0 // pred_check
    _
  $region19: #{transformer_forward.1} parent=0 // pred_check_branch
    %2987 = sbr.rel (0) target = $region21
  $region20: #{transformer_forward.1} parent=0 // pred_region
    _
  $region21: #{transformer_forward.1} parent=0 // pred_fallthru
    _

</llo_original>
